<compile_context>
chip_gen: v7x
topology: tpu7x:2x2x1
jax: 0.10.0
libtpu: 0.0.40
codegen_flags: <defaults>
</compile_context>

<pallas_src>
import jax
import jax.numpy as jnp
import numpy as np
from jax import lax
from jax.experimental import pallas as pl
from jax.experimental.pallas import tpu as pltpu


LANE = 128             # TPU vreg lane width; each gate block is padded to this
UNROLL_FULL_MAX = 32   # fully unroll the time loop when T <= this


def text_encoder_kernel(emb_ref, len_ref,
                        wi3_f_ref, wh3_f_ref, bi3_f_ref, bhn_f_ref,
                        wi3_b_ref, wh3_b_ref, bi3_b_ref, bhn_b_ref,
                        wproj_ref, bproj_ref,
                        out_ref,
                        *xp_scratch):
    T, BB, E = emb_ref.shape                       # time-major, batch-blocked
    HP = wh3_f_ref.shape[0]                        # padded hidden width (128-aligned)
    lengths = len_ref[...]                         # (BB, 1) int32

    # ---- Hoist weights / pre-broadcast biases out of the recurrence ----
    wi3_f = wi3_f_ref[...]                         # (E, 3*HP)  bf16
    wi3_b = wi3_b_ref[...]
    wh3_f = wh3_f_ref[...]                         # (HP, 3*HP) bf16
    wh3_b = wh3_b_ref[...]
    bhn_f = jnp.broadcast_to(bhn_f_ref[...], (BB, HP))     # f32
    bhn_b = jnp.broadcast_to(bhn_b_ref[...], (BB, HP))

    def gates(xp, h, wh3, bhn):
        # Single fused hidden matmul; gate slices are 128-lane aligned.
        # PyTorch nn.GRU gate order (r, z, n).  h carried in f32; only the
        # MXU operand is cast to bf16.
        hh = jnp.dot(h.astype(jnp.bfloat16), wh3,
                     preferred_element_type=jnp.float32)    # (BB, 3*HP) f32
        r = jax.nn.sigmoid(xp[:, 0:HP] + hh[:, 0:HP])
        z = jax.nn.sigmoid(xp[:, HP:2 * HP] + hh[:, HP:2 * HP])
        n = jnp.tanh(xp[:, 2 * HP:3 * HP] + r * (hh[:, 2 * HP:3 * HP] + bhn))
        return n + z * (h - n)                     # == (1 - z) * n + z * h

    h0 = jnp.zeros((BB, HP), jnp.float32)

    if T <= UNROLL_FULL_MAX:
        # Fully-unrolled path: per-step x-projections are inlined so the LLO
        # scheduler overlaps them (MXU otherwise idle) with the serial h->h
        # chain; fwd/bwd chains interleaved in the same body.
        bi3_f = jnp.broadcast_to(bi3_f_ref[...], (BB, 3 * HP))
        bi3_b = jnp.broadcast_to(bi3_b_ref[...], (BB, 3 * HP))
        h_f, h_b = h0, h0
        for i in range(T):
            tf = i                                  # forward time index
            tb = T - 1 - i                          # backward time index
            xp_f = jnp.dot(emb_ref[tf], wi3_f,
                           preferred_element_type=jnp.float32) + bi3_f
            xp_b = jnp.dot(emb_ref[tb], wi3_b,
                           preferred_element_type=jnp.float32) + bi3_b
            hf_new = gates(xp_f, h_f, wh3_f, bhn_f)
            hb_new = gates(xp_b, h_b, wh3_b, bhn_b)
            h_f = jnp.where(tf < lengths, hf_new, h_f)   # masked (packed) update
            h_b = jnp.where(tb < lengths, hb_new, h_b)
    else:
        # Fallback for long T: hoist the full x-projection (one big matmul per
        # direction) into bf16 VMEM scratch, then a fori_loop recurrence with
        # aligned dynamic slices.
        xp_f_ref, xp_b_ref = xp_scratch
        x_all = emb_ref[...].reshape(T * BB, E)              # bf16
        xp_f_ref[...] = (jnp.dot(x_all, wi3_f, preferred_element_type=jnp.float32)
                         + bi3_f_ref[...]).astype(xp_f_ref.dtype)
        xp_b_ref[...] = (jnp.dot(x_all, wi3_b, preferred_element_type=jnp.float32)
                         + bi3_b_ref[...]).astype(xp_b_ref.dtype)

        def step(i, carry):
            h_f, h_b = carry
            tf = i
            tb = T - 1 - i
            xp_f = xp_f_ref[pl.ds(pl.multiple_of(tf * BB, BB), BB), :].astype(jnp.float32)
            xp_b = xp_b_ref[pl.ds(pl.multiple_of(tb * BB, BB), BB), :].astype(jnp.float32)
            hf_new = gates(xp_f, h_f, wh3_f, bhn_f)
            hb_new = gates(xp_b, h_b, wh3_b, bhn_b)
            h_f = jnp.where(tf < lengths, hf_new, h_f)
            h_b = jnp.where(tb < lengths, hb_new, h_b)
            return h_f, h_b

        h_f, h_b = lax.fori_loop(0, T, step, (h0, h0), unroll=8)

    # proj: Linear(2H, P) on concat([h_fwd, h_bwd], 1) + LeakyReLU(0.2),
    # implemented as split matmuls to avoid a lane-dim concat.
    y = (jnp.dot(h_f.astype(jnp.bfloat16), wproj_ref[0],
                 preferred_element_type=jnp.float32)
         + jnp.dot(h_b.astype(jnp.bfloat16), wproj_ref[1],
                   preferred_element_type=jnp.float32)
         + bproj_ref[...])
    out_ref[...] = jnp.where(y >= 0.0, y, 0.2 * y)


def pack_params(params, lane=LANE):
    """Fuse/pad GRU weights for the kernel: gate order (r, z, n); each gate
    block padded to a lane-aligned width HP; input/hidden biases folded where
    possible.  Matmul operands (emb, wi3, wh3, wproj) are stored bf16; biases
    stay f32.  Padded rows/cols are exactly zero (exact in bf16), so padded
    hidden lanes stay 0 across the recurrence."""
    E = params["wih_f"].shape[1]
    H = params["whh_f"].shape[1]
    P = params["b_proj"].shape[-1]
    HP = ((H + lane - 1) // lane) * lane

    def pack_dir(wih, whh, bih, bhh):
        wi3 = jnp.zeros((E, 3 * HP), jnp.float32)
        wh3 = jnp.zeros((HP, 3 * HP), jnp.float32)
        bi3 = jnp.zeros((1, 3 * HP), jnp.float32)
        for g in range(3):
            wi3 = wi3.at[:, g * HP:g * HP + H].set(wih[g])
            wh3 = wh3.at[:H, g * HP:g * HP + H].set(whh[g])
        # fold b_ih + b_hh for r and z; n keeps its hidden bias separate
        bi3 = bi3.at[:, 0 * HP:0 * HP + H].set(bih[0] + bhh[0])
        bi3 = bi3.at[:, 1 * HP:1 * HP + H].set(bih[1] + bhh[1])
        bi3 = bi3.at[:, 2 * HP:2 * HP + H].set(bih[2])
        bhn = jnp.zeros((1, HP), jnp.float32).at[:, :H].set(bhh[2])
        return (wi3.astype(jnp.bfloat16), wh3.astype(jnp.bfloat16), bi3, bhn)

    wi3_f, wh3_f, bi3_f, bhn_f = pack_dir(params["wih_f"], params["whh_f"],
                                          params["bih_f"], params["bhh_f"])
    wi3_b, wh3_b, bi3_b, bhn_b = pack_dir(params["wih_b"], params["whh_b"],
                                          params["bih_b"], params["bhh_b"])
    wproj = (jnp.zeros((2, HP, P), jnp.float32)
             .at[:, :H, :].set(params["w_proj"])
             .astype(jnp.bfloat16))
    return {
        "emb": params["emb"].astype(jnp.bfloat16),
        "wi3_f": wi3_f, "wh3_f": wh3_f, "bi3_f": bi3_f, "bhn_f": bhn_f,
        "wi3_b": wi3_b, "wh3_b": wh3_b, "bi3_b": bi3_b, "bhn_b": bhn_b,
        "w_proj": wproj, "b_proj": params["b_proj"],
    }


def text_encoder_forward(text_ids, lengths, packed):
    """text_ids: (B, T) int32, lengths: (B,) int32. Returns (B, P) float32."""
    B, T = text_ids.shape
    E = packed["emb"].shape[1]
    HP = packed["wh3_f"].shape[0]
    P = packed["b_proj"].shape[-1]

    # Gather directly in time-major order from the bf16 table: one fused
    # gather, no extra (B,T,E) transpose/reshape HBM round-trip.
    emb = packed["emb"][text_ids.T]                         # (T, B, E) bf16
    len2d = lengths.astype(jnp.int32).reshape(B, 1)

    # Batch split across a parallel grid axis (fills v7x's second TensorCore;
    # only split when each block keeps a sublane-aligned (multiple of 8) batch).
    nb = 2 if (B % 16 == 0) else 1
    BB = B // nb

    kernel_args = (emb, len2d,
                   packed["wi3_f"], packed["wh3_f"], packed["bi3_f"], packed["bhn_f"],
                   packed["wi3_b"], packed["wh3_b"], packed["bi3_b"], packed["bhn_b"],
                   packed["w_proj"], packed["b_proj"])

    vmem_spec = pl.BlockSpec(memory_space=pltpu.MemorySpace.VMEM)
    in_specs = [
        pl.BlockSpec((T, BB, E), lambda i: (0, i, 0)),      # emb: batch-blocked
        pl.BlockSpec((BB, 1), lambda i: (i, 0)),            # lengths
    ] + [vmem_spec] * 10                                    # weights / biases resident

    scratch_shapes = []
    scratch_bytes = 0
    if T > UNROLL_FULL_MAX:
        # bf16 xp scratch only needed on the fori_loop fallback path.
        scratch_shapes = [pltpu.VMEM((T * BB, 3 * HP), jnp.bfloat16),
                          pltpu.VMEM((T * BB, 3 * HP), jnp.bfloat16)]
        scratch_bytes = 2 * T * BB * 3 * HP * 2

    # Explicit scoped-VMEM budget: operands (x2 for double-buffered blocked
    # inputs) + output + scratch, floored at the default-safe 32 MiB and
    # capped at 64 MiB so it never exceeds v7x's physical per-core VMEM.
    arg_bytes = sum(int(np.prod(a.shape)) * a.dtype.itemsize for a in kernel_args)
    need = 2 * (arg_bytes + B * P * 4) + scratch_bytes
    vmem_limit = int(min(64 * 2**20, max(32 * 2**20, 2 * need)))

    return pl.pallas_call(
        text_encoder_kernel,
        out_shape=jax.ShapeDtypeStruct((B, P), jnp.float32),
        grid=(nb,),
        in_specs=in_specs,
        out_specs=pl.BlockSpec((BB, P), lambda i: (i, 0)),
        scratch_shapes=scratch_shapes,
        compiler_params=pltpu.CompilerParams(
            dimension_semantics=("parallel",),
            vmem_limit_bytes=vmem_limit),
    )(*kernel_args)


def reference_forward(text_ids, lengths, params):
    """Pure-JAX f32 reference with identical semantics (for validation)."""
    emb = params["emb"][text_ids].astype(jnp.float32)        # (B, T, E)
    B, T, _ = emb.shape
    H = params["whh_f"].shape[1]

    def run_dir(wih, whh, bih, bhh, reverse):
        h = jnp.zeros((B, H), jnp.float32)
        ts = range(T - 1, -1, -1) if reverse else range(T)
        for t in ts:
            x_t = emb[:, t, :]
            r = jax.nn.sigmoid(x_t @ wih[0] + bih[0] + h @ whh[0] + bhh[0])
            z = jax.nn.sigmoid(x_t @ wih[1] + bih[1] + h @ whh[1] + bhh[1])
            n = jnp.tanh(x_t @ wih[2] + bih[2] + r * (h @ whh[2] + bhh[2]))
            h_new = (1.0 - z) * n + z * h
            h = jnp.where((t < lengths)[:, None], h_new, h)
        return h

    h_f = run_dir(params["wih_f"], params["whh_f"], params["bih_f"], params["bhh_f"], False)
    h_b = run_dir(params["wih_b"], params["whh_b"], params["bih_b"], params["bhh_b"], True)
    y = h_f @ params["w_proj"][0] + h_b @ params["w_proj"][1] + params["b_proj"]
    return jnp.where(y >= 0.0, y, 0.2 * y)


def init_params(key, n_tokens, emb_dim, hidden, proj_dim):
    ks = jax.random.split(key, 12)
    s = 1.0 / np.sqrt(hidden)
    u = lambda k, shape: jax.random.uniform(k, shape, jnp.float32, -s, s)
    emb = jax.random.normal(ks[0], (n_tokens, emb_dim), jnp.float32) * 0.1
    emb = emb.at[0].set(0.0)                                # padding_idx = 0
    return {
        "emb": emb,
        # gate order (r, z, n), stored as (3, in_dim, H) i.e. transposed per gate
        "wih_f": u(ks[1], (3, emb_dim, hidden)),
        "whh_f": u(ks[2], (3, hidden, hidden)),
        "bih_f": u(ks[3], (3, 1, hidden)),
        "bhh_f": u(ks[4], (3, 1, hidden)),
        "wih_b": u(ks[5], (3, emb_dim, hidden)),
        "whh_b": u(ks[6], (3, hidden, hidden)),
        "bih_b": u(ks[7], (3, 1, hidden)),
        "bhh_b": u(ks[8], (3, 1, hidden)),
        # nn.Linear(2H, P): stored as (2, H, P) -> [forward half, backward half]
        "w_proj": u(ks[9], (2, hidden, proj_dim)),
        "b_proj": u(ks[10], (1, proj_dim)),
    }


if __name__ == "__main__":
    B, T = 16, 8           # batch, seq length (B=16 -> 2-program parallel grid)
    N_TOKENS, E = 50, 32   # vocab, embedding dim
    H, P = 32, 32          # gru hidden units (hyppar[0]), proj dim (hyppar[1])

    key = jax.random.PRNGKey(0)
    k_par, k_ids = jax.random.split(key)
    params = init_params(k_par, N_TOKENS, E, H, P)
    packed = pack_params(params)                 # one-time weight fuse/pad/bf16

    lengths = jnp.array([8, 5, 3, 1, 6, 8, 2, 4, 7, 8, 1, 5, 3, 6, 4, 8],
                        dtype=jnp.int32)
    ids = jax.random.randint(k_ids, (B, T), 1, N_TOKENS, dtype=jnp.int32)
    pad_mask = jnp.arange(T)[None, :] < lengths[:, None]
    text_ids = jnp.where(pad_mask, ids, 0)                  # 0 = padding token

    out = text_encoder_forward(text_ids, lengths, packed)
    jax.block_until_ready(out)

    ref = reference_forward(text_ids, lengths, params)
    # bf16 MXU operands -> slightly relaxed tolerance vs the f32 reference.
    np.testing.assert_allclose(np.asarray(out), np.asarray(ref), rtol=2e-2, atol=2e-2)

    print("KERNEL_OK")
</pallas_src>

<mosaic_0001>
module attributes {stable_mosaic.version = 11 : i64} {
  func.func @text_encoder_kernel(%arg0: i32, %arg1: memref<8x8x32xbf16, #tpu.memory_space<vmem>>, %arg2: memref<8x1xi32, #tpu.memory_space<vmem>>, %arg3: memref<32x384xbf16, #tpu.memory_space<vmem>>, %arg4: memref<128x384xbf16, #tpu.memory_space<vmem>>, %arg5: memref<1x384xf32, #tpu.memory_space<vmem>>, %arg6: memref<1x128xf32, #tpu.memory_space<vmem>>, %arg7: memref<32x384xbf16, #tpu.memory_space<vmem>>, %arg8: memref<128x384xbf16, #tpu.memory_space<vmem>>, %arg9: memref<1x384xf32, #tpu.memory_space<vmem>>, %arg10: memref<1x128xf32, #tpu.memory_space<vmem>>, %arg11: memref<2x128x32xbf16, #tpu.memory_space<vmem>>, %arg12: memref<1x32xf32, #tpu.memory_space<vmem>>, %arg13: memref<8x32xf32, #tpu.memory_space<vmem>>) attributes {dimension_semantics = [#tpu.dimension_semantics<parallel>], iteration_bounds = array<i64: 2>, scalar_prefetch = 0 : i64, scratch_operands = 0 : i64, tpu.core_type = #tpu.core_type<tc>, window_params = [{transform_indices = @transform_0, window_bounds = array<i64: 8, 8, 32>}, {transform_indices = @transform_1, window_bounds = array<i64: 8, 1>}, {pipeline_mode = #tpu.pipeline_mode<synchronous>, transform_indices = @transform_2, window_bounds = array<i64: 32, 384>}, {pipeline_mode = #tpu.pipeline_mode<synchronous>, transform_indices = @transform_3, window_bounds = array<i64: 128, 384>}, {pipeline_mode = #tpu.pipeline_mode<synchronous>, transform_indices = @transform_4, window_bounds = array<i64: 1, 384>}, {pipeline_mode = #tpu.pipeline_mode<synchronous>, transform_indices = @transform_5, window_bounds = array<i64: 1, 128>}, {pipeline_mode = #tpu.pipeline_mode<synchronous>, transform_indices = @transform_6, window_bounds = array<i64: 32, 384>}, {pipeline_mode = #tpu.pipeline_mode<synchronous>, transform_indices = @transform_7, window_bounds = array<i64: 128, 384>}, {pipeline_mode = #tpu.pipeline_mode<synchronous>, transform_indices = @transform_8, window_bounds = array<i64: 1, 384>}, {pipeline_mode = #tpu.pipeline_mode<synchronous>, transform_indices = @transform_9, window_bounds = array<i64: 1, 128>}, {pipeline_mode = #tpu.pipeline_mode<synchronous>, transform_indices = @transform_10, window_bounds = array<i64: 2, 128, 32>}, {pipeline_mode = #tpu.pipeline_mode<synchronous>, transform_indices = @transform_11, window_bounds = array<i64: 1, 32>}, {transform_indices = @transform_12, window_bounds = array<i64: 8, 32>}]} {
    %c0 = arith.constant 0 : index
    %c0_0 = arith.constant 0 : index
    %0 = vector.load %arg2[%c0, %c0_0] : memref<8x1xi32, #tpu.memory_space<vmem>>, vector<8x1xi32>
    %c0_1 = arith.constant 0 : index
    %c0_2 = arith.constant 0 : index
    %1 = vector.load %arg3[%c0_1, %c0_2] : memref<32x384xbf16, #tpu.memory_space<vmem>>, vector<32x384xbf16>
    %c0_3 = arith.constant 0 : index
    %c0_4 = arith.constant 0 : index
    %2 = vector.load %arg7[%c0_3, %c0_4] : memref<32x384xbf16, #tpu.memory_space<vmem>>, vector<32x384xbf16>
    %c0_5 = arith.constant 0 : index
    %c0_6 = arith.constant 0 : index
    %3 = vector.load %arg4[%c0_5, %c0_6] : memref<128x384xbf16, #tpu.memory_space<vmem>>, vector<128x384xbf16>
    %c0_7 = arith.constant 0 : index
    %c0_8 = arith.constant 0 : index
    %4 = vector.load %arg8[%c0_7, %c0_8] : memref<128x384xbf16, #tpu.memory_space<vmem>>, vector<128x384xbf16>
    %c0_9 = arith.constant 0 : index
    %c0_10 = arith.constant 0 : index
    %5 = vector.load %arg6[%c0_9, %c0_10] : memref<1x128xf32, #tpu.memory_space<vmem>>, vector<1x128xf32>
    %6 = vector.shape_cast %5 : vector<1x128xf32> to vector<1x128xf32>
    %7 = vector.broadcast %6 : vector<1x128xf32> to vector<8x128xf32>
    %c0_11 = arith.constant 0 : index
    %c0_12 = arith.constant 0 : index
    %8 = vector.load %arg10[%c0_11, %c0_12] : memref<1x128xf32, #tpu.memory_space<vmem>>, vector<1x128xf32>
    %9 = vector.shape_cast %8 : vector<1x128xf32> to vector<1x128xf32>
    %10 = vector.broadcast %9 : vector<1x128xf32> to vector<8x128xf32>
    %cst = arith.constant 0.000000e+00 : f32
    %11 = vector.broadcast %cst : f32 to vector<8x128xf32>
    %c0_13 = arith.constant 0 : index
    %c0_14 = arith.constant 0 : index
    %12 = vector.load %arg5[%c0_13, %c0_14] : memref<1x384xf32, #tpu.memory_space<vmem>>, vector<1x384xf32>
    %13 = vector.shape_cast %12 : vector<1x384xf32> to vector<1x384xf32>
    %14 = vector.broadcast %13 : vector<1x384xf32> to vector<8x384xf32>
    %c0_15 = arith.constant 0 : index
    %c0_16 = arith.constant 0 : index
    %15 = vector.load %arg9[%c0_15, %c0_16] : memref<1x384xf32, #tpu.memory_space<vmem>>, vector<1x384xf32>
    %16 = vector.shape_cast %15 : vector<1x384xf32> to vector<1x384xf32>
    %17 = vector.broadcast %16 : vector<1x384xf32> to vector<8x384xf32>
    %c0_17 = arith.constant 0 : index
    %c0_18 = arith.constant 0 : index
    %c0_19 = arith.constant 0 : index
    %18 = vector.load %arg1[%c0_17, %c0_18, %c0_19] : memref<8x8x32xbf16, #tpu.memory_space<vmem>>, vector<1x8x32xbf16>
    %19 = vector.shape_cast %18 : vector<1x8x32xbf16> to vector<8x32xbf16>
    %cst_20 = arith.constant dense<0.000000e+00> : vector<8x384xf32>
    %20 = tpu.matmul %19, %1, %cst_20 {dimension_numbers = #tpu.dot_dimension_numbers<[1], [0], [0], [1], [0, 0, 1, 1], [], []>} : vector<8x32xbf16>, vector<32x384xbf16>, vector<8x384xf32> -> vector<8x384xf32>
    %21 = arith.addf %20, %14 : vector<8x384xf32>
    %c7 = arith.constant 7 : index
    %c0_21 = arith.constant 0 : index
    %c0_22 = arith.constant 0 : index
    %22 = vector.load %arg1[%c7, %c0_21, %c0_22] : memref<8x8x32xbf16, #tpu.memory_space<vmem>>, vector<1x8x32xbf16>
    %23 = vector.shape_cast %22 : vector<1x8x32xbf16> to vector<8x32xbf16>
    %cst_23 = arith.constant dense<0.000000e+00> : vector<8x384xf32>
    %24 = tpu.matmul %23, %2, %cst_23 {dimension_numbers = #tpu.dot_dimension_numbers<[1], [0], [0], [1], [0, 0, 1, 1], [], []>} : vector<8x32xbf16>, vector<32x384xbf16>, vector<8x384xf32> -> vector<8x384xf32>
    %25 = arith.addf %24, %17 : vector<8x384xf32>
    %26 = arith.truncf %11 : vector<8x128xf32> to vector<8x128xbf16>
    %cst_24 = arith.constant dense<0.000000e+00> : vector<8x384xf32>
    %27 = tpu.matmul %26, %3, %cst_24 {dimension_numbers = #tpu.dot_dimension_numbers<[1], [0], [0], [1], [0, 0, 1, 1], [], []>} : vector<8x128xbf16>, vector<128x384xbf16>, vector<8x384xf32> -> vector<8x384xf32>
    %28 = vector.extract_strided_slice %21 {offsets = [0, 0], sizes = [8, 128], strides = [1, 1]} : vector<8x384xf32> to vector<8x128xf32>
    %29 = vector.extract_strided_slice %27 {offsets = [0, 0], sizes = [8, 128], strides = [1, 1]} : vector<8x384xf32> to vector<8x128xf32>
    %30 = arith.addf %28, %29 : vector<8x128xf32>
    %31 = arith.negf %30 : vector<8x128xf32>
    %32 = math.exp %31 : vector<8x128xf32>
    %cst_25 = arith.constant 1.000000e+00 : f32
    %33 = vector.broadcast %cst_25 : f32 to vector<8x128xf32>
    %34 = arith.addf %33, %32 : vector<8x128xf32>
    %35 = arith.divf %33, %34 : vector<8x128xf32>
    %36 = vector.extract_strided_slice %21 {offsets = [0, 128], sizes = [8, 128], strides = [1, 1]} : vector<8x384xf32> to vector<8x128xf32>
    %37 = vector.extract_strided_slice %27 {offsets = [0, 128], sizes = [8, 128], strides = [1, 1]} : vector<8x384xf32> to vector<8x128xf32>
    %38 = arith.addf %36, %37 : vector<8x128xf32>
    %39 = arith.negf %38 : vector<8x128xf32>
    %40 = math.exp %39 : vector<8x128xf32>
    %cst_26 = arith.constant 1.000000e+00 : f32
    %41 = vector.broadcast %cst_26 : f32 to vector<8x128xf32>
    %42 = arith.addf %41, %40 : vector<8x128xf32>
    %43 = arith.divf %41, %42 : vector<8x128xf32>
    %44 = vector.extract_strided_slice %21 {offsets = [0, 256], sizes = [8, 128], strides = [1, 1]} : vector<8x384xf32> to vector<8x128xf32>
    %45 = vector.extract_strided_slice %27 {offsets = [0, 256], sizes = [8, 128], strides = [1, 1]} : vector<8x384xf32> to vector<8x128xf32>
    %46 = arith.addf %45, %7 : vector<8x128xf32>
    %47 = arith.mulf %35, %46 : vector<8x128xf32>
    %48 = arith.addf %44, %47 : vector<8x128xf32>
    %49 = math.tanh %48 : vector<8x128xf32>
    %50 = arith.subf %11, %49 : vector<8x128xf32>
    %51 = arith.mulf %43, %50 : vector<8x128xf32>
    %52 = arith.addf %49, %51 : vector<8x128xf32>
    %53 = arith.truncf %11 : vector<8x128xf32> to vector<8x128xbf16>
    %cst_27 = arith.constant dense<0.000000e+00> : vector<8x384xf32>
    %54 = tpu.matmul %53, %4, %cst_27 {dimension_numbers = #tpu.dot_dimension_numbers<[1], [0], [0], [1], [0, 0, 1, 1], [], []>} : vector<8x128xbf16>, vector<128x384xbf16>, vector<8x384xf32> -> vector<8x384xf32>
    %55 = vector.extract_strided_slice %25 {offsets = [0, 0], sizes = [8, 128], strides = [1, 1]} : vector<8x384xf32> to vector<8x128xf32>
    %56 = vector.extract_strided_slice %54 {offsets = [0, 0], sizes = [8, 128], strides = [1, 1]} : vector<8x384xf32> to vector<8x128xf32>
    %57 = arith.addf %55, %56 : vector<8x128xf32>
    %58 = arith.negf %57 : vector<8x128xf32>
    %59 = math.exp %58 : vector<8x128xf32>
    %cst_28 = arith.constant 1.000000e+00 : f32
    %60 = vector.broadcast %cst_28 : f32 to vector<8x128xf32>
    %61 = arith.addf %60, %59 : vector<8x128xf32>
    %62 = arith.divf %60, %61 : vector<8x128xf32>
    %63 = vector.extract_strided_slice %25 {offsets = [0, 128], sizes = [8, 128], strides = [1, 1]} : vector<8x384xf32> to vector<8x128xf32>
    %64 = vector.extract_strided_slice %54 {offsets = [0, 128], sizes = [8, 128], strides = [1, 1]} : vector<8x384xf32> to vector<8x128xf32>
    %65 = arith.addf %63, %64 : vector<8x128xf32>
    %66 = arith.negf %65 : vector<8x128xf32>
    %67 = math.exp %66 : vector<8x128xf32>
    %cst_29 = arith.constant 1.000000e+00 : f32
    %68 = vector.broadcast %cst_29 : f32 to vector<8x128xf32>
    %69 = arith.addf %68, %67 : vector<8x128xf32>
    %70 = arith.divf %68, %69 : vector<8x128xf32>
    %71 = vector.extract_strided_slice %25 {offsets = [0, 256], sizes = [8, 128], strides = [1, 1]} : vector<8x384xf32> to vector<8x128xf32>
    %72 = vector.extract_strided_slice %54 {offsets = [0, 256], sizes = [8, 128], strides = [1, 1]} : vector<8x384xf32> to vector<8x128xf32>
    %73 = arith.addf %72, %10 : vector<8x128xf32>
    %74 = arith.mulf %62, %73 : vector<8x128xf32>
    %75 = arith.addf %71, %74 : vector<8x128xf32>
    %76 = math.tanh %75 : vector<8x128xf32>
    %77 = arith.subf %11, %76 : vector<8x128xf32>
    %78 = arith.mulf %70, %77 : vector<8x128xf32>
    %79 = arith.addf %76, %78 : vector<8x128xf32>
    %c0_i32 = arith.constant 0 : i32
    %80 = vector.broadcast %c0_i32 : i32 to vector<8x1xi32>
    %81 = arith.cmpi sgt, %0, %80 : vector<8x1xi32>
    %82 = vector.shape_cast %81 : vector<8x1xi1> to vector<8x1xi1>
    %83 = vector.broadcast %82 : vector<8x1xi1> to vector<8x128xi1>
    %84 = arith.select %83, %52, %11 : vector<8x128xi1>, vector<8x128xf32>
    %c7_i32 = arith.constant 7 : i32
    %85 = vector.broadcast %c7_i32 : i32 to vector<8x1xi32>
    %86 = arith.cmpi sgt, %0, %85 : vector<8x1xi32>
    %87 = vector.shape_cast %86 : vector<8x1xi1> to vector<8x1xi1>
    %88 = vector.broadcast %87 : vector<8x1xi1> to vector<8x128xi1>
    %89 = arith.select %88, %79, %11 : vector<8x128xi1>, vector<8x128xf32>
    %c1 = arith.constant 1 : index
    %c0_30 = arith.constant 0 : index
    %c0_31 = arith.constant 0 : index
    %90 = vector.load %arg1[%c1, %c0_30, %c0_31] : memref<8x8x32xbf16, #tpu.memory_space<vmem>>, vector<1x8x32xbf16>
    %91 = vector.shape_cast %90 : vector<1x8x32xbf16> to vector<8x32xbf16>
    %cst_32 = arith.constant dense<0.000000e+00> : vector<8x384xf32>
    %92 = tpu.matmul %91, %1, %cst_32 {dimension_numbers = #tpu.dot_dimension_numbers<[1], [0], [0], [1], [0, 0, 1, 1], [], []>} : vector<8x32xbf16>, vector<32x384xbf16>, vector<8x384xf32> -> vector<8x384xf32>
    %93 = arith.addf %92, %14 : vector<8x384xf32>
    %c6 = arith.constant 6 : index
    %c0_33 = arith.constant 0 : index
    %c0_34 = arith.constant 0 : index
    %94 = vector.load %arg1[%c6, %c0_33, %c0_34] : memref<8x8x32xbf16, #tpu.memory_space<vmem>>, vector<1x8x32xbf16>
    %95 = vector.shape_cast %94 : vector<1x8x32xbf16> to vector<8x32xbf16>
    %cst_35 = arith.constant dense<0.000000e+00> : vector<8x384xf32>
    %96 = tpu.matmul %95, %2, %cst_35 {dimension_numbers = #tpu.dot_dimension_numbers<[1], [0], [0], [1], [0, 0, 1, 1], [], []>} : vector<8x32xbf16>, vector<32x384xbf16>, vector<8x384xf32> -> vector<8x384xf32>
    %97 = arith.addf %96, %17 : vector<8x384xf32>
    %98 = arith.truncf %84 : vector<8x128xf32> to vector<8x128xbf16>
    %cst_36 = arith.constant dense<0.000000e+00> : vector<8x384xf32>
    %99 = tpu.matmul %98, %3, %cst_36 {dimension_numbers = #tpu.dot_dimension_numbers<[1], [0], [0], [1], [0, 0, 1, 1], [], []>} : vector<8x128xbf16>, vector<128x384xbf16>, vector<8x384xf32> -> vector<8x384xf32>
    %100 = vector.extract_strided_slice %93 {offsets = [0, 0], sizes = [8, 128], strides = [1, 1]} : vector<8x384xf32> to vector<8x128xf32>
    %101 = vector.extract_strided_slice %99 {offsets = [0, 0], sizes = [8, 128], strides = [1, 1]} : vector<8x384xf32> to vector<8x128xf32>
    %102 = arith.addf %100, %101 : vector<8x128xf32>
    %103 = arith.negf %102 : vector<8x128xf32>
    %104 = math.exp %103 : vector<8x128xf32>
    %cst_37 = arith.constant 1.000000e+00 : f32
    %105 = vector.broadcast %cst_37 : f32 to vector<8x128xf32>
    %106 = arith.addf %105, %104 : vector<8x128xf32>
    %107 = arith.divf %105, %106 : vector<8x128xf32>
    %108 = vector.extract_strided_slice %93 {offsets = [0, 128], sizes = [8, 128], strides = [1, 1]} : vector<8x384xf32> to vector<8x128xf32>
    %109 = vector.extract_strided_slice %99 {offsets = [0, 128], sizes = [8, 128], strides = [1, 1]} : vector<8x384xf32> to vector<8x128xf32>
    %110 = arith.addf %108, %109 : vector<8x128xf32>
    %111 = arith.negf %110 : vector<8x128xf32>
    %112 = math.exp %111 : vector<8x128xf32>
    %cst_38 = arith.constant 1.000000e+00 : f32
    %113 = vector.broadcast %cst_38 : f32 to vector<8x128xf32>
    %114 = arith.addf %113, %112 : vector<8x128xf32>
    %115 = arith.divf %113, %114 : vector<8x128xf32>
    %116 = vector.extract_strided_slice %93 {offsets = [0, 256], sizes = [8, 128], strides = [1, 1]} : vector<8x384xf32> to vector<8x128xf32>
    %117 = vector.extract_strided_slice %99 {offsets = [0, 256], sizes = [8, 128], strides = [1, 1]} : vector<8x384xf32> to vector<8x128xf32>
    %118 = arith.addf %117, %7 : vector<8x128xf32>
    %119 = arith.mulf %107, %118 : vector<8x128xf32>
    %120 = arith.addf %116, %119 : vector<8x128xf32>
    %121 = math.tanh %120 : vector<8x128xf32>
    %122 = arith.subf %84, %121 : vector<8x128xf32>
    %123 = arith.mulf %115, %122 : vector<8x128xf32>
    %124 = arith.addf %121, %123 : vector<8x128xf32>
    %125 = arith.truncf %89 : vector<8x128xf32> to vector<8x128xbf16>
    %cst_39 = arith.constant dense<0.000000e+00> : vector<8x384xf32>
    %126 = tpu.matmul %125, %4, %cst_39 {dimension_numbers = #tpu.dot_dimension_numbers<[1], [0], [0], [1], [0, 0, 1, 1], [], []>} : vector<8x128xbf16>, vector<128x384xbf16>, vector<8x384xf32> -> vector<8x384xf32>
    %127 = vector.extract_strided_slice %97 {offsets = [0, 0], sizes = [8, 128], strides = [1, 1]} : vector<8x384xf32> to vector<8x128xf32>
    %128 = vector.extract_strided_slice %126 {offsets = [0, 0], sizes = [8, 128], strides = [1, 1]} : vector<8x384xf32> to vector<8x128xf32>
    %129 = arith.addf %127, %128 : vector<8x128xf32>
    %130 = arith.negf %129 : vector<8x128xf32>
    %131 = math.exp %130 : vector<8x128xf32>
    %cst_40 = arith.constant 1.000000e+00 : f32
    %132 = vector.broadcast %cst_40 : f32 to vector<8x128xf32>
    %133 = arith.addf %132, %131 : vector<8x128xf32>
    %134 = arith.divf %132, %133 : vector<8x128xf32>
    %135 = vector.extract_strided_slice %97 {offsets = [0, 128], sizes = [8, 128], strides = [1, 1]} : vector<8x384xf32> to vector<8x128xf32>
    %136 = vector.extract_strided_slice %126 {offsets = [0, 128], sizes = [8, 128], strides = [1, 1]} : vector<8x384xf32> to vector<8x128xf32>
    %137 = arith.addf %135, %136 : vector<8x128xf32>
    %138 = arith.negf %137 : vector<8x128xf32>
    %139 = math.exp %138 : vector<8x128xf32>
    %cst_41 = arith.constant 1.000000e+00 : f32
    %140 = vector.broadcast %cst_41 : f32 to vector<8x128xf32>
    %141 = arith.addf %140, %139 : vector<8x128xf32>
    %142 = arith.divf %140, %141 : vector<8x128xf32>
    %143 = vector.extract_strided_slice %97 {offsets = [0, 256], sizes = [8, 128], strides = [1, 1]} : vector<8x384xf32> to vector<8x128xf32>
    %144 = vector.extract_strided_slice %126 {offsets = [0, 256], sizes = [8, 128], strides = [1, 1]} : vector<8x384xf32> to vector<8x128xf32>
    %145 = arith.addf %144, %10 : vector<8x128xf32>
    %146 = arith.mulf %134, %145 : vector<8x128xf32>
    %147 = arith.addf %143, %146 : vector<8x128xf32>
    %148 = math.tanh %147 : vector<8x128xf32>
    %149 = arith.subf %89, %148 : vector<8x128xf32>
    %150 = arith.mulf %142, %149 : vector<8x128xf32>
    %151 = arith.addf %148, %150 : vector<8x128xf32>
    %c1_i32 = arith.constant 1 : i32
    %152 = vector.broadcast %c1_i32 : i32 to vector<8x1xi32>
    %153 = arith.cmpi sgt, %0, %152 : vector<8x1xi32>
    %154 = vector.shape_cast %153 : vector<8x1xi1> to vector<8x1xi1>
    %155 = vector.broadcast %154 : vector<8x1xi1> to vector<8x128xi1>
    %156 = arith.select %155, %124, %84 : vector<8x128xi1>, vector<8x128xf32>
    %c6_i32 = arith.constant 6 : i32
    %157 = vector.broadcast %c6_i32 : i32 to vector<8x1xi32>
    %158 = arith.cmpi sgt, %0, %157 : vector<8x1xi32>
    %159 = vector.shape_cast %158 : vector<8x1xi1> to vector<8x1xi1>
    %160 = vector.broadcast %159 : vector<8x1xi1> to vector<8x128xi1>
    %161 = arith.select %160, %151, %89 : vector<8x128xi1>, vector<8x128xf32>
    %c2 = arith.constant 2 : index
    %c0_42 = arith.constant 0 : index
    %c0_43 = arith.constant 0 : index
    %162 = vector.load %arg1[%c2, %c0_42, %c0_43] : memref<8x8x32xbf16, #tpu.memory_space<vmem>>, vector<1x8x32xbf16>
    %163 = vector.shape_cast %162 : vector<1x8x32xbf16> to vector<8x32xbf16>
    %cst_44 = arith.constant dense<0.000000e+00> : vector<8x384xf32>
    %164 = tpu.matmul %163, %1, %cst_44 {dimension_numbers = #tpu.dot_dimension_numbers<[1], [0], [0], [1], [0, 0, 1, 1], [], []>} : vector<8x32xbf16>, vector<32x384xbf16>, vector<8x384xf32> -> vector<8x384xf32>
    %165 = arith.addf %164, %14 : vector<8x384xf32>
    %c5 = arith.constant 5 : index
    %c0_45 = arith.constant 0 : index
    %c0_46 = arith.constant 0 : index
    %166 = vector.load %arg1[%c5, %c0_45, %c0_46] : memref<8x8x32xbf16, #tpu.memory_space<vmem>>, vector<1x8x32xbf16>
    %167 = vector.shape_cast %166 : vector<1x8x32xbf16> to vector<8x32xbf16>
    %cst_47 = arith.constant dense<0.000000e+00> : vector<8x384xf32>
    %168 = tpu.matmul %167, %2, %cst_47 {dimension_numbers = #tpu.dot_dimension_numbers<[1], [0], [0], [1], [0, 0, 1, 1], [], []>} : vector<8x32xbf16>, vector<32x384xbf16>, vector<8x384xf32> -> vector<8x384xf32>
    %169 = arith.addf %168, %17 : vector<8x384xf32>
    %170 = arith.truncf %156 : vector<8x128xf32> to vector<8x128xbf16>
    %cst_48 = arith.constant dense<0.000000e+00> : vector<8x384xf32>
    %171 = tpu.matmul %170, %3, %cst_48 {dimension_numbers = #tpu.dot_dimension_numbers<[1], [0], [0], [1], [0, 0, 1, 1], [], []>} : vector<8x128xbf16>, vector<128x384xbf16>, vector<8x384xf32> -> vector<8x384xf32>
    %172 = vector.extract_strided_slice %165 {offsets = [0, 0], sizes = [8, 128], strides = [1, 1]} : vector<8x384xf32> to vector<8x128xf32>
    %173 = vector.extract_strided_slice %171 {offsets = [0, 0], sizes = [8, 128], strides = [1, 1]} : vector<8x384xf32> to vector<8x128xf32>
    %174 = arith.addf %172, %173 : vector<8x128xf32>
    %175 = arith.negf %174 : vector<8x128xf32>
    %176 = math.exp %175 : vector<8x128xf32>
    %cst_49 = arith.constant 1.000000e+00 : f32
    %177 = vector.broadcast %cst_49 : f32 to vector<8x128xf32>
    %178 = arith.addf %177, %176 : vector<8x128xf32>
    %179 = arith.divf %177, %178 : vector<8x128xf32>
    %180 = vector.extract_strided_slice %165 {offsets = [0, 128], sizes = [8, 128], strides = [1, 1]} : vector<8x384xf32> to vector<8x128xf32>
    %181 = vector.extract_strided_slice %171 {offsets = [0, 128], sizes = [8, 128], strides = [1, 1]} : vector<8x384xf32> to vector<8x128xf32>
    %182 = arith.addf %180, %181 : vector<8x128xf32>
    %183 = arith.negf %182 : vector<8x128xf32>
    %184 = math.exp %183 : vector<8x128xf32>
    %cst_50 = arith.constant 1.000000e+00 : f32
    %185 = vector.broadcast %cst_50 : f32 to vector<8x128xf32>
    %186 = arith.addf %185, %184 : vector<8x128xf32>
    %187 = arith.divf %185, %186 : vector<8x128xf32>
    %188 = vector.extract_strided_slice %165 {offsets = [0, 256], sizes = [8, 128], strides = [1, 1]} : vector<8x384xf32> to vector<8x128xf32>
    %189 = vector.extract_strided_slice %171 {offsets = [0, 256], sizes = [8, 128], strides = [1, 1]} : vector<8x384xf32> to vector<8x128xf32>
    %190 = arith.addf %189, %7 : vector<8x128xf32>
    %191 = arith.mulf %179, %190 : vector<8x128xf32>
    %192 = arith.addf %188, %191 : vector<8x128xf32>
    %193 = math.tanh %192 : vector<8x128xf32>
    %194 = arith.subf %156, %193 : vector<8x128xf32>
    %195 = arith.mulf %187, %194 : vector<8x128xf32>
    %196 = arith.addf %193, %195 : vector<8x128xf32>
    %197 = arith.truncf %161 : vector<8x128xf32> to vector<8x128xbf16>
    %cst_51 = arith.constant dense<0.000000e+00> : vector<8x384xf32>
    %198 = tpu.matmul %197, %4, %cst_51 {dimension_numbers = #tpu.dot_dimension_numbers<[1], [0], [0], [1], [0, 0, 1, 1], [], []>} : vector<8x128xbf16>, vector<128x384xbf16>, vector<8x384xf32> -> vector<8x384xf32>
    %199 = vector.extract_strided_slice %169 {offsets = [0, 0], sizes = [8, 128], strides = [1, 1]} : vector<8x384xf32> to vector<8x128xf32>
    %200 = vector.extract_strided_slice %198 {offsets = [0, 0], sizes = [8, 128], strides = [1, 1]} : vector<8x384xf32> to vector<8x128xf32>
    %201 = arith.addf %199, %200 : vector<8x128xf32>
    %202 = arith.negf %201 : vector<8x128xf32>
    %203 = math.exp %202 : vector<8x128xf32>
    %cst_52 = arith.constant 1.000000e+00 : f32
    %204 = vector.broadcast %cst_52 : f32 to vector<8x128xf32>
    %205 = arith.addf %204, %203 : vector<8x128xf32>
    %206 = arith.divf %204, %205 : vector<8x128xf32>
    %207 = vector.extract_strided_slice %169 {offsets = [0, 128], sizes = [8, 128], strides = [1, 1]} : vector<8x384xf32> to vector<8x128xf32>
    %208 = vector.extract_strided_slice %198 {offsets = [0, 128], sizes = [8, 128], strides = [1, 1]} : vector<8x384xf32> to vector<8x128xf32>
    %209 = arith.addf %207, %208 : vector<8x128xf32>
    %210 = arith.negf %209 : vector<8x128xf32>
    %211 = math.exp %210 : vector<8x128xf32>
    %cst_53 = arith.constant 1.000000e+00 : f32
    %212 = vector.broadcast %cst_53 : f32 to vector<8x128xf32>
    %213 = arith.addf %212, %211 : vector<8x128xf32>
    %214 = arith.divf %212, %213 : vector<8x128xf32>
    %215 = vector.extract_strided_slice %169 {offsets = [0, 256], sizes = [8, 128], strides = [1, 1]} : vector<8x384xf32> to vector<8x128xf32>
    %216 = vector.extract_strided_slice %198 {offsets = [0, 256], sizes = [8, 128], strides = [1, 1]} : vector<8x384xf32> to vector<8x128xf32>
    %217 = arith.addf %216, %10 : vector<8x128xf32>
    %218 = arith.mulf %206, %217 : vector<8x128xf32>
    %219 = arith.addf %215, %218 : vector<8x128xf32>
    %220 = math.tanh %219 : vector<8x128xf32>
    %221 = arith.subf %161, %220 : vector<8x128xf32>
    %222 = arith.mulf %214, %221 : vector<8x128xf32>
    %223 = arith.addf %220, %222 : vector<8x128xf32>
    %c2_i32 = arith.constant 2 : i32
    %224 = vector.broadcast %c2_i32 : i32 to vector<8x1xi32>
    %225 = arith.cmpi sgt, %0, %224 : vector<8x1xi32>
    %226 = vector.shape_cast %225 : vector<8x1xi1> to vector<8x1xi1>
    %227 = vector.broadcast %226 : vector<8x1xi1> to vector<8x128xi1>
    %228 = arith.select %227, %196, %156 : vector<8x128xi1>, vector<8x128xf32>
    %c5_i32 = arith.constant 5 : i32
    %229 = vector.broadcast %c5_i32 : i32 to vector<8x1xi32>
    %230 = arith.cmpi sgt, %0, %229 : vector<8x1xi32>
    %231 = vector.shape_cast %230 : vector<8x1xi1> to vector<8x1xi1>
    %232 = vector.broadcast %231 : vector<8x1xi1> to vector<8x128xi1>
    %233 = arith.select %232, %223, %161 : vector<8x128xi1>, vector<8x128xf32>
    %c3 = arith.constant 3 : index
    %c0_54 = arith.constant 0 : index
    %c0_55 = arith.constant 0 : index
    %234 = vector.load %arg1[%c3, %c0_54, %c0_55] : memref<8x8x32xbf16, #tpu.memory_space<vmem>>, vector<1x8x32xbf16>
    %235 = vector.shape_cast %234 : vector<1x8x32xbf16> to vector<8x32xbf16>
    %cst_56 = arith.constant dense<0.000000e+00> : vector<8x384xf32>
    %236 = tpu.matmul %235, %1, %cst_56 {dimension_numbers = #tpu.dot_dimension_numbers<[1], [0], [0], [1], [0, 0, 1, 1], [], []>} : vector<8x32xbf16>, vector<32x384xbf16>, vector<8x384xf32> -> vector<8x384xf32>
    %237 = arith.addf %236, %14 : vector<8x384xf32>
    %c4 = arith.constant 4 : index
    %c0_57 = arith.constant 0 : index
    %c0_58 = arith.constant 0 : index
    %238 = vector.load %arg1[%c4, %c0_57, %c0_58] : memref<8x8x32xbf16, #tpu.memory_space<vmem>>, vector<1x8x32xbf16>
    %239 = vector.shape_cast %238 : vector<1x8x32xbf16> to vector<8x32xbf16>
    %cst_59 = arith.constant dense<0.000000e+00> : vector<8x384xf32>
    %240 = tpu.matmul %239, %2, %cst_59 {dimension_numbers = #tpu.dot_dimension_numbers<[1], [0], [0], [1], [0, 0, 1, 1], [], []>} : vector<8x32xbf16>, vector<32x384xbf16>, vector<8x384xf32> -> vector<8x384xf32>
    %241 = arith.addf %240, %17 : vector<8x384xf32>
    %242 = arith.truncf %228 : vector<8x128xf32> to vector<8x128xbf16>
    %cst_60 = arith.constant dense<0.000000e+00> : vector<8x384xf32>
    %243 = tpu.matmul %242, %3, %cst_60 {dimension_numbers = #tpu.dot_dimension_numbers<[1], [0], [0], [1], [0, 0, 1, 1], [], []>} : vector<8x128xbf16>, vector<128x384xbf16>, vector<8x384xf32> -> vector<8x384xf32>
    %244 = vector.extract_strided_slice %237 {offsets = [0, 0], sizes = [8, 128], strides = [1, 1]} : vector<8x384xf32> to vector<8x128xf32>
    %245 = vector.extract_strided_slice %243 {offsets = [0, 0], sizes = [8, 128], strides = [1, 1]} : vector<8x384xf32> to vector<8x128xf32>
    %246 = arith.addf %244, %245 : vector<8x128xf32>
    %247 = arith.negf %246 : vector<8x128xf32>
    %248 = math.exp %247 : vector<8x128xf32>
    %cst_61 = arith.constant 1.000000e+00 : f32
    %249 = vector.broadcast %cst_61 : f32 to vector<8x128xf32>
    %250 = arith.addf %249, %248 : vector<8x128xf32>
    %251 = arith.divf %249, %250 : vector<8x128xf32>
    %252 = vector.extract_strided_slice %237 {offsets = [0, 128], sizes = [8, 128], strides = [1, 1]} : vector<8x384xf32> to vector<8x128xf32>
    %253 = vector.extract_strided_slice %243 {offsets = [0, 128], sizes = [8, 128], strides = [1, 1]} : vector<8x384xf32> to vector<8x128xf32>
    %254 = arith.addf %252, %253 : vector<8x128xf32>
    %255 = arith.negf %254 : vector<8x128xf32>
    %256 = math.exp %255 : vector<8x128xf32>
    %cst_62 = arith.constant 1.000000e+00 : f32
    %257 = vector.broadcast %cst_62 : f32 to vector<8x128xf32>
    %258 = arith.addf %257, %256 : vector<8x128xf32>
    %259 = arith.divf %257, %258 : vector<8x128xf32>
    %260 = vector.extract_strided_slice %237 {offsets = [0, 256], sizes = [8, 128], strides = [1, 1]} : vector<8x384xf32> to vector<8x128xf32>
    %261 = vector.extract_strided_slice %243 {offsets = [0, 256], sizes = [8, 128], strides = [1, 1]} : vector<8x384xf32> to vector<8x128xf32>
    %262 = arith.addf %261, %7 : vector<8x128xf32>
    %263 = arith.mulf %251, %262 : vector<8x128xf32>
    %264 = arith.addf %260, %263 : vector<8x128xf32>
    %265 = math.tanh %264 : vector<8x128xf32>
    %266 = arith.subf %228, %265 : vector<8x128xf32>
    %267 = arith.mulf %259, %266 : vector<8x128xf32>
    %268 = arith.addf %265, %267 : vector<8x128xf32>
    %269 = arith.truncf %233 : vector<8x128xf32> to vector<8x128xbf16>
    %cst_63 = arith.constant dense<0.000000e+00> : vector<8x384xf32>
    %270 = tpu.matmul %269, %4, %cst_63 {dimension_numbers = #tpu.dot_dimension_numbers<[1], [0], [0], [1], [0, 0, 1, 1], [], []>} : vector<8x128xbf16>, vector<128x384xbf16>, vector<8x384xf32> -> vector<8x384xf32>
    %271 = vector.extract_strided_slice %241 {offsets = [0, 0], sizes = [8, 128], strides = [1, 1]} : vector<8x384xf32> to vector<8x128xf32>
    %272 = vector.extract_strided_slice %270 {offsets = [0, 0], sizes = [8, 128], strides = [1, 1]} : vector<8x384xf32> to vector<8x128xf32>
    %273 = arith.addf %271, %272 : vector<8x128xf32>
    %274 = arith.negf %273 : vector<8x128xf32>
    %275 = math.exp %274 : vector<8x128xf32>
    %cst_64 = arith.constant 1.000000e+00 : f32
    %276 = vector.broadcast %cst_64 : f32 to vector<8x128xf32>
    %277 = arith.addf %276, %275 : vector<8x128xf32>
    %278 = arith.divf %276, %277 : vector<8x128xf32>
    %279 = vector.extract_strided_slice %241 {offsets = [0, 128], sizes = [8, 128], strides = [1, 1]} : vector<8x384xf32> to vector<8x128xf32>
    %280 = vector.extract_strided_slice %270 {offsets = [0, 128], sizes = [8, 128], strides = [1, 1]} : vector<8x384xf32> to vector<8x128xf32>
    %281 = arith.addf %279, %280 : vector<8x128xf32>
    %282 = arith.negf %281 : vector<8x128xf32>
    %283 = math.exp %282 : vector<8x128xf32>
    %cst_65 = arith.constant 1.000000e+00 : f32
    %284 = vector.broadcast %cst_65 : f32 to vector<8x128xf32>
    %285 = arith.addf %284, %283 : vector<8x128xf32>
    %286 = arith.divf %284, %285 : vector<8x128xf32>
    %287 = vector.extract_strided_slice %241 {offsets = [0, 256], sizes = [8, 128], strides = [1, 1]} : vector<8x384xf32> to vector<8x128xf32>
    %288 = vector.extract_strided_slice %270 {offsets = [0, 256], sizes = [8, 128], strides = [1, 1]} : vector<8x384xf32> to vector<8x128xf32>
    %289 = arith.addf %288, %10 : vector<8x128xf32>
    %290 = arith.mulf %278, %289 : vector<8x128xf32>
    %291 = arith.addf %287, %290 : vector<8x128xf32>
    %292 = math.tanh %291 : vector<8x128xf32>
    %293 = arith.subf %233, %292 : vector<8x128xf32>
    %294 = arith.mulf %286, %293 : vector<8x128xf32>
    %295 = arith.addf %292, %294 : vector<8x128xf32>
    %c3_i32 = arith.constant 3 : i32
    %296 = vector.broadcast %c3_i32 : i32 to vector<8x1xi32>
    %297 = arith.cmpi sgt, %0, %296 : vector<8x1xi32>
    %298 = vector.shape_cast %297 : vector<8x1xi1> to vector<8x1xi1>
    %299 = vector.broadcast %298 : vector<8x1xi1> to vector<8x128xi1>
    %300 = arith.select %299, %268, %228 : vector<8x128xi1>, vector<8x128xf32>
    %c4_i32 = arith.constant 4 : i32
    %301 = vector.broadcast %c4_i32 : i32 to vector<8x1xi32>
    %302 = arith.cmpi sgt, %0, %301 : vector<8x1xi32>
    %303 = vector.shape_cast %302 : vector<8x1xi1> to vector<8x1xi1>
    %304 = vector.broadcast %303 : vector<8x1xi1> to vector<8x128xi1>
    %305 = arith.select %304, %295, %233 : vector<8x128xi1>, vector<8x128xf32>
    %c4_66 = arith.constant 4 : index
    %c0_67 = arith.constant 0 : index
    %c0_68 = arith.constant 0 : index
    %306 = vector.load %arg1[%c4_66, %c0_67, %c0_68] : memref<8x8x32xbf16, #tpu.memory_space<vmem>>, vector<1x8x32xbf16>
    %307 = vector.shape_cast %306 : vector<1x8x32xbf16> to vector<8x32xbf16>
    %cst_69 = arith.constant dense<0.000000e+00> : vector<8x384xf32>
    %308 = tpu.matmul %307, %1, %cst_69 {dimension_numbers = #tpu.dot_dimension_numbers<[1], [0], [0], [1], [0, 0, 1, 1], [], []>} : vector<8x32xbf16>, vector<32x384xbf16>, vector<8x384xf32> -> vector<8x384xf32>
    %309 = arith.addf %308, %14 : vector<8x384xf32>
    %c3_70 = arith.constant 3 : index
    %c0_71 = arith.constant 0 : index
    %c0_72 = arith.constant 0 : index
    %310 = vector.load %arg1[%c3_70, %c0_71, %c0_72] : memref<8x8x32xbf16, #tpu.memory_space<vmem>>, vector<1x8x32xbf16>
    %311 = vector.shape_cast %310 : vector<1x8x32xbf16> to vector<8x32xbf16>
    %cst_73 = arith.constant dense<0.000000e+00> : vector<8x384xf32>
    %312 = tpu.matmul %311, %2, %cst_73 {dimension_numbers = #tpu.dot_dimension_numbers<[1], [0], [0], [1], [0, 0, 1, 1], [], []>} : vector<8x32xbf16>, vector<32x384xbf16>, vector<8x384xf32> -> vector<8x384xf32>
    %313 = arith.addf %312, %17 : vector<8x384xf32>
    %314 = arith.truncf %300 : vector<8x128xf32> to vector<8x128xbf16>
    %cst_74 = arith.constant dense<0.000000e+00> : vector<8x384xf32>
    %315 = tpu.matmul %314, %3, %cst_74 {dimension_numbers = #tpu.dot_dimension_numbers<[1], [0], [0], [1], [0, 0, 1, 1], [], []>} : vector<8x128xbf16>, vector<128x384xbf16>, vector<8x384xf32> -> vector<8x384xf32>
    %316 = vector.extract_strided_slice %309 {offsets = [0, 0], sizes = [8, 128], strides = [1, 1]} : vector<8x384xf32> to vector<8x128xf32>
    %317 = vector.extract_strided_slice %315 {offsets = [0, 0], sizes = [8, 128], strides = [1, 1]} : vector<8x384xf32> to vector<8x128xf32>
    %318 = arith.addf %316, %317 : vector<8x128xf32>
    %319 = arith.negf %318 : vector<8x128xf32>
    %320 = math.exp %319 : vector<8x128xf32>
    %cst_75 = arith.constant 1.000000e+00 : f32
    %321 = vector.broadcast %cst_75 : f32 to vector<8x128xf32>
    %322 = arith.addf %321, %320 : vector<8x128xf32>
    %323 = arith.divf %321, %322 : vector<8x128xf32>
    %324 = vector.extract_strided_slice %309 {offsets = [0, 128], sizes = [8, 128], strides = [1, 1]} : vector<8x384xf32> to vector<8x128xf32>
    %325 = vector.extract_strided_slice %315 {offsets = [0, 128], sizes = [8, 128], strides = [1, 1]} : vector<8x384xf32> to vector<8x128xf32>
    %326 = arith.addf %324, %325 : vector<8x128xf32>
    %327 = arith.negf %326 : vector<8x128xf32>
    %328 = math.exp %327 : vector<8x128xf32>
    %cst_76 = arith.constant 1.000000e+00 : f32
    %329 = vector.broadcast %cst_76 : f32 to vector<8x128xf32>
    %330 = arith.addf %329, %328 : vector<8x128xf32>
    %331 = arith.divf %329, %330 : vector<8x128xf32>
    %332 = vector.extract_strided_slice %309 {offsets = [0, 256], sizes = [8, 128], strides = [1, 1]} : vector<8x384xf32> to vector<8x128xf32>
    %333 = vector.extract_strided_slice %315 {offsets = [0, 256], sizes = [8, 128], strides = [1, 1]} : vector<8x384xf32> to vector<8x128xf32>
    %334 = arith.addf %333, %7 : vector<8x128xf32>
    %335 = arith.mulf %323, %334 : vector<8x128xf32>
    %336 = arith.addf %332, %335 : vector<8x128xf32>
    %337 = math.tanh %336 : vector<8x128xf32>
    %338 = arith.subf %300, %337 : vector<8x128xf32>
    %339 = arith.mulf %331, %338 : vector<8x128xf32>
    %340 = arith.addf %337, %339 : vector<8x128xf32>
    %341 = arith.truncf %305 : vector<8x128xf32> to vector<8x128xbf16>
    %cst_77 = arith.constant dense<0.000000e+00> : vector<8x384xf32>
    %342 = tpu.matmul %341, %4, %cst_77 {dimension_numbers = #tpu.dot_dimension_numbers<[1], [0], [0], [1], [0, 0, 1, 1], [], []>} : vector<8x128xbf16>, vector<128x384xbf16>, vector<8x384xf32> -> vector<8x384xf32>
    %343 = vector.extract_strided_slice %313 {offsets = [0, 0], sizes = [8, 128], strides = [1, 1]} : vector<8x384xf32> to vector<8x128xf32>
    %344 = vector.extract_strided_slice %342 {offsets = [0, 0], sizes = [8, 128], strides = [1, 1]} : vector<8x384xf32> to vector<8x128xf32>
    %345 = arith.addf %343, %344 : vector<8x128xf32>
    %346 = arith.negf %345 : vector<8x128xf32>
    %347 = math.exp %346 : vector<8x128xf32>
    %cst_78 = arith.constant 1.000000e+00 : f32
    %348 = vector.broadcast %cst_78 : f32 to vector<8x128xf32>
    %349 = arith.addf %348, %347 : vector<8x128xf32>
    %350 = arith.divf %348, %349 : vector<8x128xf32>
    %351 = vector.extract_strided_slice %313 {offsets = [0, 128], sizes = [8, 128], strides = [1, 1]} : vector<8x384xf32> to vector<8x128xf32>
    %352 = vector.extract_strided_slice %342 {offsets = [0, 128], sizes = [8, 128], strides = [1, 1]} : vector<8x384xf32> to vector<8x128xf32>
    %353 = arith.addf %351, %352 : vector<8x128xf32>
    %354 = arith.negf %353 : vector<8x128xf32>
    %355 = math.exp %354 : vector<8x128xf32>
    %cst_79 = arith.constant 1.000000e+00 : f32
    %356 = vector.broadcast %cst_79 : f32 to vector<8x128xf32>
    %357 = arith.addf %356, %355 : vector<8x128xf32>
    %358 = arith.divf %356, %357 : vector<8x128xf32>
    %359 = vector.extract_strided_slice %313 {offsets = [0, 256], sizes = [8, 128], strides = [1, 1]} : vector<8x384xf32> to vector<8x128xf32>
    %360 = vector.extract_strided_slice %342 {offsets = [0, 256], sizes = [8, 128], strides = [1, 1]} : vector<8x384xf32> to vector<8x128xf32>
    %361 = arith.addf %360, %10 : vector<8x128xf32>
    %362 = arith.mulf %350, %361 : vector<8x128xf32>
    %363 = arith.addf %359, %362 : vector<8x128xf32>
    %364 = math.tanh %363 : vector<8x128xf32>
    %365 = arith.subf %305, %364 : vector<8x128xf32>
    %366 = arith.mulf %358, %365 : vector<8x128xf32>
    %367 = arith.addf %364, %366 : vector<8x128xf32>
    %c4_i32_80 = arith.constant 4 : i32
    %368 = vector.broadcast %c4_i32_80 : i32 to vector<8x1xi32>
    %369 = arith.cmpi sgt, %0, %368 : vector<8x1xi32>
    %370 = vector.shape_cast %369 : vector<8x1xi1> to vector<8x1xi1>
    %371 = vector.broadcast %370 : vector<8x1xi1> to vector<8x128xi1>
    %372 = arith.select %371, %340, %300 : vector<8x128xi1>, vector<8x128xf32>
    %c3_i32_81 = arith.constant 3 : i32
    %373 = vector.broadcast %c3_i32_81 : i32 to vector<8x1xi32>
    %374 = arith.cmpi sgt, %0, %373 : vector<8x1xi32>
    %375 = vector.shape_cast %374 : vector<8x1xi1> to vector<8x1xi1>
    %376 = vector.broadcast %375 : vector<8x1xi1> to vector<8x128xi1>
    %377 = arith.select %376, %367, %305 : vector<8x128xi1>, vector<8x128xf32>
    %c5_82 = arith.constant 5 : index
    %c0_83 = arith.constant 0 : index
    %c0_84 = arith.constant 0 : index
    %378 = vector.load %arg1[%c5_82, %c0_83, %c0_84] : memref<8x8x32xbf16, #tpu.memory_space<vmem>>, vector<1x8x32xbf16>
    %379 = vector.shape_cast %378 : vector<1x8x32xbf16> to vector<8x32xbf16>
    %cst_85 = arith.constant dense<0.000000e+00> : vector<8x384xf32>
    %380 = tpu.matmul %379, %1, %cst_85 {dimension_numbers = #tpu.dot_dimension_numbers<[1], [0], [0], [1], [0, 0, 1, 1], [], []>} : vector<8x32xbf16>, vector<32x384xbf16>, vector<8x384xf32> -> vector<8x384xf32>
    %381 = arith.addf %380, %14 : vector<8x384xf32>
    %c2_86 = arith.constant 2 : index
    %c0_87 = arith.constant 0 : index
    %c0_88 = arith.constant 0 : index
    %382 = vector.load %arg1[%c2_86, %c0_87, %c0_88] : memref<8x8x32xbf16, #tpu.memory_space<vmem>>, vector<1x8x32xbf16>
    %383 = vector.shape_cast %382 : vector<1x8x32xbf16> to vector<8x32xbf16>
    %cst_89 = arith.constant dense<0.000000e+00> : vector<8x384xf32>
    %384 = tpu.matmul %383, %2, %cst_89 {dimension_numbers = #tpu.dot_dimension_numbers<[1], [0], [0], [1], [0, 0, 1, 1], [], []>} : vector<8x32xbf16>, vector<32x384xbf16>, vector<8x384xf32> -> vector<8x384xf32>
    %385 = arith.addf %384, %17 : vector<8x384xf32>
    %386 = arith.truncf %372 : vector<8x128xf32> to vector<8x128xbf16>
    %cst_90 = arith.constant dense<0.000000e+00> : vector<8x384xf32>
    %387 = tpu.matmul %386, %3, %cst_90 {dimension_numbers = #tpu.dot_dimension_numbers<[1], [0], [0], [1], [0, 0, 1, 1], [], []>} : vector<8x128xbf16>, vector<128x384xbf16>, vector<8x384xf32> -> vector<8x384xf32>
    %388 = vector.extract_strided_slice %381 {offsets = [0, 0], sizes = [8, 128], strides = [1, 1]} : vector<8x384xf32> to vector<8x128xf32>
    %389 = vector.extract_strided_slice %387 {offsets = [0, 0], sizes = [8, 128], strides = [1, 1]} : vector<8x384xf32> to vector<8x128xf32>
    %390 = arith.addf %388, %389 : vector<8x128xf32>
    %391 = arith.negf %390 : vector<8x128xf32>
    %392 = math.exp %391 : vector<8x128xf32>
    %cst_91 = arith.constant 1.000000e+00 : f32
    %393 = vector.broadcast %cst_91 : f32 to vector<8x128xf32>
    %394 = arith.addf %393, %392 : vector<8x128xf32>
    %395 = arith.divf %393, %394 : vector<8x128xf32>
    %396 = vector.extract_strided_slice %381 {offsets = [0, 128], sizes = [8, 128], strides = [1, 1]} : vector<8x384xf32> to vector<8x128xf32>
    %397 = vector.extract_strided_slice %387 {offsets = [0, 128], sizes = [8, 128], strides = [1, 1]} : vector<8x384xf32> to vector<8x128xf32>
    %398 = arith.addf %396, %397 : vector<8x128xf32>
    %399 = arith.negf %398 : vector<8x128xf32>
    %400 = math.exp %399 : vector<8x128xf32>
    %cst_92 = arith.constant 1.000000e+00 : f32
    %401 = vector.broadcast %cst_92 : f32 to vector<8x128xf32>
    %402 = arith.addf %401, %400 : vector<8x128xf32>
    %403 = arith.divf %401, %402 : vector<8x128xf32>
    %404 = vector.extract_strided_slice %381 {offsets = [0, 256], sizes = [8, 128], strides = [1, 1]} : vector<8x384xf32> to vector<8x128xf32>
    %405 = vector.extract_strided_slice %387 {offsets = [0, 256], sizes = [8, 128], strides = [1, 1]} : vector<8x384xf32> to vector<8x128xf32>
    %406 = arith.addf %405, %7 : vector<8x128xf32>
    %407 = arith.mulf %395, %406 : vector<8x128xf32>
    %408 = arith.addf %404, %407 : vector<8x128xf32>
    %409 = math.tanh %408 : vector<8x128xf32>
    %410 = arith.subf %372, %409 : vector<8x128xf32>
    %411 = arith.mulf %403, %410 : vector<8x128xf32>
    %412 = arith.addf %409, %411 : vector<8x128xf32>
    %413 = arith.truncf %377 : vector<8x128xf32> to vector<8x128xbf16>
    %cst_93 = arith.constant dense<0.000000e+00> : vector<8x384xf32>
    %414 = tpu.matmul %413, %4, %cst_93 {dimension_numbers = #tpu.dot_dimension_numbers<[1], [0], [0], [1], [0, 0, 1, 1], [], []>} : vector<8x128xbf16>, vector<128x384xbf16>, vector<8x384xf32> -> vector<8x384xf32>
    %415 = vector.extract_strided_slice %385 {offsets = [0, 0], sizes = [8, 128], strides = [1, 1]} : vector<8x384xf32> to vector<8x128xf32>
    %416 = vector.extract_strided_slice %414 {offsets = [0, 0], sizes = [8, 128], strides = [1, 1]} : vector<8x384xf32> to vector<8x128xf32>
    %417 = arith.addf %415, %416 : vector<8x128xf32>
    %418 = arith.negf %417 : vector<8x128xf32>
    %419 = math.exp %418 : vector<8x128xf32>
    %cst_94 = arith.constant 1.000000e+00 : f32
    %420 = vector.broadcast %cst_94 : f32 to vector<8x128xf32>
    %421 = arith.addf %420, %419 : vector<8x128xf32>
    %422 = arith.divf %420, %421 : vector<8x128xf32>
    %423 = vector.extract_strided_slice %385 {offsets = [0, 128], sizes = [8, 128], strides = [1, 1]} : vector<8x384xf32> to vector<8x128xf32>
    %424 = vector.extract_strided_slice %414 {offsets = [0, 128], sizes = [8, 128], strides = [1, 1]} : vector<8x384xf32> to vector<8x128xf32>
    %425 = arith.addf %423, %424 : vector<8x128xf32>
    %426 = arith.negf %425 : vector<8x128xf32>
    %427 = math.exp %426 : vector<8x128xf32>
    %cst_95 = arith.constant 1.000000e+00 : f32
    %428 = vector.broadcast %cst_95 : f32 to vector<8x128xf32>
    %429 = arith.addf %428, %427 : vector<8x128xf32>
    %430 = arith.divf %428, %429 : vector<8x128xf32>
    %431 = vector.extract_strided_slice %385 {offsets = [0, 256], sizes = [8, 128], strides = [1, 1]} : vector<8x384xf32> to vector<8x128xf32>
    %432 = vector.extract_strided_slice %414 {offsets = [0, 256], sizes = [8, 128], strides = [1, 1]} : vector<8x384xf32> to vector<8x128xf32>
    %433 = arith.addf %432, %10 : vector<8x128xf32>
    %434 = arith.mulf %422, %433 : vector<8x128xf32>
    %435 = arith.addf %431, %434 : vector<8x128xf32>
    %436 = math.tanh %435 : vector<8x128xf32>
    %437 = arith.subf %377, %436 : vector<8x128xf32>
    %438 = arith.mulf %430, %437 : vector<8x128xf32>
    %439 = arith.addf %436, %438 : vector<8x128xf32>
    %c5_i32_96 = arith.constant 5 : i32
    %440 = vector.broadcast %c5_i32_96 : i32 to vector<8x1xi32>
    %441 = arith.cmpi sgt, %0, %440 : vector<8x1xi32>
    %442 = vector.shape_cast %441 : vector<8x1xi1> to vector<8x1xi1>
    %443 = vector.broadcast %442 : vector<8x1xi1> to vector<8x128xi1>
    %444 = arith.select %443, %412, %372 : vector<8x128xi1>, vector<8x128xf32>
    %c2_i32_97 = arith.constant 2 : i32
    %445 = vector.broadcast %c2_i32_97 : i32 to vector<8x1xi32>
    %446 = arith.cmpi sgt, %0, %445 : vector<8x1xi32>
    %447 = vector.shape_cast %446 : vector<8x1xi1> to vector<8x1xi1>
    %448 = vector.broadcast %447 : vector<8x1xi1> to vector<8x128xi1>
    %449 = arith.select %448, %439, %377 : vector<8x128xi1>, vector<8x128xf32>
    %c6_98 = arith.constant 6 : index
    %c0_99 = arith.constant 0 : index
    %c0_100 = arith.constant 0 : index
    %450 = vector.load %arg1[%c6_98, %c0_99, %c0_100] : memref<8x8x32xbf16, #tpu.memory_space<vmem>>, vector<1x8x32xbf16>
    %451 = vector.shape_cast %450 : vector<1x8x32xbf16> to vector<8x32xbf16>
    %cst_101 = arith.constant dense<0.000000e+00> : vector<8x384xf32>
    %452 = tpu.matmul %451, %1, %cst_101 {dimension_numbers = #tpu.dot_dimension_numbers<[1], [0], [0], [1], [0, 0, 1, 1], [], []>} : vector<8x32xbf16>, vector<32x384xbf16>, vector<8x384xf32> -> vector<8x384xf32>
    %453 = arith.addf %452, %14 : vector<8x384xf32>
    %c1_102 = arith.constant 1 : index
    %c0_103 = arith.constant 0 : index
    %c0_104 = arith.constant 0 : index
    %454 = vector.load %arg1[%c1_102, %c0_103, %c0_104] : memref<8x8x32xbf16, #tpu.memory_space<vmem>>, vector<1x8x32xbf16>
    %455 = vector.shape_cast %454 : vector<1x8x32xbf16> to vector<8x32xbf16>
    %cst_105 = arith.constant dense<0.000000e+00> : vector<8x384xf32>
    %456 = tpu.matmul %455, %2, %cst_105 {dimension_numbers = #tpu.dot_dimension_numbers<[1], [0], [0], [1], [0, 0, 1, 1], [], []>} : vector<8x32xbf16>, vector<32x384xbf16>, vector<8x384xf32> -> vector<8x384xf32>
    %457 = arith.addf %456, %17 : vector<8x384xf32>
    %458 = arith.truncf %444 : vector<8x128xf32> to vector<8x128xbf16>
    %cst_106 = arith.constant dense<0.000000e+00> : vector<8x384xf32>
    %459 = tpu.matmul %458, %3, %cst_106 {dimension_numbers = #tpu.dot_dimension_numbers<[1], [0], [0], [1], [0, 0, 1, 1], [], []>} : vector<8x128xbf16>, vector<128x384xbf16>, vector<8x384xf32> -> vector<8x384xf32>
    %460 = vector.extract_strided_slice %453 {offsets = [0, 0], sizes = [8, 128], strides = [1, 1]} : vector<8x384xf32> to vector<8x128xf32>
    %461 = vector.extract_strided_slice %459 {offsets = [0, 0], sizes = [8, 128], strides = [1, 1]} : vector<8x384xf32> to vector<8x128xf32>
    %462 = arith.addf %460, %461 : vector<8x128xf32>
    %463 = arith.negf %462 : vector<8x128xf32>
    %464 = math.exp %463 : vector<8x128xf32>
    %cst_107 = arith.constant 1.000000e+00 : f32
    %465 = vector.broadcast %cst_107 : f32 to vector<8x128xf32>
    %466 = arith.addf %465, %464 : vector<8x128xf32>
    %467 = arith.divf %465, %466 : vector<8x128xf32>
    %468 = vector.extract_strided_slice %453 {offsets = [0, 128], sizes = [8, 128], strides = [1, 1]} : vector<8x384xf32> to vector<8x128xf32>
    %469 = vector.extract_strided_slice %459 {offsets = [0, 128], sizes = [8, 128], strides = [1, 1]} : vector<8x384xf32> to vector<8x128xf32>
    %470 = arith.addf %468, %469 : vector<8x128xf32>
    %471 = arith.negf %470 : vector<8x128xf32>
    %472 = math.exp %471 : vector<8x128xf32>
    %cst_108 = arith.constant 1.000000e+00 : f32
    %473 = vector.broadcast %cst_108 : f32 to vector<8x128xf32>
    %474 = arith.addf %473, %472 : vector<8x128xf32>
    %475 = arith.divf %473, %474 : vector<8x128xf32>
    %476 = vector.extract_strided_slice %453 {offsets = [0, 256], sizes = [8, 128], strides = [1, 1]} : vector<8x384xf32> to vector<8x128xf32>
    %477 = vector.extract_strided_slice %459 {offsets = [0, 256], sizes = [8, 128], strides = [1, 1]} : vector<8x384xf32> to vector<8x128xf32>
    %478 = arith.addf %477, %7 : vector<8x128xf32>
    %479 = arith.mulf %467, %478 : vector<8x128xf32>
    %480 = arith.addf %476, %479 : vector<8x128xf32>
    %481 = math.tanh %480 : vector<8x128xf32>
    %482 = arith.subf %444, %481 : vector<8x128xf32>
    %483 = arith.mulf %475, %482 : vector<8x128xf32>
    %484 = arith.addf %481, %483 : vector<8x128xf32>
    %485 = arith.truncf %449 : vector<8x128xf32> to vector<8x128xbf16>
    %cst_109 = arith.constant dense<0.000000e+00> : vector<8x384xf32>
    %486 = tpu.matmul %485, %4, %cst_109 {dimension_numbers = #tpu.dot_dimension_numbers<[1], [0], [0], [1], [0, 0, 1, 1], [], []>} : vector<8x128xbf16>, vector<128x384xbf16>, vector<8x384xf32> -> vector<8x384xf32>
    %487 = vector.extract_strided_slice %457 {offsets = [0, 0], sizes = [8, 128], strides = [1, 1]} : vector<8x384xf32> to vector<8x128xf32>
    %488 = vector.extract_strided_slice %486 {offsets = [0, 0], sizes = [8, 128], strides = [1, 1]} : vector<8x384xf32> to vector<8x128xf32>
    %489 = arith.addf %487, %488 : vector<8x128xf32>
    %490 = arith.negf %489 : vector<8x128xf32>
    %491 = math.exp %490 : vector<8x128xf32>
    %cst_110 = arith.constant 1.000000e+00 : f32
    %492 = vector.broadcast %cst_110 : f32 to vector<8x128xf32>
    %493 = arith.addf %492, %491 : vector<8x128xf32>
    %494 = arith.divf %492, %493 : vector<8x128xf32>
    %495 = vector.extract_strided_slice %457 {offsets = [0, 128], sizes = [8, 128], strides = [1, 1]} : vector<8x384xf32> to vector<8x128xf32>
    %496 = vector.extract_strided_slice %486 {offsets = [0, 128], sizes = [8, 128], strides = [1, 1]} : vector<8x384xf32> to vector<8x128xf32>
    %497 = arith.addf %495, %496 : vector<8x128xf32>
    %498 = arith.negf %497 : vector<8x128xf32>
    %499 = math.exp %498 : vector<8x128xf32>
    %cst_111 = arith.constant 1.000000e+00 : f32
    %500 = vector.broadcast %cst_111 : f32 to vector<8x128xf32>
    %501 = arith.addf %500, %499 : vector<8x128xf32>
    %502 = arith.divf %500, %501 : vector<8x128xf32>
    %503 = vector.extract_strided_slice %457 {offsets = [0, 256], sizes = [8, 128], strides = [1, 1]} : vector<8x384xf32> to vector<8x128xf32>
    %504 = vector.extract_strided_slice %486 {offsets = [0, 256], sizes = [8, 128], strides = [1, 1]} : vector<8x384xf32> to vector<8x128xf32>
    %505 = arith.addf %504, %10 : vector<8x128xf32>
    %506 = arith.mulf %494, %505 : vector<8x128xf32>
    %507 = arith.addf %503, %506 : vector<8x128xf32>
    %508 = math.tanh %507 : vector<8x128xf32>
    %509 = arith.subf %449, %508 : vector<8x128xf32>
    %510 = arith.mulf %502, %509 : vector<8x128xf32>
    %511 = arith.addf %508, %510 : vector<8x128xf32>
    %c6_i32_112 = arith.constant 6 : i32
    %512 = vector.broadcast %c6_i32_112 : i32 to vector<8x1xi32>
    %513 = arith.cmpi sgt, %0, %512 : vector<8x1xi32>
    %514 = vector.shape_cast %513 : vector<8x1xi1> to vector<8x1xi1>
    %515 = vector.broadcast %514 : vector<8x1xi1> to vector<8x128xi1>
    %516 = arith.select %515, %484, %444 : vector<8x128xi1>, vector<8x128xf32>
    %c1_i32_113 = arith.constant 1 : i32
    %517 = vector.broadcast %c1_i32_113 : i32 to vector<8x1xi32>
    %518 = arith.cmpi sgt, %0, %517 : vector<8x1xi32>
    %519 = vector.shape_cast %518 : vector<8x1xi1> to vector<8x1xi1>
    %520 = vector.broadcast %519 : vector<8x1xi1> to vector<8x128xi1>
    %521 = arith.select %520, %511, %449 : vector<8x128xi1>, vector<8x128xf32>
    %c7_114 = arith.constant 7 : index
    %c0_115 = arith.constant 0 : index
    %c0_116 = arith.constant 0 : index
    %522 = vector.load %arg1[%c7_114, %c0_115, %c0_116] : memref<8x8x32xbf16, #tpu.memory_space<vmem>>, vector<1x8x32xbf16>
    %523 = vector.shape_cast %522 : vector<1x8x32xbf16> to vector<8x32xbf16>
    %cst_117 = arith.constant dense<0.000000e+00> : vector<8x384xf32>
    %524 = tpu.matmul %523, %1, %cst_117 {dimension_numbers = #tpu.dot_dimension_numbers<[1], [0], [0], [1], [0, 0, 1, 1], [], []>} : vector<8x32xbf16>, vector<32x384xbf16>, vector<8x384xf32> -> vector<8x384xf32>
    %525 = arith.addf %524, %14 : vector<8x384xf32>
    %c0_118 = arith.constant 0 : index
    %c0_119 = arith.constant 0 : index
    %c0_120 = arith.constant 0 : index
    %526 = vector.load %arg1[%c0_118, %c0_119, %c0_120] : memref<8x8x32xbf16, #tpu.memory_space<vmem>>, vector<1x8x32xbf16>
    %527 = vector.shape_cast %526 : vector<1x8x32xbf16> to vector<8x32xbf16>
    %cst_121 = arith.constant dense<0.000000e+00> : vector<8x384xf32>
    %528 = tpu.matmul %527, %2, %cst_121 {dimension_numbers = #tpu.dot_dimension_numbers<[1], [0], [0], [1], [0, 0, 1, 1], [], []>} : vector<8x32xbf16>, vector<32x384xbf16>, vector<8x384xf32> -> vector<8x384xf32>
    %529 = arith.addf %528, %17 : vector<8x384xf32>
    %530 = arith.truncf %516 : vector<8x128xf32> to vector<8x128xbf16>
    %cst_122 = arith.constant dense<0.000000e+00> : vector<8x384xf32>
    %531 = tpu.matmul %530, %3, %cst_122 {dimension_numbers = #tpu.dot_dimension_numbers<[1], [0], [0], [1], [0, 0, 1, 1], [], []>} : vector<8x128xbf16>, vector<128x384xbf16>, vector<8x384xf32> -> vector<8x384xf32>
    %532 = vector.extract_strided_slice %525 {offsets = [0, 0], sizes = [8, 128], strides = [1, 1]} : vector<8x384xf32> to vector<8x128xf32>
    %533 = vector.extract_strided_slice %531 {offsets = [0, 0], sizes = [8, 128], strides = [1, 1]} : vector<8x384xf32> to vector<8x128xf32>
    %534 = arith.addf %532, %533 : vector<8x128xf32>
    %535 = arith.negf %534 : vector<8x128xf32>
    %536 = math.exp %535 : vector<8x128xf32>
    %cst_123 = arith.constant 1.000000e+00 : f32
    %537 = vector.broadcast %cst_123 : f32 to vector<8x128xf32>
    %538 = arith.addf %537, %536 : vector<8x128xf32>
    %539 = arith.divf %537, %538 : vector<8x128xf32>
    %540 = vector.extract_strided_slice %525 {offsets = [0, 128], sizes = [8, 128], strides = [1, 1]} : vector<8x384xf32> to vector<8x128xf32>
    %541 = vector.extract_strided_slice %531 {offsets = [0, 128], sizes = [8, 128], strides = [1, 1]} : vector<8x384xf32> to vector<8x128xf32>
    %542 = arith.addf %540, %541 : vector<8x128xf32>
    %543 = arith.negf %542 : vector<8x128xf32>
    %544 = math.exp %543 : vector<8x128xf32>
    %cst_124 = arith.constant 1.000000e+00 : f32
    %545 = vector.broadcast %cst_124 : f32 to vector<8x128xf32>
    %546 = arith.addf %545, %544 : vector<8x128xf32>
    %547 = arith.divf %545, %546 : vector<8x128xf32>
    %548 = vector.extract_strided_slice %525 {offsets = [0, 256], sizes = [8, 128], strides = [1, 1]} : vector<8x384xf32> to vector<8x128xf32>
    %549 = vector.extract_strided_slice %531 {offsets = [0, 256], sizes = [8, 128], strides = [1, 1]} : vector<8x384xf32> to vector<8x128xf32>
    %550 = arith.addf %549, %7 : vector<8x128xf32>
    %551 = arith.mulf %539, %550 : vector<8x128xf32>
    %552 = arith.addf %548, %551 : vector<8x128xf32>
    %553 = math.tanh %552 : vector<8x128xf32>
    %554 = arith.subf %516, %553 : vector<8x128xf32>
    %555 = arith.mulf %547, %554 : vector<8x128xf32>
    %556 = arith.addf %553, %555 : vector<8x128xf32>
    %557 = arith.truncf %521 : vector<8x128xf32> to vector<8x128xbf16>
    %cst_125 = arith.constant dense<0.000000e+00> : vector<8x384xf32>
    %558 = tpu.matmul %557, %4, %cst_125 {dimension_numbers = #tpu.dot_dimension_numbers<[1], [0], [0], [1], [0, 0, 1, 1], [], []>} : vector<8x128xbf16>, vector<128x384xbf16>, vector<8x384xf32> -> vector<8x384xf32>
    %559 = vector.extract_strided_slice %529 {offsets = [0, 0], sizes = [8, 128], strides = [1, 1]} : vector<8x384xf32> to vector<8x128xf32>
    %560 = vector.extract_strided_slice %558 {offsets = [0, 0], sizes = [8, 128], strides = [1, 1]} : vector<8x384xf32> to vector<8x128xf32>
    %561 = arith.addf %559, %560 : vector<8x128xf32>
    %562 = arith.negf %561 : vector<8x128xf32>
    %563 = math.exp %562 : vector<8x128xf32>
    %cst_126 = arith.constant 1.000000e+00 : f32
    %564 = vector.broadcast %cst_126 : f32 to vector<8x128xf32>
    %565 = arith.addf %564, %563 : vector<8x128xf32>
    %566 = arith.divf %564, %565 : vector<8x128xf32>
    %567 = vector.extract_strided_slice %529 {offsets = [0, 128], sizes = [8, 128], strides = [1, 1]} : vector<8x384xf32> to vector<8x128xf32>
    %568 = vector.extract_strided_slice %558 {offsets = [0, 128], sizes = [8, 128], strides = [1, 1]} : vector<8x384xf32> to vector<8x128xf32>
    %569 = arith.addf %567, %568 : vector<8x128xf32>
    %570 = arith.negf %569 : vector<8x128xf32>
    %571 = math.exp %570 : vector<8x128xf32>
    %cst_127 = arith.constant 1.000000e+00 : f32
    %572 = vector.broadcast %cst_127 : f32 to vector<8x128xf32>
    %573 = arith.addf %572, %571 : vector<8x128xf32>
    %574 = arith.divf %572, %573 : vector<8x128xf32>
    %575 = vector.extract_strided_slice %529 {offsets = [0, 256], sizes = [8, 128], strides = [1, 1]} : vector<8x384xf32> to vector<8x128xf32>
    %576 = vector.extract_strided_slice %558 {offsets = [0, 256], sizes = [8, 128], strides = [1, 1]} : vector<8x384xf32> to vector<8x128xf32>
    %577 = arith.addf %576, %10 : vector<8x128xf32>
    %578 = arith.mulf %566, %577 : vector<8x128xf32>
    %579 = arith.addf %575, %578 : vector<8x128xf32>
    %580 = math.tanh %579 : vector<8x128xf32>
    %581 = arith.subf %521, %580 : vector<8x128xf32>
    %582 = arith.mulf %574, %581 : vector<8x128xf32>
    %583 = arith.addf %580, %582 : vector<8x128xf32>
    %c7_i32_128 = arith.constant 7 : i32
    %584 = vector.broadcast %c7_i32_128 : i32 to vector<8x1xi32>
    %585 = arith.cmpi sgt, %0, %584 : vector<8x1xi32>
    %586 = vector.shape_cast %585 : vector<8x1xi1> to vector<8x1xi1>
    %587 = vector.broadcast %586 : vector<8x1xi1> to vector<8x128xi1>
    %588 = arith.select %587, %556, %516 : vector<8x128xi1>, vector<8x128xf32>
    %c0_i32_129 = arith.constant 0 : i32
    %589 = vector.broadcast %c0_i32_129 : i32 to vector<8x1xi32>
    %590 = arith.cmpi sgt, %0, %589 : vector<8x1xi32>
    %591 = vector.shape_cast %590 : vector<8x1xi1> to vector<8x1xi1>
    %592 = vector.broadcast %591 : vector<8x1xi1> to vector<8x128xi1>
    %593 = arith.select %592, %583, %521 : vector<8x128xi1>, vector<8x128xf32>
    %594 = arith.truncf %588 : vector<8x128xf32> to vector<8x128xbf16>
    %c0_130 = arith.constant 0 : index
    %c0_131 = arith.constant 0 : index
    %c0_132 = arith.constant 0 : index
    %595 = vector.load %arg11[%c0_130, %c0_131, %c0_132] : memref<2x128x32xbf16, #tpu.memory_space<vmem>>, vector<1x128x32xbf16>
    %596 = vector.shape_cast %595 : vector<1x128x32xbf16> to vector<128x32xbf16>
    %cst_133 = arith.constant dense<0.000000e+00> : vector<8x32xf32>
    %597 = tpu.matmul %594, %596, %cst_133 {dimension_numbers = #tpu.dot_dimension_numbers<[1], [0], [0], [1], [0, 0, 1, 1], [], []>} : vector<8x128xbf16>, vector<128x32xbf16>, vector<8x32xf32> -> vector<8x32xf32>
    %598 = arith.truncf %593 : vector<8x128xf32> to vector<8x128xbf16>
    %c1_134 = arith.constant 1 : index
    %c0_135 = arith.constant 0 : index
    %c0_136 = arith.constant 0 : index
    %599 = vector.load %arg11[%c1_134, %c0_135, %c0_136] : memref<2x128x32xbf16, #tpu.memory_space<vmem>>, vector<1x128x32xbf16>
    %600 = vector.shape_cast %599 : vector<1x128x32xbf16> to vector<128x32xbf16>
    %cst_137 = arith.constant dense<0.000000e+00> : vector<8x32xf32>
    %601 = tpu.matmul %598, %600, %cst_137 {dimension_numbers = #tpu.dot_dimension_numbers<[1], [0], [0], [1], [0, 0, 1, 1], [], []>} : vector<8x128xbf16>, vector<128x32xbf16>, vector<8x32xf32> -> vector<8x32xf32>
    %602 = arith.addf %597, %601 : vector<8x32xf32>
    %c0_138 = arith.constant 0 : index
    %c0_139 = arith.constant 0 : index
    %603 = vector.load %arg12[%c0_138, %c0_139] : memref<1x32xf32, #tpu.memory_space<vmem>>, vector<1x32xf32>
    %604 = vector.broadcast %603 : vector<1x32xf32> to vector<8x32xf32>
    %605 = arith.addf %602, %604 : vector<8x32xf32>
    %cst_140 = arith.constant 0.000000e+00 : f32
    %606 = vector.broadcast %cst_140 : f32 to vector<8x32xf32>
    %607 = arith.cmpf oge, %605, %606 : vector<8x32xf32>
    %cst_141 = arith.constant 2.000000e-01 : f32
    %608 = vector.broadcast %cst_141 : f32 to vector<8x32xf32>
    %609 = arith.mulf %608, %605 : vector<8x32xf32>
    %610 = arith.select %607, %605, %609 : vector<8x32xi1>, vector<8x32xf32>
    %c0_142 = arith.constant 0 : index
    %c0_143 = arith.constant 0 : index
    %611 = vector.load %arg13[%c0_142, %c0_143] : memref<8x32xf32, #tpu.memory_space<vmem>>, vector<8x32xf32>
    tpu.vector_store %arg13[%c0_142, %c0_143], %610 {strides = array<i32>} : memref<8x32xf32, #tpu.memory_space<vmem>>, vector<8x32xf32>,
    return
  }
  func.func @transform_0(%arg0: i32) -> (i32, i32, i32) {
    %c0_i32 = arith.constant 0 : i32
    %c0_i32_0 = arith.constant 0 : i32
    %c0_i32_1 = arith.constant 0 : i32
    return %c0_i32, %arg0, %c0_i32_0 : i32, i32, i32
  }
  func.func @transform_1(%arg0: i32) -> (i32, i32) {
    %c0_i32 = arith.constant 0 : i32
    %c0_i32_0 = arith.constant 0 : i32
    return %arg0, %c0_i32 : i32, i32
  }
  func.func @transform_2(%arg0: i32) -> (i32, i32) {
    %c0_i32 = arith.constant 0 : i32
    %c0_i32_0 = arith.constant 0 : i32
    %c0_i32_1 = arith.constant 0 : i32
    return %c0_i32, %c0_i32_0 : i32, i32
  }
  func.func @transform_3(%arg0: i32) -> (i32, i32) {
    %c0_i32 = arith.constant 0 : i32
    %c0_i32_0 = arith.constant 0 : i32
    %c0_i32_1 = arith.constant 0 : i32
    return %c0_i32, %c0_i32_0 : i32, i32
  }
  func.func @transform_4(%arg0: i32) -> (i32, i32) {
    %c0_i32 = arith.constant 0 : i32
    %c0_i32_0 = arith.constant 0 : i32
    %c0_i32_1 = arith.constant 0 : i32
    return %c0_i32, %c0_i32_0 : i32, i32
  }
  func.func @transform_5(%arg0: i32) -> (i32, i32) {
    %c0_i32 = arith.constant 0 : i32
    %c0_i32_0 = arith.constant 0 : i32
    %c0_i32_1 = arith.constant 0 : i32
    return %c0_i32, %c0_i32_0 : i32, i32
  }
  func.func @transform_6(%arg0: i32) -> (i32, i32) {
    %c0_i32 = arith.constant 0 : i32
    %c0_i32_0 = arith.constant 0 : i32
    %c0_i32_1 = arith.constant 0 : i32
    return %c0_i32, %c0_i32_0 : i32, i32
  }
  func.func @transform_7(%arg0: i32) -> (i32, i32) {
    %c0_i32 = arith.constant 0 : i32
    %c0_i32_0 = arith.constant 0 : i32
    %c0_i32_1 = arith.constant 0 : i32
    return %c0_i32, %c0_i32_0 : i32, i32
  }
  func.func @transform_8(%arg0: i32) -> (i32, i32) {
    %c0_i32 = arith.constant 0 : i32
    %c0_i32_0 = arith.constant 0 : i32
    %c0_i32_1 = arith.constant 0 : i32
    return %c0_i32, %c0_i32_0 : i32, i32
  }
  func.func @transform_9(%arg0: i32) -> (i32, i32) {
    %c0_i32 = arith.constant 0 : i32
    %c0_i32_0 = arith.constant 0 : i32
    %c0_i32_1 = arith.constant 0 : i32
    return %c0_i32, %c0_i32_0 : i32, i32
  }
  func.func @transform_10(%arg0: i32) -> (i32, i32, i32) {
    %c0_i32 = arith.constant 0 : i32
    %c0_i32_0 = arith.constant 0 : i32
    %c0_i32_1 = arith.constant 0 : i32
    %c0_i32_2 = arith.constant 0 : i32
    return %c0_i32, %c0_i32_0, %c0_i32_1 : i32, i32, i32
  }
  func.func @transform_11(%arg0: i32) -> (i32, i32) {
    %c0_i32 = arith.constant 0 : i32
    %c0_i32_0 = arith.constant 0 : i32
    %c0_i32_1 = arith.constant 0 : i32
    return %c0_i32, %c0_i32_0 : i32, i32
  }
  func.func @transform_12(%arg0: i32) -> (i32, i32) {
    %c0_i32 = arith.constant 0 : i32
    %c0_i32_0 = arith.constant 0 : i32
    return %arg0, %c0_i32 : i32, i32
  }
}

</mosaic_0001>

<llo_original>
// kernel: tpu_custom_call.1
$region0: #{tpu_custom_call.1}
  #allocation0 [shape = 'u32[]', space=smem, size = 0x4, offset = 0x4, fixed_abs, tag = 'smem constant byte address 0x4 - core index']
  #allocation1 [shape = 'u32[144,128]{1,0:T(1,128)}', space=vmem, size = 0x12000, scoped, tag = 'internal scratch']
  %s0 = inlined_call_operand.hbm [shape: bf16[8,16,32], index: 0, kind: input, shape index: {}]
  %s1 = inlined_call_operand.vmem [shape: s32[16,1], index: 1, kind: input, shape index: {}]
  %s2 = inlined_call_operand.hbm [shape: bf16[32,384], index: 2, kind: input, shape index: {}]
  %s3 = inlined_call_operand.hbm [shape: bf16[128,384], index: 3, kind: input, shape index: {}]
  %s4 = inlined_call_operand.vmem [shape: f32[1,384], index: 4, kind: input, shape index: {}]
  %s5 = inlined_call_operand.vmem [shape: f32[1,128], index: 5, kind: input, shape index: {}]
  %s6 = inlined_call_operand.hbm [shape: bf16[32,384], index: 6, kind: input, shape index: {}]
  %s7 = inlined_call_operand.vmem [shape: bf16[128,384], index: 7, kind: input, shape index: {}]
  %s8 = inlined_call_operand.vmem [shape: f32[1,384], index: 8, kind: input, shape index: {}]
  %s9 = inlined_call_operand.vmem [shape: f32[1,128], index: 9, kind: input, shape index: {}]
  %s10 = inlined_call_operand.vmem [shape: bf16[2,128,32], index: 10, kind: input, shape index: {}]
  %s11 = inlined_call_operand.vmem [shape: f32[1,32], index: 11, kind: input, shape index: {}]
  %s12 = inlined_call_operand.hbm [shape: f32[16,32], index: 12, kind: output, shape index: {}]
  %s13 = sld [smem:[#allocation0]]
  $region97: #{tpu_custom_call.1} parent=0
    _
  %s15 = ssub.s32 1, %s13
  %s16 = scalar_select 0, %s15, %s13
  $region1: #{tpu_custom_call.1} parent=0
    #allocation2 [shape = 'u8[32768]{0}', space=vmem, size = 0x8000, scoped, tag = 'input window, operand 0']
    #allocation3 [shape = 's32[2]{0}', space=sflag, size = 0x8, scoped, tag = 'scoped memory for tpu_custom_call.1']
    #allocation4 [shape = 's32[2]{0}', space=sflag, size = 0x8, scoped, tag = 'scoped memory for tpu_custom_call.1']
    #allocation5 [shape = 'u8[24576]{0}', space=vmem, size = 0x6000, scoped, tag = 'input window, operand 2, single buffered']
    #allocation6 [shape = 's32[1]{0}', space=sflag, size = 0x4, scoped, tag = 'scoped memory for tpu_custom_call.1']
    #allocation7 [shape = 'u8[98304]{0}', space=vmem, size = 0x18000, scoped, tag = 'input window, operand 3, single buffered']
    #allocation8 [shape = 'u8[24576]{0}', space=vmem, size = 0x6000, scoped, tag = 'input window, operand 6, single buffered']
    #allocation9 [shape = 's32[1]{0}', space=sflag, size = 0x4, scoped, tag = 'scoped memory for tpu_custom_call.1']
    #allocation10 [shape = 'u8[8192]{0}', space=vmem, size = 0x2000, scoped, tag = 'output window, operand 0']
    %17 = vsyncpa [#allocation3], 0
    %s18 = scalar_lea.sflag [#allocation3], 1
    %19 = vsyncpa %s18, 0
    %20 = vsyncpa [#allocation6], 0
    %21 = vsyncpa [#allocation9], 0
    %22 = vsyncpa [#allocation4], 0
    %s23 = scalar_lea.sflag [#allocation4], 1
    %24 = vsyncpa %s23, 0
    loop: start=0, step=1, limit=4
    $region2: #{tpu_custom_call.1} parent=1 // loop_pre_header
      _
    $region3: #{tpu_custom_call.1} parent=1 // loop_header
      %s26 = sphi 0, %s30
      %p27 = scmp.ge.s32.totalorder %s26, 4
      %s36 = sphi 0, %s38
      %s39 = sphi 0, %s36
      %s40 = sphi 0, %s39
      %s56 = sphi 0, %s40
      %s62 = sphi 0, %s64
      %s65 = sphi 0, %s62
      %s66 = sphi 0, %s65
      %s82 = sphi 0, %s66
      %s86 = sphi 0, %s86
      %s88 = sphi 0, %s86
      %s89 = sphi 0, %s88
      %s103 = sphi 0, %s89
      %s107 = sphi 0, %s107
      %s109 = sphi 0, %s107
      %s110 = sphi 0, %s109
      %s124 = sphi 0, %s110
      %s128 = sphi 0, %s128
      %s130 = sphi 0, %s128
      %s131 = sphi 0, %s130
      %s145 = sphi 0, %s131
      %s149 = sphi 0, %s149
      %s151 = sphi 0, %s149
      %s152 = sphi 0, %s151
      %s166 = sphi 0, %s152
      %s170 = sphi 0, %s170
      %s172 = sphi 0, %s170
      %s173 = sphi 0, %s172
      %s187 = sphi 0, %s173
      %s191 = sphi 0, %s191
      %s193 = sphi 0, %s191
      %s194 = sphi 0, %s193
      %s208 = sphi 0, %s194
      %s212 = sphi 0, %s212
      %s214 = sphi 0, %s212
      %s215 = sphi 0, %s214
      %s229 = sphi 0, %s215
      %s233 = sphi 0, %s233
      %s235 = sphi 0, %s233
      %s236 = sphi 0, %s235
      %s250 = sphi 0, %s236
      %s254 = sphi 0, %s254
      %s256 = sphi 0, %s254
      %s257 = sphi 0, %s256
      %s271 = sphi 0, %s257
      %s275 = sphi 0, %s275
      %s277 = sphi 0, %s275
      %s278 = sphi 0, %s277
      %s292 = sphi 0, %s278
      %s298 = sphi 0, %s300
      %s301 = sphi 0, %s298
      %s302 = sphi 0, %s301
      %s318 = sphi 0, %s302
    $region4: #{tpu_custom_call.1} parent=1 // loop_header_branch
      %29 = sbr.rel (%p27) target = $region8
    $region5: #{tpu_custom_call.1} parent=1 // loop_body
      %s31 = ssub.s32 %s26, 1
      %s32 = ssub.s32 %s26, 2
      %s33 = sadd.s32 %s26, 1
      %s34 = ssub.s32 %s26, %s33
      %p35 = scmp.eq.s32.totalorder %s34, 0
      %s37 = sadd.s32 %s36, 1
      %s38 = scalar_select %p35, %s36, %s37
      %p41 = pneg %p35
      %p42 = scmp.eq.s32.totalorder %s26, 1
      %p43 = por %p41, %p42
      %p44 = scmp.ne.s32.totalorder %s36, %s39
      %p45 = scmp.eq.s32.totalorder %s26, 0
      %p46 = por %p44, %p45
      %p47 = scmp.ne.s32.totalorder %s36, %s39
      %p48 = scmp.eq.s32.totalorder %s31, 1
      %p49 = por %p47, %p48
      %p50 = scmp.ne.s32.totalorder %s39, %s40
      %p51 = scmp.eq.s32.totalorder %s31, 0
      %p52 = por %p50, %p51
      %p53 = scmp.ne.s32.totalorder %s39, %s40
      %p54 = scmp.eq.s32.totalorder %s32, 1
      %p55 = por %p53, %p54
      %p57 = scmp.ne.s32.totalorder %s40, %s56
      %p58 = scmp.eq.s32.totalorder %s32, 0
      %p59 = por %p57, %p58
      %s60 = ssub.s32 %s26, %s33
      %p61 = scmp.eq.s32.totalorder %s60, 0
      %s63 = sadd.s32 %s62, 1
      %s64 = scalar_select %p61, %s62, %s63
      %p67 = pneg %p61
      %p68 = scmp.eq.s32.totalorder %s26, 1
      %p69 = por %p67, %p68
      %p70 = scmp.ne.s32.totalorder %s62, %s65
      %p71 = scmp.eq.s32.totalorder %s26, 0
      %p72 = por %p70, %p71
      %p73 = scmp.ne.s32.totalorder %s62, %s65
      %p74 = scmp.eq.s32.totalorder %s31, 1
      %p75 = por %p73, %p74
      %p76 = scmp.ne.s32.totalorder %s65, %s66
      %p77 = scmp.eq.s32.totalorder %s31, 0
      %p78 = por %p76, %p77
      %p79 = scmp.ne.s32.totalorder %s65, %s66
      %p80 = scmp.eq.s32.totalorder %s32, 1
      %p81 = por %p79, %p80
      %p83 = scmp.ne.s32.totalorder %s66, %s82
      %p84 = scmp.eq.s32.totalorder %s32, 0
      %p85 = por %p83, %p84
      %s87 = sadd.s32 %s86, 1
      %p90 = scmp.eq.s32.totalorder %s26, 1
      %p91 = scmp.ne.s32.totalorder %s86, %s88
      %p92 = scmp.eq.s32.totalorder %s26, 0
      %p93 = por %p91, %p92
      %p94 = scmp.ne.s32.totalorder %s86, %s88
      %p95 = scmp.eq.s32.totalorder %s31, 1
      %p96 = por %p94, %p95
      %p97 = scmp.ne.s32.totalorder %s88, %s89
      %p98 = scmp.eq.s32.totalorder %s31, 0
      %p99 = por %p97, %p98
      %p100 = scmp.ne.s32.totalorder %s88, %s89
      %p101 = scmp.eq.s32.totalorder %s32, 1
      %p102 = por %p100, %p101
      %p104 = scmp.ne.s32.totalorder %s89, %s103
      %p105 = scmp.eq.s32.totalorder %s32, 0
      %p106 = por %p104, %p105
      %s108 = sadd.s32 %s107, 1
      %p111 = scmp.eq.s32.totalorder %s26, 1
      %p112 = scmp.ne.s32.totalorder %s107, %s109
      %p113 = scmp.eq.s32.totalorder %s26, 0
      %p114 = por %p112, %p113
      %p115 = scmp.ne.s32.totalorder %s107, %s109
      %p116 = scmp.eq.s32.totalorder %s31, 1
      %p117 = por %p115, %p116
      %p118 = scmp.ne.s32.totalorder %s109, %s110
      %p119 = scmp.eq.s32.totalorder %s31, 0
      %p120 = por %p118, %p119
      %p121 = scmp.ne.s32.totalorder %s109, %s110
      %p122 = scmp.eq.s32.totalorder %s32, 1
      %p123 = por %p121, %p122
      %p125 = scmp.ne.s32.totalorder %s110, %s124
      %p126 = scmp.eq.s32.totalorder %s32, 0
      %p127 = por %p125, %p126
      %s129 = sadd.s32 %s128, 1
      %p132 = scmp.eq.s32.totalorder %s26, 1
      %p133 = scmp.ne.s32.totalorder %s128, %s130
      %p134 = scmp.eq.s32.totalorder %s26, 0
      %p135 = por %p133, %p134
      %p136 = scmp.ne.s32.totalorder %s128, %s130
      %p137 = scmp.eq.s32.totalorder %s31, 1
      %p138 = por %p136, %p137
      %p139 = scmp.ne.s32.totalorder %s130, %s131
      %p140 = scmp.eq.s32.totalorder %s31, 0
      %p141 = por %p139, %p140
      %p142 = scmp.ne.s32.totalorder %s130, %s131
      %p143 = scmp.eq.s32.totalorder %s32, 1
      %p144 = por %p142, %p143
      %p146 = scmp.ne.s32.totalorder %s131, %s145
      %p147 = scmp.eq.s32.totalorder %s32, 0
      %p148 = por %p146, %p147
      %s150 = sadd.s32 %s149, 1
      %p153 = scmp.eq.s32.totalorder %s26, 1
      %p154 = scmp.ne.s32.totalorder %s149, %s151
      %p155 = scmp.eq.s32.totalorder %s26, 0
      %p156 = por %p154, %p155
      %p157 = scmp.ne.s32.totalorder %s149, %s151
      %p158 = scmp.eq.s32.totalorder %s31, 1
      %p159 = por %p157, %p158
      %p160 = scmp.ne.s32.totalorder %s151, %s152
      %p161 = scmp.eq.s32.totalorder %s31, 0
      %p162 = por %p160, %p161
      %p163 = scmp.ne.s32.totalorder %s151, %s152
      %p164 = scmp.eq.s32.totalorder %s32, 1
      %p165 = por %p163, %p164
      %p167 = scmp.ne.s32.totalorder %s152, %s166
      %p168 = scmp.eq.s32.totalorder %s32, 0
      %p169 = por %p167, %p168
      %s171 = sadd.s32 %s170, 1
      %p174 = scmp.eq.s32.totalorder %s26, 1
      %p175 = scmp.ne.s32.totalorder %s170, %s172
      %p176 = scmp.eq.s32.totalorder %s26, 0
      %p177 = por %p175, %p176
      %p178 = scmp.ne.s32.totalorder %s170, %s172
      %p179 = scmp.eq.s32.totalorder %s31, 1
      %p180 = por %p178, %p179
      %p181 = scmp.ne.s32.totalorder %s172, %s173
      %p182 = scmp.eq.s32.totalorder %s31, 0
      %p183 = por %p181, %p182
      %p184 = scmp.ne.s32.totalorder %s172, %s173
      %p185 = scmp.eq.s32.totalorder %s32, 1
      %p186 = por %p184, %p185
      %p188 = scmp.ne.s32.totalorder %s173, %s187
      %p189 = scmp.eq.s32.totalorder %s32, 0
      %p190 = por %p188, %p189
      %s192 = sadd.s32 %s191, 1
      %p195 = scmp.eq.s32.totalorder %s26, 1
      %p196 = scmp.ne.s32.totalorder %s191, %s193
      %p197 = scmp.eq.s32.totalorder %s26, 0
      %p198 = por %p196, %p197
      %p199 = scmp.ne.s32.totalorder %s191, %s193
      %p200 = scmp.eq.s32.totalorder %s31, 1
      %p201 = por %p199, %p200
      %p202 = scmp.ne.s32.totalorder %s193, %s194
      %p203 = scmp.eq.s32.totalorder %s31, 0
      %p204 = por %p202, %p203
      %p205 = scmp.ne.s32.totalorder %s193, %s194
      %p206 = scmp.eq.s32.totalorder %s32, 1
      %p207 = por %p205, %p206
      %p209 = scmp.ne.s32.totalorder %s194, %s208
      %p210 = scmp.eq.s32.totalorder %s32, 0
      %p211 = por %p209, %p210
      %s213 = sadd.s32 %s212, 1
      %p216 = scmp.eq.s32.totalorder %s26, 1
      %p217 = scmp.ne.s32.totalorder %s212, %s214
      %p218 = scmp.eq.s32.totalorder %s26, 0
      %p219 = por %p217, %p218
      %p220 = scmp.ne.s32.totalorder %s212, %s214
      %p221 = scmp.eq.s32.totalorder %s31, 1
      %p222 = por %p220, %p221
      %p223 = scmp.ne.s32.totalorder %s214, %s215
      %p224 = scmp.eq.s32.totalorder %s31, 0
      %p225 = por %p223, %p224
      %p226 = scmp.ne.s32.totalorder %s214, %s215
      %p227 = scmp.eq.s32.totalorder %s32, 1
      %p228 = por %p226, %p227
      %p230 = scmp.ne.s32.totalorder %s215, %s229
      %p231 = scmp.eq.s32.totalorder %s32, 0
      %p232 = por %p230, %p231
      %s234 = sadd.s32 %s233, 1
      %p237 = scmp.eq.s32.totalorder %s26, 1
      %p238 = scmp.ne.s32.totalorder %s233, %s235
      %p239 = scmp.eq.s32.totalorder %s26, 0
      %p240 = por %p238, %p239
      %p241 = scmp.ne.s32.totalorder %s233, %s235
      %p242 = scmp.eq.s32.totalorder %s31, 1
      %p243 = por %p241, %p242
      %p244 = scmp.ne.s32.totalorder %s235, %s236
      %p245 = scmp.eq.s32.totalorder %s31, 0
      %p246 = por %p244, %p245
      %p247 = scmp.ne.s32.totalorder %s235, %s236
      %p248 = scmp.eq.s32.totalorder %s32, 1
      %p249 = por %p247, %p248
      %p251 = scmp.ne.s32.totalorder %s236, %s250
      %p252 = scmp.eq.s32.totalorder %s32, 0
      %p253 = por %p251, %p252
      %s255 = sadd.s32 %s254, 1
      %p258 = scmp.eq.s32.totalorder %s26, 1
      %p259 = scmp.ne.s32.totalorder %s254, %s256
      %p260 = scmp.eq.s32.totalorder %s26, 0
      %p261 = por %p259, %p260
      %p262 = scmp.ne.s32.totalorder %s254, %s256
      %p263 = scmp.eq.s32.totalorder %s31, 1
      %p264 = por %p262, %p263
      %p265 = scmp.ne.s32.totalorder %s256, %s257
      %p266 = scmp.eq.s32.totalorder %s31, 0
      %p267 = por %p265, %p266
      %p268 = scmp.ne.s32.totalorder %s256, %s257
      %p269 = scmp.eq.s32.totalorder %s32, 1
      %p270 = por %p268, %p269
      %p272 = scmp.ne.s32.totalorder %s257, %s271
      %p273 = scmp.eq.s32.totalorder %s32, 0
      %p274 = por %p272, %p273
      %s276 = sadd.s32 %s275, 1
      %p279 = scmp.eq.s32.totalorder %s26, 1
      %p280 = scmp.ne.s32.totalorder %s275, %s277
      %p281 = scmp.eq.s32.totalorder %s26, 0
      %p282 = por %p280, %p281
      %p283 = scmp.ne.s32.totalorder %s275, %s277
      %p284 = scmp.eq.s32.totalorder %s31, 1
      %p285 = por %p283, %p284
      %p286 = scmp.ne.s32.totalorder %s277, %s278
      %p287 = scmp.eq.s32.totalorder %s31, 0
      %p288 = por %p286, %p287
      %p289 = scmp.ne.s32.totalorder %s277, %s278
      %p290 = scmp.eq.s32.totalorder %s32, 1
      %p291 = por %p289, %p290
      %p293 = scmp.ne.s32.totalorder %s278, %s292
      %p294 = scmp.eq.s32.totalorder %s32, 0
      %p295 = por %p293, %p294
      %s296 = ssub.s32 %s26, %s33
      %p297 = scmp.eq.s32.totalorder %s296, 0
      %s299 = sadd.s32 %s298, 1
      %s300 = scalar_select %p297, %s298, %s299
      %p303 = pneg %p297
      %p304 = scmp.eq.s32.totalorder %s26, 1
      %p305 = por %p303, %p304
      %p306 = scmp.ne.s32.totalorder %s298, %s301
      %p307 = scmp.eq.s32.totalorder %s26, 0
      %p308 = por %p306, %p307
      %p309 = scmp.ne.s32.totalorder %s298, %s301
      %p310 = scmp.eq.s32.totalorder %s31, 1
      %p311 = por %p309, %p310
      %p312 = scmp.ne.s32.totalorder %s301, %s302
      %p313 = scmp.eq.s32.totalorder %s31, 0
      %p314 = por %p312, %p313
      %p315 = scmp.ne.s32.totalorder %s301, %s302
      %p316 = scmp.eq.s32.totalorder %s32, 1
      %p317 = por %p315, %p316
      %p319 = scmp.ne.s32.totalorder %s302, %s318
      %p320 = scmp.eq.s32.totalorder %s32, 0
      %p321 = por %p319, %p320
      %p322 = scmp.le.s32.totalorder 1, %s26
      %p323 = scmp.lt.s32.totalorder %s26, 3
      %p324 = pnand %p322, %p323
      %p325 = pneg %p324
      // Predicated region
      $region9: #{tpu_custom_call.1} parent=5 // pred_check
        _
      $region10: #{tpu_custom_call.1} parent=5 // pred_check_branch
        %327 = sbr.rel (%p324) target = $region12
      $region11: #{tpu_custom_call.1} parent=5 // pred_region
        %s328 = ssub.s32 %s26, 1
        // Predicated region
        $region13: #{tpu_custom_call.1} parent=11 // pred_check
          %p329 = pneg %p99
        $region14: #{tpu_custom_call.1} parent=11 // pred_check_branch
          %331 = sbr.rel (%p329) target = $region16
        $region15: #{tpu_custom_call.1} parent=11 // pred_region
          %s333 = ssub.s32 768, 768
          %334 = vsyncadd [#allocation6], %s333
          %s335 = sshll.u32 [#allocation5], 4
          %s336 = int_to_ptr.vmem [resolvable:$true] %s335
          %341 = dma.hbm_to_vmem [thread:$0]  %s2, 768, %s336, [#allocation6], 192, 192, 12
        $region16: #{tpu_custom_call.1} parent=11 // pred_fallthru
          _
        // Predicated region
        $region17: #{tpu_custom_call.1} parent=11 // pred_check
          %p342 = pneg %p120
        $region18: #{tpu_custom_call.1} parent=11 // pred_check_branch
          %344 = sbr.rel (%p342) target = $region20
        $region19: #{tpu_custom_call.1} parent=11 // pred_region
          %s346 = ssub.s32 3072, 3072
          %347 = vsyncadd [#allocation6], %s346
          %s348 = sshll.u32 [#allocation7], 4
          %s349 = int_to_ptr.vmem [resolvable:$true] %s348
          %354 = dma.hbm_to_vmem [thread:$0]  %s3, 3072, %s349, [#allocation6], 192, 192, 12
        $region20: #{tpu_custom_call.1} parent=11 // pred_fallthru
          _
        // Predicated region
        $region21: #{tpu_custom_call.1} parent=11 // pred_check
          %p355 = pneg %p141
        $region22: #{tpu_custom_call.1} parent=11 // pred_check_branch
          %357 = sbr.rel (%p355) target = $region24
        $region23: #{tpu_custom_call.1} parent=11 // pred_region
          _
        $region24: #{tpu_custom_call.1} parent=11 // pred_fallthru
          _
        // Predicated region
        $region25: #{tpu_custom_call.1} parent=11 // pred_check
          %p358 = pneg %p162
        $region26: #{tpu_custom_call.1} parent=11 // pred_check_branch
          %360 = sbr.rel (%p358) target = $region28
        $region27: #{tpu_custom_call.1} parent=11 // pred_region
          _
        $region28: #{tpu_custom_call.1} parent=11 // pred_fallthru
          _
        // Predicated region
        $region29: #{tpu_custom_call.1} parent=11 // pred_check
          %p361 = pneg %p183
        $region30: #{tpu_custom_call.1} parent=11 // pred_check_branch
          %363 = sbr.rel (%p361) target = $region32
        $region31: #{tpu_custom_call.1} parent=11 // pred_region
          %s365 = ssub.s32 768, 768
          %366 = vsyncadd [#allocation9], %s365
          %s367 = sshll.u32 [#allocation8], 4
          %s368 = int_to_ptr.vmem [resolvable:$true] %s367
          %373 = dma.hbm_to_vmem [thread:$0]  %s6, 768, %s368, [#allocation9], 192, 192, 12
        $region32: #{tpu_custom_call.1} parent=11 // pred_fallthru
          _
        // Predicated region
        $region33: #{tpu_custom_call.1} parent=11 // pred_check
          %p374 = pneg %p204
        $region34: #{tpu_custom_call.1} parent=11 // pred_check_branch
          %376 = sbr.rel (%p374) target = $region36
        $region35: #{tpu_custom_call.1} parent=11 // pred_region
          _
        $region36: #{tpu_custom_call.1} parent=11 // pred_fallthru
          _
        // Predicated region
        $region37: #{tpu_custom_call.1} parent=11 // pred_check
          %p377 = pneg %p225
        $region38: #{tpu_custom_call.1} parent=11 // pred_check_branch
          %379 = sbr.rel (%p377) target = $region40
        $region39: #{tpu_custom_call.1} parent=11 // pred_region
          _
        $region40: #{tpu_custom_call.1} parent=11 // pred_fallthru
          _
        // Predicated region
        $region41: #{tpu_custom_call.1} parent=11 // pred_check
          %p380 = pneg %p246
        $region42: #{tpu_custom_call.1} parent=11 // pred_check_branch
          %382 = sbr.rel (%p380) target = $region44
        $region43: #{tpu_custom_call.1} parent=11 // pred_region
          _
        $region44: #{tpu_custom_call.1} parent=11 // pred_fallthru
          _
        // Predicated region
        $region45: #{tpu_custom_call.1} parent=11 // pred_check
          %p383 = pneg %p267
        $region46: #{tpu_custom_call.1} parent=11 // pred_check_branch
          %385 = sbr.rel (%p383) target = $region48
        $region47: #{tpu_custom_call.1} parent=11 // pred_region
          _
        $region48: #{tpu_custom_call.1} parent=11 // pred_fallthru
          _
        // Predicated region
        $region49: #{tpu_custom_call.1} parent=11 // pred_check
          %p386 = pneg %p288
        $region50: #{tpu_custom_call.1} parent=11 // pred_check_branch
          %388 = sbr.rel (%p386) target = $region52
        $region51: #{tpu_custom_call.1} parent=11 // pred_region
          _
        $region52: #{tpu_custom_call.1} parent=11 // pred_fallthru
          _
      $region12: #{tpu_custom_call.1} parent=5 // pred_fallthru
        _
      %p389 = scmp.lt.s32.totalorder %s26, 2
      // Predicated region
      $region53: #{tpu_custom_call.1} parent=5 // pred_check
        %p390 = pneg %p389
      $region54: #{tpu_custom_call.1} parent=5 // pred_check_branch
        %392 = sbr.rel (%p390) target = $region56
      $region55: #{tpu_custom_call.1} parent=5 // pred_region
        // Predicated region
        $region57: #{tpu_custom_call.1} parent=55 // pred_check
          %p393 = pneg %p46
        $region58: #{tpu_custom_call.1} parent=55 // pred_check_branch
          %395 = sbr.rel (%p393) target = $region60
        $region59: #{tpu_custom_call.1} parent=55 // pred_region
          %s396 = sand.u32 %s36, 1
          %s397 = scalar_lea.sflag [#allocation3], %s396
          %s398 = sand.u32 %s36, 1
          %s399 = smul.addr %s398, 32
          %s400 = scalar_lea.vmem [#allocation2], %s399
          %s402 = ssub.s32 512, 512
          %403 = vsyncadd %s397, %s402
          %s404 = smul.addr %s26, 64
          %s405 = scalar_lea.hbm %s0, %s404
          %s406 = sshll.u32 %s400, 4
          %s407 = int_to_ptr.vmem [resolvable:$true] %s406
          %412 = dma.hbm_to_vmem [thread:$0]  %s405, 512, %s407, %s397, 128, 64, 4
        $region60: #{tpu_custom_call.1} parent=55 // pred_fallthru
          _
        // Predicated region
        $region61: #{tpu_custom_call.1} parent=55 // pred_check
          %p413 = pneg %p72
        $region62: #{tpu_custom_call.1} parent=55 // pred_check_branch
          %415 = sbr.rel (%p413) target = $region64
        $region63: #{tpu_custom_call.1} parent=55 // pred_region
          %p416 = scmp.lt.s32.totalorder %s26, 1
          %s417 = scalar_select %p416, %s26, 1
          %s418 = smul.addr %s417, 8
          %s419 = scalar_lea.vmem %s1, %s418
        $region64: #{tpu_custom_call.1} parent=55 // pred_fallthru
          _
      $region56: #{tpu_custom_call.1} parent=5 // pred_fallthru
        _
      %p420 = scmp.le.s32.totalorder 1, %s26
      %p421 = scmp.lt.s32.totalorder %s26, 3
      %p422 = pnand %p420, %p421
      %p423 = pneg %p422
      // Predicated region
      $region65: #{tpu_custom_call.1} parent=5 // pred_check
        _
      $region66: #{tpu_custom_call.1} parent=5 // pred_check_branch
        %425 = sbr.rel (%p422) target = $region68
      $region67: #{tpu_custom_call.1} parent=5 // pred_region
        %s426 = ssub.s32 %s26, 1
        %s427 = sand.u32 %s39, 1
        %s428 = scalar_lea.sflag [#allocation3], %s427
        %s429 = sand.u32 %s39, 1
        %s430 = smul.addr %s429, 32
        %s431 = scalar_lea.vmem [#allocation2], %s430
        // Predicated region
        $region69: #{tpu_custom_call.1} parent=67 // pred_check
          %p432 = pneg %p52
        $region70: #{tpu_custom_call.1} parent=67 // pred_check_branch
          %434 = sbr.rel (%p432) target = $region72
        $region71: #{tpu_custom_call.1} parent=67 // pred_region
          %435 = dma.done %s428, 512
        $region72: #{tpu_custom_call.1} parent=67 // pred_fallthru
          _
        // Predicated region
        $region73: #{tpu_custom_call.1} parent=67 // pred_check
          %p436 = pneg %p99
        $region74: #{tpu_custom_call.1} parent=67 // pred_check_branch
          %438 = sbr.rel (%p436) target = $region76
        $region75: #{tpu_custom_call.1} parent=67 // pred_region
          %439 = dma.done [#allocation6], 768
        $region76: #{tpu_custom_call.1} parent=67 // pred_fallthru
          _
        // Predicated region
        $region77: #{tpu_custom_call.1} parent=67 // pred_check
          %p440 = pneg %p120
        $region78: #{tpu_custom_call.1} parent=67 // pred_check_branch
          %442 = sbr.rel (%p440) target = $region80
        $region79: #{tpu_custom_call.1} parent=67 // pred_region
          %443 = dma.done [#allocation6], 3072
        $region80: #{tpu_custom_call.1} parent=67 // pred_fallthru
          _
        // Predicated region
        $region81: #{tpu_custom_call.1} parent=67 // pred_check
          %p444 = pneg %p183
        $region82: #{tpu_custom_call.1} parent=67 // pred_check_branch
          %446 = sbr.rel (%p444) target = $region84
        $region83: #{tpu_custom_call.1} parent=67 // pred_region
          %447 = dma.done [#allocation9], 768
        $region84: #{tpu_custom_call.1} parent=67 // pred_fallthru
          _
        %s448 = sand.u32 %s39, 1
        %s449 = scalar_lea.sflag [#allocation3], %s448
        %s450 = sand.u32 %s39, 1
        %s451 = smul.addr %s450, 32
        %s452 = scalar_lea.vmem [#allocation2], %s451
        %p453 = pneg %p52
        %p454 = pneg %p49
        %p455 = scmp.lt.s32.totalorder %s31, 1
        %s456 = scalar_select %p455, %s31, 1
        %s457 = smul.addr %s456, 8
        %s458 = scalar_lea.vmem %s1, %s457
        %p459 = pneg %p78
        %p460 = pneg %p75
        %p461 = pneg %p99
        %p462 = pneg %p96
        %p463 = pneg %p120
        %p464 = pneg %p117
        %p465 = pneg %p141
        %p466 = pneg %p138
        %p467 = pneg %p162
        %p468 = pneg %p159
        %p469 = pneg %p183
        %p470 = pneg %p180
        %p471 = pneg %p204
        %p472 = pneg %p201
        %p473 = pneg %p225
        %p474 = pneg %p222
        %p475 = pneg %p246
        %p476 = pneg %p243
        %p477 = pneg %p267
        %p478 = pneg %p264
        %p479 = pneg %p288
        %p480 = pneg %p285
        %p481 = pneg %p314
        %p482 = pneg %p311
        %s483 = sand.u32 %s301, 1
        %s484 = scalar_lea.sflag [#allocation4], %s483
        %s485 = sand.u32 %s301, 1
        %s486 = smul.addr %s485, 8
        %s487 = scalar_lea.vmem [#allocation10], %s486
        %p488 = scmp.lt.s32.totalorder %s31, 1
        %s489 = scalar_select %p488, %s31, 1
        %s490 = smul.addr %s489, 8
        %s491 = scalar_lea.vmem %s1, %s490
        %v493 = vld [vmem:[%s491] sm:$0xff]
        %v494 = vld [vmem:[#allocation5] sm:$0xff]
        %v495 = vld [vmem:[#allocation5 + $0x8] sm:$0xf]
        %v496 = vld [vmem:[#allocation5 + $0xc] sm:$0xff]
        %v497 = vld [vmem:[#allocation5 + $0x14] sm:$0xf]
        %v498 = vld [vmem:[#allocation5 + $0x18] sm:$0xff]
        %v499 = vld [vmem:[#allocation5 + $0x20] sm:$0xf]
        %v500 = vld [vmem:[#allocation5 + $0x24] sm:$0xff]
        %v501 = vld [vmem:[#allocation5 + $0x2c] sm:$0xf]
        %v502 = vld [vmem:[#allocation8] sm:$0xff]
        %v503 = vld [vmem:[#allocation8 + $0x8] sm:$0xf]
        %v504 = vld [vmem:[#allocation8 + $0xc] sm:$0xff]
        %v505 = vld [vmem:[#allocation8 + $0x14] sm:$0xf]
        %v506 = vld [vmem:[#allocation8 + $0x18] sm:$0xff]
        %v507 = vld [vmem:[#allocation8 + $0x20] sm:$0xf]
        %v508 = vld [vmem:[#allocation8 + $0x24] sm:$0xff]
        %v509 = vld [vmem:[#allocation8 + $0x2c] sm:$0xf]
        %v510 = vld [vmem:[#allocation7] sm:$0xff]
        %v511 = vld [vmem:[#allocation7 + $0x8] sm:$0xf]
        %v512 = vld [vmem:[#allocation7 + $0xc] sm:$0xff]
        %v513 = vld [vmem:[#allocation7 + $0x14] sm:$0xf]
        %v514 = vld [vmem:[#allocation7 + $0x18] sm:$0xff]
        %v515 = vld [vmem:[#allocation7 + $0x20] sm:$0xf]
        %v516 = vld [vmem:[#allocation7 + $0x24] sm:$0xff]
        %v517 = vld [vmem:[#allocation7 + $0x2c] sm:$0xf]
        %v518 = vld [vmem:[#allocation7 + $0x30] sm:$0xff]
        %v519 = vld [vmem:[#allocation7 + $0x38] sm:$0xf]
        %v520 = vld [vmem:[#allocation7 + $0x3c] sm:$0xff]
        %v521 = vld [vmem:[#allocation7 + $0x44] sm:$0xf]
        %v522 = vld [vmem:[#allocation7 + $0x48] sm:$0xff]
        %v523 = vld [vmem:[#allocation7 + $0x50] sm:$0xf]
        %v524 = vld [vmem:[#allocation7 + $0x54] sm:$0xff]
        %v525 = vld [vmem:[#allocation7 + $0x5c] sm:$0xf]
        %v526 = vld [vmem:[#allocation7 + $0x60] sm:$0xff]
        %v527 = vld [vmem:[#allocation7 + $0x68] sm:$0xf]
        %v528 = vld [vmem:[#allocation7 + $0x6c] sm:$0xff]
        %v529 = vld [vmem:[#allocation7 + $0x74] sm:$0xf]
        %v530 = vld [vmem:[#allocation7 + $0x78] sm:$0xff]
        %v531 = vld [vmem:[#allocation7 + $0x80] sm:$0xf]
        %v532 = vld [vmem:[#allocation7 + $0x84] sm:$0xff]
        %v533 = vld [vmem:[#allocation7 + $0x8c] sm:$0xf]
        %v534 = vld [vmem:[#allocation7 + $0x90] sm:$0xff]
        %v535 = vld [vmem:[#allocation7 + $0x98] sm:$0xf]
        %v536 = vld [vmem:[#allocation7 + $0x9c] sm:$0xff]
        %v537 = vld [vmem:[#allocation7 + $0xa4] sm:$0xf]
        %v538 = vld [vmem:[#allocation7 + $0xa8] sm:$0xff]
        %v539 = vld [vmem:[#allocation7 + $0xb0] sm:$0xf]
        %v540 = vld [vmem:[#allocation7 + $0xb4] sm:$0xff]
        %v541 = vld [vmem:[#allocation7 + $0xbc] sm:$0xf]
        %v542 = vld [vmem:[%s7] sm:$0xff]
        %v543 = vld [vmem:[%s7 + $0x8] sm:$0xf]
        %v544 = vld [vmem:[%s7 + $0xc] sm:$0xff]
        %v545 = vld [vmem:[%s7 + $0x14] sm:$0xf]
        %v546 = vld [vmem:[%s7 + $0x18] sm:$0xff]
        %v547 = vld [vmem:[%s7 + $0x20] sm:$0xf]
        %v548 = vld [vmem:[%s7 + $0x24] sm:$0xff]
        %v549 = vld [vmem:[%s7 + $0x2c] sm:$0xf]
        %v550 = vld [vmem:[%s7 + $0x30] sm:$0xff]
        %v551 = vld [vmem:[%s7 + $0x38] sm:$0xf]
        %v552 = vld [vmem:[%s7 + $0x3c] sm:$0xff]
        %v553 = vld [vmem:[%s7 + $0x44] sm:$0xf]
        %v554 = vld [vmem:[%s7 + $0x48] sm:$0xff]
        %v555 = vld [vmem:[%s7 + $0x50] sm:$0xf]
        %v556 = vld [vmem:[%s7 + $0x54] sm:$0xff]
        %v557 = vld [vmem:[%s7 + $0x5c] sm:$0xf]
        %v558 = vld [vmem:[%s7 + $0x60] sm:$0xff]
        %v559 = vld [vmem:[%s7 + $0x68] sm:$0xf]
        %v560 = vld [vmem:[%s7 + $0x6c] sm:$0xff]
        %v561 = vld [vmem:[%s7 + $0x74] sm:$0xf]
        %v562 = vld [vmem:[%s7 + $0x78] sm:$0xff]
        %v563 = vld [vmem:[%s7 + $0x80] sm:$0xf]
        %v564 = vld [vmem:[%s7 + $0x84] sm:$0xff]
        %v565 = vld [vmem:[%s7 + $0x8c] sm:$0xf]
        %v566 = vld [vmem:[%s7 + $0x90] sm:$0xff]
        %v567 = vld [vmem:[%s7 + $0x98] sm:$0xf]
        %v568 = vld [vmem:[%s7 + $0x9c] sm:$0xff]
        %v569 = vld [vmem:[%s7 + $0xa4] sm:$0xf]
        %v570 = vld [vmem:[%s7 + $0xa8] sm:$0xff]
        %v571 = vld [vmem:[%s7 + $0xb0] sm:$0xf]
        %v572 = vld [vmem:[%s7 + $0xb4] sm:$0xff]
        %v573 = vld [vmem:[%s7 + $0xbc] sm:$0xf]
        %v574 = vld [vmem:[%s5] sm:$0x1]
        %v576 = vlaneseq
        %v577 = vshrl.u32 %v576, 7
        %v578 = vsub.s32 0, %v577
        %v579 = vrot.slane %v574, %v578
        %v581 = vld [vmem:[%s9] sm:$0x1]
        %v583 = vlaneseq
        %v584 = vshrl.u32 %v583, 7
        %v585 = vsub.s32 0, %v584
        %v586 = vrot.slane %v581, %v585
        %v588 = vld [vmem:[%s4] sm:$0x7]
        %v590 = vlaneseq
        %v591 = vshrl.u32 %v590, 7
        %v592 = vsub.s32 0, %v591
        %v593 = vrot.slane %v588, %v592
        %v594 = vlaneseq
        %v595 = vshrl.u32 %v594, 7
        %v596 = vsub.s32 1, %v595
        %v597 = vrot.slane %v588, %v596
        %v598 = vlaneseq
        %v599 = vshrl.u32 %v598, 7
        %v600 = vsub.s32 2, %v599
        %v601 = vrot.slane %v588, %v600
        %v605 = vld [vmem:[%s8] sm:$0x7]
        %v607 = vlaneseq
        %v608 = vshrl.u32 %v607, 7
        %v609 = vsub.s32 0, %v608
        %v610 = vrot.slane %v605, %v609
        %v611 = vlaneseq
        %v612 = vshrl.u32 %v611, 7
        %v613 = vsub.s32 1, %v612
        %v614 = vrot.slane %v605, %v613
        %v615 = vlaneseq
        %v616 = vshrl.u32 %v615, 7
        %v617 = vsub.s32 2, %v616
        %v618 = vrot.slane %v605, %v617
        %v622 = vld [vmem:[%s431] sm:$0xf]
        %v631 = vunpack.c.l.b16 %v494
        %v632 = vunpack.c.h.b16 %v494
        %v633 = vunpack.c.l.b16 %v495
        %v634 = vunpack.c.l.b16 %v496
        %v635 = vunpack.c.h.b16 %v496
        %v636 = vunpack.c.l.b16 %v497
        %v637 = vunpack.c.l.b16 %v498
        %v638 = vunpack.c.h.b16 %v498
        %v639 = vunpack.c.l.b16 %v499
        %v640 = vunpack.c.l.b16 %v500
        %v641 = vunpack.c.h.b16 %v500
        %v642 = vunpack.c.l.b16 %v501
        %v643 = vpack.c.b16 %v634, %v631
        %v644 = vpack.c.b16 %v635, %v632
        %v645 = vpack.c.b16 %v636, %v633
        %v646 = vpack.c.b16 %v640, %v637
        %v647 = vpack.c.b16 %v641, %v638
        %v648 = vpack.c.b16 %v642, %v639
        %vm655 = vcmask 261120
        %v657 = vsel %vm655, %v622, 0
        %659 = vmatprep.subr.bf16.mxu0 %v644
        %660 = vmatpush1.bf16.msra.mxu0 %v643
        %661 = vmatprep.subr.bf16.mxu0 %v647
        %662 = vmatpush1.bf16.msra.mxu0 %v646
        %663 = vmatprep.subr.bf16.mxu0 0
        %664 = vmatpush1.bf16.msra.mxu0 0
        %665 = vmatprep.subr.bf16.mxu0 0
        %666 = vmatpush1.bf16.msra.mxu0 0
        %667 = vmatprep.subr.bf16.mxu0 0
        %668 = vmatpush1.bf16.msra.mxu0 0
        %669 = vmatprep.subr.bf16.mxu0 0
        %670 = vmatpush1.bf16.msra.mxu0 0
        %671 = vmatprep.subr.bf16.mxu0 0
        %672 = vmatpush1.bf16.msra.mxu0 0
        %673 = vmatprep.subr.bf16.mxu0 0
        %674 = vmatpush1.bf16.msra.mxu0 0
        %675 = vmatprep.subr.bf16.mxu0 0
        %676 = vmatpush1.bf16.msra.mxu0 0
        %677 = vmatprep.subr.bf16.mxu0 0
        %678 = vmatpush1.bf16.msra.mxu0 0
        %679 = vmatprep.subr.bf16.mxu0 0
        %680 = vmatpush1.bf16.msra.mxu0 0
        %681 = vmatprep.subr.bf16.mxu0 0
        %682 = vmatpush1.bf16.msra.mxu0 0
        %683 = vmatprep.subr.bf16.mxu0 0
        %684 = vmatpush1.bf16.msra.mxu0 0
        %685 = vmatprep.subr.bf16.mxu0 0
        %686 = vmatpush1.bf16.msra.mxu0 0
        %687 = vmatprep.subr.bf16.mxu0 0
        %688 = vmatpush1.bf16.msra.mxu0 0
        %689 = vmatprep.subr.bf16.mxu0 0
        %690 = vmatpush1.bf16.msra.mxu0 0
        %691 = vmatprep.mubr.bf16.mxu0 0
        %692 = vmatmul.mubr.bf16.gmra.mrb[0].mxu0 %v657
        %v693 = vpop.f32.mrb[0].mxu0
        %v694 = vadd.f32 %v593, %v693
        %v695 = vpop.f32.mrb[0].mxu0
        %v696 = vadd.f32 %v597, %v695
        %v697 = vpop.f32.mrb[0].mxu0
        %v698 = vpop.f32.mrb[0].mxu0
        %699 = vdwg.mxu0
        %700 = vmatprep.subr.bf16.mxu0 0
        %701 = vmatpush1.bf16.msra.mxu0 %v645
        %702 = vmatprep.subr.bf16.mxu0 0
        %703 = vmatpush1.bf16.msra.mxu0 %v648
        %704 = vmatprep.subr.bf16.mxu0 0
        %705 = vmatpush1.bf16.msra.mxu0 0
        %706 = vmatprep.subr.bf16.mxu0 0
        %707 = vmatpush1.bf16.msra.mxu0 0
        %708 = vmatprep.subr.bf16.mxu0 0
        %709 = vmatpush1.bf16.msra.mxu0 0
        %710 = vmatprep.subr.bf16.mxu0 0
        %711 = vmatpush1.bf16.msra.mxu0 0
        %712 = vmatprep.subr.bf16.mxu0 0
        %713 = vmatpush1.bf16.msra.mxu0 0
        %714 = vmatprep.subr.bf16.mxu0 0
        %715 = vmatpush1.bf16.msra.mxu0 0
        %716 = vmatprep.subr.bf16.mxu0 0
        %717 = vmatpush1.bf16.msra.mxu0 0
        %718 = vmatprep.subr.bf16.mxu0 0
        %719 = vmatpush1.bf16.msra.mxu0 0
        %720 = vmatprep.subr.bf16.mxu0 0
        %721 = vmatpush1.bf16.msra.mxu0 0
        %722 = vmatprep.subr.bf16.mxu0 0
        %723 = vmatpush1.bf16.msra.mxu0 0
        %724 = vmatprep.subr.bf16.mxu0 0
        %725 = vmatpush1.bf16.msra.mxu0 0
        %726 = vmatprep.subr.bf16.mxu0 0
        %727 = vmatpush1.bf16.msra.mxu0 0
        %728 = vmatprep.subr.bf16.mxu0 0
        %729 = vmatpush1.bf16.msra.mxu0 0
        %730 = vmatprep.subr.bf16.mxu0 0
        %731 = vmatpush1.bf16.msra.mxu0 0
        %732 = vmatprep.mubr.bf16.mxu0 0
        %733 = vmatmul.mubr.bf16.gmra.mrb[0].mxu0 %v657
        %v734 = vpop.f32.mrb[0].mxu0
        %v735 = vadd.f32 %v601, %v734
        %v736 = vpop.f32.mrb[0].mxu0
        %v737 = vpop.f32.mrb[0].mxu0
        %v738 = vpop.f32.mrb[0].mxu0
        %739 = vdwg.mxu0
        %s740 = scalar_lea.vmem %s431, 28 [#allocation2]
        %v741 = vld [vmem:[%s740] sm:$0xf]
        %v750 = vunpack.c.l.b16 %v502
        %v751 = vunpack.c.h.b16 %v502
        %v752 = vunpack.c.l.b16 %v503
        %v753 = vunpack.c.l.b16 %v504
        %v754 = vunpack.c.h.b16 %v504
        %v755 = vunpack.c.l.b16 %v505
        %v756 = vunpack.c.l.b16 %v506
        %v757 = vunpack.c.h.b16 %v506
        %v758 = vunpack.c.l.b16 %v507
        %v759 = vunpack.c.l.b16 %v508
        %v760 = vunpack.c.h.b16 %v508
        %v761 = vunpack.c.l.b16 %v509
        %v762 = vpack.c.b16 %v753, %v750
        %v763 = vpack.c.b16 %v754, %v751
        %v764 = vpack.c.b16 %v755, %v752
        %v765 = vpack.c.b16 %v759, %v756
        %v766 = vpack.c.b16 %v760, %v757
        %v767 = vpack.c.b16 %v761, %v758
        %v775 = vsel %vm655, %v741, 0
        %777 = vmatprep.subr.bf16.mxu0 %v763
        %778 = vmatpush1.bf16.msra.mxu0 %v762
        %779 = vmatprep.subr.bf16.mxu0 %v766
        %780 = vmatpush1.bf16.msra.mxu0 %v765
        %781 = vmatprep.subr.bf16.mxu0 0
        %782 = vmatpush1.bf16.msra.mxu0 0
        %783 = vmatprep.subr.bf16.mxu0 0
        %784 = vmatpush1.bf16.msra.mxu0 0
        %785 = vmatprep.subr.bf16.mxu0 0
        %786 = vmatpush1.bf16.msra.mxu0 0
        %787 = vmatprep.subr.bf16.mxu0 0
        %788 = vmatpush1.bf16.msra.mxu0 0
        %789 = vmatprep.subr.bf16.mxu0 0
        %790 = vmatpush1.bf16.msra.mxu0 0
        %791 = vmatprep.subr.bf16.mxu0 0
        %792 = vmatpush1.bf16.msra.mxu0 0
        %793 = vmatprep.subr.bf16.mxu0 0
        %794 = vmatpush1.bf16.msra.mxu0 0
        %795 = vmatprep.subr.bf16.mxu0 0
        %796 = vmatpush1.bf16.msra.mxu0 0
        %797 = vmatprep.subr.bf16.mxu0 0
        %798 = vmatpush1.bf16.msra.mxu0 0
        %799 = vmatprep.subr.bf16.mxu0 0
        %800 = vmatpush1.bf16.msra.mxu0 0
        %801 = vmatprep.subr.bf16.mxu0 0
        %802 = vmatpush1.bf16.msra.mxu0 0
        %803 = vmatprep.subr.bf16.mxu0 0
        %804 = vmatpush1.bf16.msra.mxu0 0
        %805 = vmatprep.subr.bf16.mxu0 0
        %806 = vmatpush1.bf16.msra.mxu0 0
        %807 = vmatprep.subr.bf16.mxu0 0
        %808 = vmatpush1.bf16.msra.mxu0 0
        %809 = vmatprep.mubr.bf16.mxu0 0
        %810 = vmatmul.mubr.bf16.gmra.mrb[0].mxu0 %v775
        %v811 = vpop.f32.mrb[0].mxu0
        %v812 = vadd.f32 %v610, %v811
        %v813 = vpop.f32.mrb[0].mxu0
        %v814 = vadd.f32 %v614, %v813
        %v815 = vpop.f32.mrb[0].mxu0
        %v816 = vpop.f32.mrb[0].mxu0
        %817 = vdwg.mxu0
        %818 = vmatprep.subr.bf16.mxu0 0
        %819 = vmatpush1.bf16.msra.mxu0 %v764
        %820 = vmatprep.subr.bf16.mxu0 0
        %821 = vmatpush1.bf16.msra.mxu0 %v767
        %822 = vmatprep.subr.bf16.mxu0 0
        %823 = vmatpush1.bf16.msra.mxu0 0
        %824 = vmatprep.subr.bf16.mxu0 0
        %825 = vmatpush1.bf16.msra.mxu0 0
        %826 = vmatprep.subr.bf16.mxu0 0
        %827 = vmatpush1.bf16.msra.mxu0 0
        %828 = vmatprep.subr.bf16.mxu0 0
        %829 = vmatpush1.bf16.msra.mxu0 0
        %830 = vmatprep.subr.bf16.mxu0 0
        %831 = vmatpush1.bf16.msra.mxu0 0
        %832 = vmatprep.subr.bf16.mxu0 0
        %833 = vmatpush1.bf16.msra.mxu0 0
        %834 = vmatprep.subr.bf16.mxu0 0
        %835 = vmatpush1.bf16.msra.mxu0 0
        %836 = vmatprep.subr.bf16.mxu0 0
        %837 = vmatpush1.bf16.msra.mxu0 0
        %838 = vmatprep.subr.bf16.mxu0 0
        %839 = vmatpush1.bf16.msra.mxu0 0
        %840 = vmatprep.subr.bf16.mxu0 0
        %841 = vmatpush1.bf16.msra.mxu0 0
        %842 = vmatprep.subr.bf16.mxu0 0
        %843 = vmatpush1.bf16.msra.mxu0 0
        %844 = vmatprep.subr.bf16.mxu0 0
        %845 = vmatpush1.bf16.msra.mxu0 0
        %846 = vmatprep.subr.bf16.mxu0 0
        %847 = vmatpush1.bf16.msra.mxu0 0
        %848 = vmatprep.subr.bf16.mxu0 0
        %849 = vmatpush1.bf16.msra.mxu0 0
        %850 = vmatprep.mubr.bf16.mxu0 0
        %851 = vmatmul.mubr.bf16.gmra.mrb[0].mxu0 %v775
        %v852 = vpop.f32.mrb[0].mxu0
        %v853 = vadd.f32 %v618, %v852
        %v854 = vpop.f32.mrb[0].mxu0
        %v855 = vpop.f32.mrb[0].mxu0
        %v856 = vpop.f32.mrb[0].mxu0
        %857 = vdwg.mxu0
        %v890 = vunpack.c.l.b16 %v510
        %v891 = vunpack.c.h.b16 %v510
        %v892 = vunpack.c.l.b16 %v511
        %v893 = vunpack.c.l.b16 %v512
        %v894 = vunpack.c.h.b16 %v512
        %v895 = vunpack.c.l.b16 %v513
        %v896 = vunpack.c.l.b16 %v514
        %v897 = vunpack.c.h.b16 %v514
        %v898 = vunpack.c.l.b16 %v515
        %v899 = vunpack.c.l.b16 %v516
        %v900 = vunpack.c.h.b16 %v516
        %v901 = vunpack.c.l.b16 %v517
        %v902 = vunpack.c.l.b16 %v518
        %v903 = vunpack.c.h.b16 %v518
        %v904 = vunpack.c.l.b16 %v519
        %v905 = vunpack.c.l.b16 %v520
        %v906 = vunpack.c.h.b16 %v520
        %v907 = vunpack.c.l.b16 %v521
        %v908 = vunpack.c.l.b16 %v522
        %v909 = vunpack.c.h.b16 %v522
        %v910 = vunpack.c.l.b16 %v523
        %v911 = vunpack.c.l.b16 %v524
        %v912 = vunpack.c.h.b16 %v524
        %v913 = vunpack.c.l.b16 %v525
        %v914 = vunpack.c.l.b16 %v526
        %v915 = vunpack.c.h.b16 %v526
        %v916 = vunpack.c.l.b16 %v527
        %v917 = vunpack.c.l.b16 %v528
        %v918 = vunpack.c.h.b16 %v528
        %v919 = vunpack.c.l.b16 %v529
        %v920 = vunpack.c.l.b16 %v530
        %v921 = vunpack.c.h.b16 %v530
        %v922 = vunpack.c.l.b16 %v531
        %v923 = vunpack.c.l.b16 %v532
        %v924 = vunpack.c.h.b16 %v532
        %v925 = vunpack.c.l.b16 %v533
        %v926 = vunpack.c.l.b16 %v534
        %v927 = vunpack.c.h.b16 %v534
        %v928 = vunpack.c.l.b16 %v535
        %v929 = vunpack.c.l.b16 %v536
        %v930 = vunpack.c.h.b16 %v536
        %v931 = vunpack.c.l.b16 %v537
        %v932 = vunpack.c.l.b16 %v538
        %v933 = vunpack.c.h.b16 %v538
        %v934 = vunpack.c.l.b16 %v539
        %v935 = vunpack.c.l.b16 %v540
        %v936 = vunpack.c.h.b16 %v540
        %v937 = vunpack.c.l.b16 %v541
        %v938 = vpack.c.b16 %v893, %v890
        %v939 = vpack.c.b16 %v894, %v891
        %v940 = vpack.c.b16 %v895, %v892
        %v941 = vpack.c.b16 %v899, %v896
        %v942 = vpack.c.b16 %v900, %v897
        %v943 = vpack.c.b16 %v901, %v898
        %v944 = vpack.c.b16 %v905, %v902
        %v945 = vpack.c.b16 %v906, %v903
        %v946 = vpack.c.b16 %v907, %v904
        %v947 = vpack.c.b16 %v911, %v908
        %v948 = vpack.c.b16 %v912, %v909
        %v949 = vpack.c.b16 %v913, %v910
        %v950 = vpack.c.b16 %v917, %v914
        %v951 = vpack.c.b16 %v918, %v915
        %v952 = vpack.c.b16 %v919, %v916
        %v953 = vpack.c.b16 %v923, %v920
        %v954 = vpack.c.b16 %v924, %v921
        %v955 = vpack.c.b16 %v925, %v922
        %v956 = vpack.c.b16 %v929, %v926
        %v957 = vpack.c.b16 %v930, %v927
        %v958 = vpack.c.b16 %v931, %v928
        %v959 = vpack.c.b16 %v935, %v932
        %v960 = vpack.c.b16 %v936, %v933
        %v961 = vpack.c.b16 %v937, %v934
        %986 = vmatprep.subr.bf16.mxu0 %v939
        %987 = vmatpush1.bf16.msra.mxu0 %v938
        %988 = vmatprep.subr.bf16.mxu0 %v942
        %989 = vmatpush1.bf16.msra.mxu0 %v941
        %990 = vmatprep.subr.bf16.mxu0 %v945
        %991 = vmatpush1.bf16.msra.mxu0 %v944
        %992 = vmatprep.subr.bf16.mxu0 %v948
        %993 = vmatpush1.bf16.msra.mxu0 %v947
        %994 = vmatprep.subr.bf16.mxu0 %v951
        %995 = vmatpush1.bf16.msra.mxu0 %v950
        %996 = vmatprep.subr.bf16.mxu0 %v954
        %997 = vmatpush1.bf16.msra.mxu0 %v953
        %998 = vmatprep.subr.bf16.mxu0 %v957
        %999 = vmatpush1.bf16.msra.mxu0 %v956
        %1000 = vmatprep.subr.bf16.mxu0 %v960
        %1001 = vmatpush1.bf16.msra.mxu0 %v959
        %1002 = vmatprep.subr.bf16.mxu0 0
        %1003 = vmatpush1.bf16.msra.mxu0 0
        %1004 = vmatprep.subr.bf16.mxu0 0
        %1005 = vmatpush1.bf16.msra.mxu0 0
        %1006 = vmatprep.subr.bf16.mxu0 0
        %1007 = vmatpush1.bf16.msra.mxu0 0
        %1008 = vmatprep.subr.bf16.mxu0 0
        %1009 = vmatpush1.bf16.msra.mxu0 0
        %1010 = vmatprep.subr.bf16.mxu0 0
        %1011 = vmatpush1.bf16.msra.mxu0 0
        %1012 = vmatprep.subr.bf16.mxu0 0
        %1013 = vmatpush1.bf16.msra.mxu0 0
        %1014 = vmatprep.subr.bf16.mxu0 0
        %1015 = vmatpush1.bf16.msra.mxu0 0
        %1016 = vmatprep.subr.bf16.mxu0 0
        %1017 = vmatpush1.bf16.msra.mxu0 0
        %1018 = vmatprep.mubr.bf16.mxu0 0
        %1019 = vmatmul.mubr.bf16.gmra.mrb[0].mxu0 0
        %v1020 = vpop.f32.mrb[0].mxu0
        %v1021 = vadd.f32 0.0, %v1020
        %v1022 = vpop.f32.mrb[0].mxu0
        %v1023 = vadd.f32 0.0, %v1022
        %v1024 = vpop.f32.mrb[0].mxu0
        %v1025 = vpop.f32.mrb[0].mxu0
        %1026 = vdwg.mxu0
        %1027 = vmatprep.subr.bf16.mxu0 0
        %1028 = vmatpush1.bf16.msra.mxu0 %v940
        %1029 = vmatprep.subr.bf16.mxu0 0
        %1030 = vmatpush1.bf16.msra.mxu0 %v943
        %1031 = vmatprep.subr.bf16.mxu0 0
        %1032 = vmatpush1.bf16.msra.mxu0 %v946
        %1033 = vmatprep.subr.bf16.mxu0 0
        %1034 = vmatpush1.bf16.msra.mxu0 %v949
        %1035 = vmatprep.subr.bf16.mxu0 0
        %1036 = vmatpush1.bf16.msra.mxu0 %v952
        %1037 = vmatprep.subr.bf16.mxu0 0
        %1038 = vmatpush1.bf16.msra.mxu0 %v955
        %1039 = vmatprep.subr.bf16.mxu0 0
        %1040 = vmatpush1.bf16.msra.mxu0 %v958
        %1041 = vmatprep.subr.bf16.mxu0 0
        %1042 = vmatpush1.bf16.msra.mxu0 %v961
        %1043 = vmatprep.subr.bf16.mxu0 0
        %1044 = vmatpush1.bf16.msra.mxu0 0
        %1045 = vmatprep.subr.bf16.mxu0 0
        %1046 = vmatpush1.bf16.msra.mxu0 0
        %1047 = vmatprep.subr.bf16.mxu0 0
        %1048 = vmatpush1.bf16.msra.mxu0 0
        %1049 = vmatprep.subr.bf16.mxu0 0
        %1050 = vmatpush1.bf16.msra.mxu0 0
        %1051 = vmatprep.subr.bf16.mxu0 0
        %1052 = vmatpush1.bf16.msra.mxu0 0
        %1053 = vmatprep.subr.bf16.mxu0 0
        %1054 = vmatpush1.bf16.msra.mxu0 0
        %1055 = vmatprep.subr.bf16.mxu0 0
        %1056 = vmatpush1.bf16.msra.mxu0 0
        %1057 = vmatprep.subr.bf16.mxu0 0
        %1058 = vmatpush1.bf16.msra.mxu0 0
        %1059 = vmatprep.mubr.bf16.mxu0 0
        %1060 = vmatmul.mubr.bf16.gmra.mrb[0].mxu0 0
        %v1061 = vpop.f32.mrb[0].mxu0
        %v1062 = vadd.f32 0.0, %v1061
        %v1063 = vpop.f32.mrb[0].mxu0
        %v1064 = vpop.f32.mrb[0].mxu0
        %v1065 = vpop.f32.mrb[0].mxu0
        %1066 = vdwg.mxu0
        %v1067 = vadd.f32 %v694, %v1021
        %v1068 = vxor.u32 %v1067, 2147483648
        %v1069 = vmul.f32 %v1068, 1.442695
        %v1070 = vpow.pop %v1069
        %v1071 = vadd.f32 %v1070, 1.0
        %v1072 = vrcp.pop %v1071
        %v1073 = vmul.f32 1.0, %v1072
        %v1074 = vadd.f32 %v696, %v1023
        %v1075 = vxor.u32 %v1074, 2147483648
        %v1076 = vmul.f32 %v1075, 1.442695
        %v1077 = vpow.pop %v1076
        %v1078 = vadd.f32 %v1077, 1.0
        %v1079 = vrcp.pop %v1078
        %v1080 = vmul.f32 1.0, %v1079
        %v1081 = vadd.f32 %v1062, %v579
        %v1082 = vmul.f32 %v1073, %v1081
        %v1083 = vadd.f32 %v735, %v1082
        %v1084 = vtanh.pop %v1083
        %v1085 = vsub.f32 0.0, %v1084
        %v1086 = vmul.f32 %v1080, %v1085
        %v1087 = vadd.f32 %v1084, %v1086
        %v1120 = vunpack.c.l.b16 %v542
        %v1121 = vunpack.c.h.b16 %v542
        %v1122 = vunpack.c.l.b16 %v543
        %v1123 = vunpack.c.l.b16 %v544
        %v1124 = vunpack.c.h.b16 %v544
        %v1125 = vunpack.c.l.b16 %v545
        %v1126 = vunpack.c.l.b16 %v546
        %v1127 = vunpack.c.h.b16 %v546
        %v1128 = vunpack.c.l.b16 %v547
        %v1129 = vunpack.c.l.b16 %v548
        %v1130 = vunpack.c.h.b16 %v548
        %v1131 = vunpack.c.l.b16 %v549
        %v1132 = vunpack.c.l.b16 %v550
        %v1133 = vunpack.c.h.b16 %v550
        %v1134 = vunpack.c.l.b16 %v551
        %v1135 = vunpack.c.l.b16 %v552
        %v1136 = vunpack.c.h.b16 %v552
        %v1137 = vunpack.c.l.b16 %v553
        %v1138 = vunpack.c.l.b16 %v554
        %v1139 = vunpack.c.h.b16 %v554
        %v1140 = vunpack.c.l.b16 %v555
        %v1141 = vunpack.c.l.b16 %v556
        %v1142 = vunpack.c.h.b16 %v556
        %v1143 = vunpack.c.l.b16 %v557
        %v1144 = vunpack.c.l.b16 %v558
        %v1145 = vunpack.c.h.b16 %v558
        %v1146 = vunpack.c.l.b16 %v559
        %v1147 = vunpack.c.l.b16 %v560
        %v1148 = vunpack.c.h.b16 %v560
        %v1149 = vunpack.c.l.b16 %v561
        %v1150 = vunpack.c.l.b16 %v562
        %v1151 = vunpack.c.h.b16 %v562
        %v1152 = vunpack.c.l.b16 %v563
        %v1153 = vunpack.c.l.b16 %v564
        %v1154 = vunpack.c.h.b16 %v564
        %v1155 = vunpack.c.l.b16 %v565
        %v1156 = vunpack.c.l.b16 %v566
        %v1157 = vunpack.c.h.b16 %v566
        %v1158 = vunpack.c.l.b16 %v567
        %v1159 = vunpack.c.l.b16 %v568
        %v1160 = vunpack.c.h.b16 %v568
        %v1161 = vunpack.c.l.b16 %v569
        %v1162 = vunpack.c.l.b16 %v570
        %v1163 = vunpack.c.h.b16 %v570
        %v1164 = vunpack.c.l.b16 %v571
        %v1165 = vunpack.c.l.b16 %v572
        %v1166 = vunpack.c.h.b16 %v572
        %v1167 = vunpack.c.l.b16 %v573
        %v1168 = vpack.c.b16 %v1123, %v1120
        %v1169 = vpack.c.b16 %v1124, %v1121
        %v1170 = vpack.c.b16 %v1125, %v1122
        %v1171 = vpack.c.b16 %v1129, %v1126
        %v1172 = vpack.c.b16 %v1130, %v1127
        %v1173 = vpack.c.b16 %v1131, %v1128
        %v1174 = vpack.c.b16 %v1135, %v1132
        %v1175 = vpack.c.b16 %v1136, %v1133
        %v1176 = vpack.c.b16 %v1137, %v1134
        %v1177 = vpack.c.b16 %v1141, %v1138
        %v1178 = vpack.c.b16 %v1142, %v1139
        %v1179 = vpack.c.b16 %v1143, %v1140
        %v1180 = vpack.c.b16 %v1147, %v1144
        %v1181 = vpack.c.b16 %v1148, %v1145
        %v1182 = vpack.c.b16 %v1149, %v1146
        %v1183 = vpack.c.b16 %v1153, %v1150
        %v1184 = vpack.c.b16 %v1154, %v1151
        %v1185 = vpack.c.b16 %v1155, %v1152
        %v1186 = vpack.c.b16 %v1159, %v1156
        %v1187 = vpack.c.b16 %v1160, %v1157
        %v1188 = vpack.c.b16 %v1161, %v1158
        %v1189 = vpack.c.b16 %v1165, %v1162
        %v1190 = vpack.c.b16 %v1166, %v1163
        %v1191 = vpack.c.b16 %v1167, %v1164
        %1216 = vmatprep.subr.bf16.mxu0 %v1169
        %1217 = vmatpush1.bf16.msra.mxu0 %v1168
        %1218 = vmatprep.subr.bf16.mxu0 %v1172
        %1219 = vmatpush1.bf16.msra.mxu0 %v1171
        %1220 = vmatprep.subr.bf16.mxu0 %v1175
        %1221 = vmatpush1.bf16.msra.mxu0 %v1174
        %1222 = vmatprep.subr.bf16.mxu0 %v1178
        %1223 = vmatpush1.bf16.msra.mxu0 %v1177
        %1224 = vmatprep.subr.bf16.mxu0 %v1181
        %1225 = vmatpush1.bf16.msra.mxu0 %v1180
        %1226 = vmatprep.subr.bf16.mxu0 %v1184
        %1227 = vmatpush1.bf16.msra.mxu0 %v1183
        %1228 = vmatprep.subr.bf16.mxu0 %v1187
        %1229 = vmatpush1.bf16.msra.mxu0 %v1186
        %1230 = vmatprep.subr.bf16.mxu0 %v1190
        %1231 = vmatpush1.bf16.msra.mxu0 %v1189
        %1232 = vmatprep.subr.bf16.mxu0 0
        %1233 = vmatpush1.bf16.msra.mxu0 0
        %1234 = vmatprep.subr.bf16.mxu0 0
        %1235 = vmatpush1.bf16.msra.mxu0 0
        %1236 = vmatprep.subr.bf16.mxu0 0
        %1237 = vmatpush1.bf16.msra.mxu0 0
        %1238 = vmatprep.subr.bf16.mxu0 0
        %1239 = vmatpush1.bf16.msra.mxu0 0
        %1240 = vmatprep.subr.bf16.mxu0 0
        %1241 = vmatpush1.bf16.msra.mxu0 0
        %1242 = vmatprep.subr.bf16.mxu0 0
        %1243 = vmatpush1.bf16.msra.mxu0 0
        %1244 = vmatprep.subr.bf16.mxu0 0
        %1245 = vmatpush1.bf16.msra.mxu0 0
        %1246 = vmatprep.subr.bf16.mxu0 0
        %1247 = vmatpush1.bf16.msra.mxu0 0
        %1248 = vmatprep.mubr.bf16.mxu0 0
        %1249 = vmatmul.mubr.bf16.gmra.mrb[0].mxu0 0
        %v1250 = vpop.f32.mrb[0].mxu0
        %v1251 = vadd.f32 0.0, %v1250
        %v1252 = vpop.f32.mrb[0].mxu0
        %v1253 = vadd.f32 0.0, %v1252
        %v1254 = vpop.f32.mrb[0].mxu0
        %v1255 = vpop.f32.mrb[0].mxu0
        %1256 = vdwg.mxu0
        %1257 = vmatprep.subr.bf16.mxu0 0
        %1258 = vmatpush1.bf16.msra.mxu0 %v1170
        %1259 = vmatprep.subr.bf16.mxu0 0
        %1260 = vmatpush1.bf16.msra.mxu0 %v1173
        %1261 = vmatprep.subr.bf16.mxu0 0
        %1262 = vmatpush1.bf16.msra.mxu0 %v1176
        %1263 = vmatprep.subr.bf16.mxu0 0
        %1264 = vmatpush1.bf16.msra.mxu0 %v1179
        %1265 = vmatprep.subr.bf16.mxu0 0
        %1266 = vmatpush1.bf16.msra.mxu0 %v1182
        %1267 = vmatprep.subr.bf16.mxu0 0
        %1268 = vmatpush1.bf16.msra.mxu0 %v1185
        %1269 = vmatprep.subr.bf16.mxu0 0
        %1270 = vmatpush1.bf16.msra.mxu0 %v1188
        %1271 = vmatprep.subr.bf16.mxu0 0
        %1272 = vmatpush1.bf16.msra.mxu0 %v1191
        %1273 = vmatprep.subr.bf16.mxu0 0
        %1274 = vmatpush1.bf16.msra.mxu0 0
        %1275 = vmatprep.subr.bf16.mxu0 0
        %1276 = vmatpush1.bf16.msra.mxu0 0
        %1277 = vmatprep.subr.bf16.mxu0 0
        %1278 = vmatpush1.bf16.msra.mxu0 0
        %1279 = vmatprep.subr.bf16.mxu0 0
        %1280 = vmatpush1.bf16.msra.mxu0 0
        %1281 = vmatprep.subr.bf16.mxu0 0
        %1282 = vmatpush1.bf16.msra.mxu0 0
        %1283 = vmatprep.subr.bf16.mxu0 0
        %1284 = vmatpush1.bf16.msra.mxu0 0
        %1285 = vmatprep.subr.bf16.mxu0 0
        %1286 = vmatpush1.bf16.msra.mxu0 0
        %1287 = vmatprep.subr.bf16.mxu0 0
        %1288 = vmatpush1.bf16.msra.mxu0 0
        %1289 = vmatprep.mubr.bf16.mxu0 0
        %1290 = vmatmul.mubr.bf16.gmra.mrb[0].mxu0 0
        %v1291 = vpop.f32.mrb[0].mxu0
        %v1292 = vadd.f32 0.0, %v1291
        %v1293 = vpop.f32.mrb[0].mxu0
        %v1294 = vpop.f32.mrb[0].mxu0
        %v1295 = vpop.f32.mrb[0].mxu0
        %1296 = vdwg.mxu0
        %v1297 = vadd.f32 %v812, %v1251
        %v1298 = vxor.u32 %v1297, 2147483648
        %v1299 = vmul.f32 %v1298, 1.442695
        %v1300 = vpow.pop %v1299
        %v1301 = vadd.f32 %v1300, 1.0
        %v1302 = vrcp.pop %v1301
        %v1303 = vmul.f32 1.0, %v1302
        %v1304 = vadd.f32 %v814, %v1253
        %v1305 = vxor.u32 %v1304, 2147483648
        %v1306 = vmul.f32 %v1305, 1.442695
        %v1307 = vpow.pop %v1306
        %v1308 = vadd.f32 %v1307, 1.0
        %v1309 = vrcp.pop %v1308
        %v1310 = vmul.f32 1.0, %v1309
        %v1311 = vadd.f32 %v1292, %v586
        %v1312 = vmul.f32 %v1303, %v1311
        %v1313 = vadd.f32 %v853, %v1312
        %v1314 = vtanh.pop %v1313
        %v1315 = vsub.f32 0.0, %v1314
        %v1316 = vmul.f32 %v1310, %v1315
        %v1317 = vadd.f32 %v1314, %v1316
        %vm1318 = vcmp.gt.s32.totalorder %v493, 0
        %v1319 = vsel %vm1318, 1, 0
        %1320 = vset.pattern.permute.xlu0 0
        %1321 = vperm.xlu0 %1320, %v1319
        %v1322 = vpop.permute.xlu0 %1321
        %vm1323 = vcmp.eq.s32.totalorder %v1322, 1
        %v1324 = vsel %vm1323, %v1087, 0.0
        %vm1325 = vcmp.gt.s32.totalorder %v493, 7
        %v1326 = vsel %vm1325, 1, 0
        %1327 = vset.pattern.permute.xlu0 0
        %1328 = vperm.xlu0 %1327, %v1326
        %v1329 = vpop.permute.xlu0 %1328
        %vm1330 = vcmp.eq.s32.totalorder %v1329, 1
        %v1331 = vsel %vm1330, %v1317, 0.0
        %s1332 = scalar_lea.vmem %s431, 4 [#allocation2]
        %v1333 = vld [vmem:[%s1332] sm:$0xf]
        %v1335 = vsel %vm655, %v1333, 0
        %1337 = vmatprep.subr.bf16.mxu0 %v644
        %1338 = vmatpush1.bf16.msra.mxu0 %v643
        %1339 = vmatprep.subr.bf16.mxu0 %v647
        %1340 = vmatpush1.bf16.msra.mxu0 %v646
        %1341 = vmatprep.subr.bf16.mxu0 0
        %1342 = vmatpush1.bf16.msra.mxu0 0
        %1343 = vmatprep.subr.bf16.mxu0 0
        %1344 = vmatpush1.bf16.msra.mxu0 0
        %1345 = vmatprep.subr.bf16.mxu0 0
        %1346 = vmatpush1.bf16.msra.mxu0 0
        %1347 = vmatprep.subr.bf16.mxu0 0
        %1348 = vmatpush1.bf16.msra.mxu0 0
        %1349 = vmatprep.subr.bf16.mxu0 0
        %1350 = vmatpush1.bf16.msra.mxu0 0
        %1351 = vmatprep.subr.bf16.mxu0 0
        %1352 = vmatpush1.bf16.msra.mxu0 0
        %1353 = vmatprep.subr.bf16.mxu0 0
        %1354 = vmatpush1.bf16.msra.mxu0 0
        %1355 = vmatprep.subr.bf16.mxu0 0
        %1356 = vmatpush1.bf16.msra.mxu0 0
        %1357 = vmatprep.subr.bf16.mxu0 0
        %1358 = vmatpush1.bf16.msra.mxu0 0
        %1359 = vmatprep.subr.bf16.mxu0 0
        %1360 = vmatpush1.bf16.msra.mxu0 0
        %1361 = vmatprep.subr.bf16.mxu0 0
        %1362 = vmatpush1.bf16.msra.mxu0 0
        %1363 = vmatprep.subr.bf16.mxu0 0
        %1364 = vmatpush1.bf16.msra.mxu0 0
        %1365 = vmatprep.subr.bf16.mxu0 0
        %1366 = vmatpush1.bf16.msra.mxu0 0
        %1367 = vmatprep.subr.bf16.mxu0 0
        %1368 = vmatpush1.bf16.msra.mxu0 0
        %1369 = vmatprep.mubr.bf16.mxu0 0
        %1370 = vmatmul.mubr.bf16.gmra.mrb[0].mxu0 %v1335
        %v1371 = vpop.f32.mrb[0].mxu0
        %v1372 = vadd.f32 %v593, %v1371
        %v1373 = vpop.f32.mrb[0].mxu0
        %v1374 = vadd.f32 %v597, %v1373
        %v1375 = vpop.f32.mrb[0].mxu0
        %v1376 = vpop.f32.mrb[0].mxu0
        %1377 = vdwg.mxu0
        %1378 = vmatprep.subr.bf16.mxu0 0
        %1379 = vmatpush1.bf16.msra.mxu0 %v645
        %1380 = vmatprep.subr.bf16.mxu0 0
        %1381 = vmatpush1.bf16.msra.mxu0 %v648
        %1382 = vmatprep.subr.bf16.mxu0 0
        %1383 = vmatpush1.bf16.msra.mxu0 0
        %1384 = vmatprep.subr.bf16.mxu0 0
        %1385 = vmatpush1.bf16.msra.mxu0 0
        %1386 = vmatprep.subr.bf16.mxu0 0
        %1387 = vmatpush1.bf16.msra.mxu0 0
        %1388 = vmatprep.subr.bf16.mxu0 0
        %1389 = vmatpush1.bf16.msra.mxu0 0
        %1390 = vmatprep.subr.bf16.mxu0 0
        %1391 = vmatpush1.bf16.msra.mxu0 0
        %1392 = vmatprep.subr.bf16.mxu0 0
        %1393 = vmatpush1.bf16.msra.mxu0 0
        %1394 = vmatprep.subr.bf16.mxu0 0
        %1395 = vmatpush1.bf16.msra.mxu0 0
        %1396 = vmatprep.subr.bf16.mxu0 0
        %1397 = vmatpush1.bf16.msra.mxu0 0
        %1398 = vmatprep.subr.bf16.mxu0 0
        %1399 = vmatpush1.bf16.msra.mxu0 0
        %1400 = vmatprep.subr.bf16.mxu0 0
        %1401 = vmatpush1.bf16.msra.mxu0 0
        %1402 = vmatprep.subr.bf16.mxu0 0
        %1403 = vmatpush1.bf16.msra.mxu0 0
        %1404 = vmatprep.subr.bf16.mxu0 0
        %1405 = vmatpush1.bf16.msra.mxu0 0
        %1406 = vmatprep.subr.bf16.mxu0 0
        %1407 = vmatpush1.bf16.msra.mxu0 0
        %1408 = vmatprep.subr.bf16.mxu0 0
        %1409 = vmatpush1.bf16.msra.mxu0 0
        %1410 = vmatprep.mubr.bf16.mxu0 0
        %1411 = vmatmul.mubr.bf16.gmra.mrb[0].mxu0 %v1335
        %v1412 = vpop.f32.mrb[0].mxu0
        %v1413 = vadd.f32 %v601, %v1412
        %v1414 = vpop.f32.mrb[0].mxu0
        %v1415 = vpop.f32.mrb[0].mxu0
        %v1416 = vpop.f32.mrb[0].mxu0
        %1417 = vdwg.mxu0
        %s1418 = scalar_lea.vmem %s431, 24 [#allocation2]
        %v1419 = vld [vmem:[%s1418] sm:$0xf]
        %v1421 = vsel %vm655, %v1419, 0
        %1423 = vmatprep.subr.bf16.mxu0 %v763
        %1424 = vmatpush1.bf16.msra.mxu0 %v762
        %1425 = vmatprep.subr.bf16.mxu0 %v766
        %1426 = vmatpush1.bf16.msra.mxu0 %v765
        %1427 = vmatprep.subr.bf16.mxu0 0
        %1428 = vmatpush1.bf16.msra.mxu0 0
        %1429 = vmatprep.subr.bf16.mxu0 0
        %1430 = vmatpush1.bf16.msra.mxu0 0
        %1431 = vmatprep.subr.bf16.mxu0 0
        %1432 = vmatpush1.bf16.msra.mxu0 0
        %1433 = vmatprep.subr.bf16.mxu0 0
        %1434 = vmatpush1.bf16.msra.mxu0 0
        %1435 = vmatprep.subr.bf16.mxu0 0
        %1436 = vmatpush1.bf16.msra.mxu0 0
        %1437 = vmatprep.subr.bf16.mxu0 0
        %1438 = vmatpush1.bf16.msra.mxu0 0
        %1439 = vmatprep.subr.bf16.mxu0 0
        %1440 = vmatpush1.bf16.msra.mxu0 0
        %1441 = vmatprep.subr.bf16.mxu0 0
        %1442 = vmatpush1.bf16.msra.mxu0 0
        %1443 = vmatprep.subr.bf16.mxu0 0
        %1444 = vmatpush1.bf16.msra.mxu0 0
        %1445 = vmatprep.subr.bf16.mxu0 0
        %1446 = vmatpush1.bf16.msra.mxu0 0
        %1447 = vmatprep.subr.bf16.mxu0 0
        %1448 = vmatpush1.bf16.msra.mxu0 0
        %1449 = vmatprep.subr.bf16.mxu0 0
        %1450 = vmatpush1.bf16.msra.mxu0 0
        %1451 = vmatprep.subr.bf16.mxu0 0
        %1452 = vmatpush1.bf16.msra.mxu0 0
        %1453 = vmatprep.subr.bf16.mxu0 0
        %1454 = vmatpush1.bf16.msra.mxu0 0
        %1455 = vmatprep.mubr.bf16.mxu0 0
        %1456 = vmatmul.mubr.bf16.gmra.mrb[0].mxu0 %v1421
        %v1457 = vpop.f32.mrb[0].mxu0
        %v1458 = vadd.f32 %v610, %v1457
        %v1459 = vpop.f32.mrb[0].mxu0
        %v1460 = vadd.f32 %v614, %v1459
        %v1461 = vpop.f32.mrb[0].mxu0
        %v1462 = vpop.f32.mrb[0].mxu0
        %1463 = vdwg.mxu0
        %1464 = vmatprep.subr.bf16.mxu0 0
        %1465 = vmatpush1.bf16.msra.mxu0 %v764
        %1466 = vmatprep.subr.bf16.mxu0 0
        %1467 = vmatpush1.bf16.msra.mxu0 %v767
        %1468 = vmatprep.subr.bf16.mxu0 0
        %1469 = vmatpush1.bf16.msra.mxu0 0
        %1470 = vmatprep.subr.bf16.mxu0 0
        %1471 = vmatpush1.bf16.msra.mxu0 0
        %1472 = vmatprep.subr.bf16.mxu0 0
        %1473 = vmatpush1.bf16.msra.mxu0 0
        %1474 = vmatprep.subr.bf16.mxu0 0
        %1475 = vmatpush1.bf16.msra.mxu0 0
        %1476 = vmatprep.subr.bf16.mxu0 0
        %1477 = vmatpush1.bf16.msra.mxu0 0
        %1478 = vmatprep.subr.bf16.mxu0 0
        %1479 = vmatpush1.bf16.msra.mxu0 0
        %1480 = vmatprep.subr.bf16.mxu0 0
        %1481 = vmatpush1.bf16.msra.mxu0 0
        %1482 = vmatprep.subr.bf16.mxu0 0
        %1483 = vmatpush1.bf16.msra.mxu0 0
        %1484 = vmatprep.subr.bf16.mxu0 0
        %1485 = vmatpush1.bf16.msra.mxu0 0
        %1486 = vmatprep.subr.bf16.mxu0 0
        %1487 = vmatpush1.bf16.msra.mxu0 0
        %1488 = vmatprep.subr.bf16.mxu0 0
        %1489 = vmatpush1.bf16.msra.mxu0 0
        %1490 = vmatprep.subr.bf16.mxu0 0
        %1491 = vmatpush1.bf16.msra.mxu0 0
        %1492 = vmatprep.subr.bf16.mxu0 0
        %1493 = vmatpush1.bf16.msra.mxu0 0
        %1494 = vmatprep.subr.bf16.mxu0 0
        %1495 = vmatpush1.bf16.msra.mxu0 0
        %1496 = vmatprep.mubr.bf16.mxu0 0
        %1497 = vmatmul.mubr.bf16.gmra.mrb[0].mxu0 %v1421
        %v1498 = vpop.f32.mrb[0].mxu0
        %v1499 = vadd.f32 %v618, %v1498
        %v1500 = vpop.f32.mrb[0].mxu0
        %v1501 = vpop.f32.mrb[0].mxu0
        %v1502 = vpop.f32.mrb[0].mxu0
        %1503 = vdwg.mxu0
        %v1504 = vpack.c.bf16 %v1324, %v1324
        %1505 = vmatprep.subr.bf16.mxu0 %v939
        %1506 = vmatpush1.bf16.msra.mxu0 %v938
        %1507 = vmatprep.subr.bf16.mxu0 %v942
        %1508 = vmatpush1.bf16.msra.mxu0 %v941
        %1509 = vmatprep.subr.bf16.mxu0 %v945
        %1510 = vmatpush1.bf16.msra.mxu0 %v944
        %1511 = vmatprep.subr.bf16.mxu0 %v948
        %1512 = vmatpush1.bf16.msra.mxu0 %v947
        %1513 = vmatprep.subr.bf16.mxu0 %v951
        %1514 = vmatpush1.bf16.msra.mxu0 %v950
        %1515 = vmatprep.subr.bf16.mxu0 %v954
        %1516 = vmatpush1.bf16.msra.mxu0 %v953
        %1517 = vmatprep.subr.bf16.mxu0 %v957
        %1518 = vmatpush1.bf16.msra.mxu0 %v956
        %1519 = vmatprep.subr.bf16.mxu0 %v960
        %1520 = vmatpush1.bf16.msra.mxu0 %v959
        %1521 = vmatprep.subr.bf16.mxu0 0
        %1522 = vmatpush1.bf16.msra.mxu0 0
        %1523 = vmatprep.subr.bf16.mxu0 0
        %1524 = vmatpush1.bf16.msra.mxu0 0
        %1525 = vmatprep.subr.bf16.mxu0 0
        %1526 = vmatpush1.bf16.msra.mxu0 0
        %1527 = vmatprep.subr.bf16.mxu0 0
        %1528 = vmatpush1.bf16.msra.mxu0 0
        %1529 = vmatprep.subr.bf16.mxu0 0
        %1530 = vmatpush1.bf16.msra.mxu0 0
        %1531 = vmatprep.subr.bf16.mxu0 0
        %1532 = vmatpush1.bf16.msra.mxu0 0
        %1533 = vmatprep.subr.bf16.mxu0 0
        %1534 = vmatpush1.bf16.msra.mxu0 0
        %1535 = vmatprep.subr.bf16.mxu0 0
        %1536 = vmatpush1.bf16.msra.mxu0 0
        %1537 = vmatprep.mubr.bf16.mxu0 0
        %1538 = vmatmul.mubr.bf16.gmra.mrb[0].mxu0 %v1504
        %v1539 = vpop.f32.mrb[0].mxu0
        %v1540 = vadd.f32 0.0, %v1539
        %v1541 = vpop.f32.mrb[0].mxu0
        %v1542 = vadd.f32 0.0, %v1541
        %v1543 = vpop.f32.mrb[0].mxu0
        %v1544 = vpop.f32.mrb[0].mxu0
        %1545 = vdwg.mxu0
        %1546 = vmatprep.subr.bf16.mxu0 0
        %1547 = vmatpush1.bf16.msra.mxu0 %v940
        %1548 = vmatprep.subr.bf16.mxu0 0
        %1549 = vmatpush1.bf16.msra.mxu0 %v943
        %1550 = vmatprep.subr.bf16.mxu0 0
        %1551 = vmatpush1.bf16.msra.mxu0 %v946
        %1552 = vmatprep.subr.bf16.mxu0 0
        %1553 = vmatpush1.bf16.msra.mxu0 %v949
        %1554 = vmatprep.subr.bf16.mxu0 0
        %1555 = vmatpush1.bf16.msra.mxu0 %v952
        %1556 = vmatprep.subr.bf16.mxu0 0
        %1557 = vmatpush1.bf16.msra.mxu0 %v955
        %1558 = vmatprep.subr.bf16.mxu0 0
        %1559 = vmatpush1.bf16.msra.mxu0 %v958
        %1560 = vmatprep.subr.bf16.mxu0 0
        %1561 = vmatpush1.bf16.msra.mxu0 %v961
        %1562 = vmatprep.subr.bf16.mxu0 0
        %1563 = vmatpush1.bf16.msra.mxu0 0
        %1564 = vmatprep.subr.bf16.mxu0 0
        %1565 = vmatpush1.bf16.msra.mxu0 0
        %1566 = vmatprep.subr.bf16.mxu0 0
        %1567 = vmatpush1.bf16.msra.mxu0 0
        %1568 = vmatprep.subr.bf16.mxu0 0
        %1569 = vmatpush1.bf16.msra.mxu0 0
        %1570 = vmatprep.subr.bf16.mxu0 0
        %1571 = vmatpush1.bf16.msra.mxu0 0
        %1572 = vmatprep.subr.bf16.mxu0 0
        %1573 = vmatpush1.bf16.msra.mxu0 0
        %1574 = vmatprep.subr.bf16.mxu0 0
        %1575 = vmatpush1.bf16.msra.mxu0 0
        %1576 = vmatprep.subr.bf16.mxu0 0
        %1577 = vmatpush1.bf16.msra.mxu0 0
        %1578 = vmatprep.mubr.bf16.mxu0 0
        %1579 = vmatmul.mubr.bf16.gmra.mrb[0].mxu0 %v1504
        %v1580 = vpop.f32.mrb[0].mxu0
        %v1581 = vadd.f32 0.0, %v1580
        %v1582 = vpop.f32.mrb[0].mxu0
        %v1583 = vpop.f32.mrb[0].mxu0
        %v1584 = vpop.f32.mrb[0].mxu0
        %1585 = vdwg.mxu0
        %v1586 = vadd.f32 %v1372, %v1540
        %v1587 = vxor.u32 %v1586, 2147483648
        %v1588 = vmul.f32 %v1587, 1.442695
        %v1589 = vpow.pop %v1588
        %v1590 = vadd.f32 %v1589, 1.0
        %v1591 = vrcp.pop %v1590
        %v1592 = vmul.f32 1.0, %v1591
        %v1593 = vadd.f32 %v1374, %v1542
        %v1594 = vxor.u32 %v1593, 2147483648
        %v1595 = vmul.f32 %v1594, 1.442695
        %v1596 = vpow.pop %v1595
        %v1597 = vadd.f32 %v1596, 1.0
        %v1598 = vrcp.pop %v1597
        %v1599 = vmul.f32 1.0, %v1598
        %v1600 = vadd.f32 %v1581, %v579
        %v1601 = vmul.f32 %v1592, %v1600
        %v1602 = vadd.f32 %v1413, %v1601
        %v1603 = vtanh.pop %v1602
        %v1604 = vsub.f32 %v1324, %v1603
        %v1605 = vmul.f32 %v1599, %v1604
        %v1606 = vadd.f32 %v1603, %v1605
        %v1607 = vpack.c.bf16 %v1331, %v1331
        %1608 = vmatprep.subr.bf16.mxu0 %v1169
        %1609 = vmatpush1.bf16.msra.mxu0 %v1168
        %1610 = vmatprep.subr.bf16.mxu0 %v1172
        %1611 = vmatpush1.bf16.msra.mxu0 %v1171
        %1612 = vmatprep.subr.bf16.mxu0 %v1175
        %1613 = vmatpush1.bf16.msra.mxu0 %v1174
        %1614 = vmatprep.subr.bf16.mxu0 %v1178
        %1615 = vmatpush1.bf16.msra.mxu0 %v1177
        %1616 = vmatprep.subr.bf16.mxu0 %v1181
        %1617 = vmatpush1.bf16.msra.mxu0 %v1180
        %1618 = vmatprep.subr.bf16.mxu0 %v1184
        %1619 = vmatpush1.bf16.msra.mxu0 %v1183
        %1620 = vmatprep.subr.bf16.mxu0 %v1187
        %1621 = vmatpush1.bf16.msra.mxu0 %v1186
        %1622 = vmatprep.subr.bf16.mxu0 %v1190
        %1623 = vmatpush1.bf16.msra.mxu0 %v1189
        %1624 = vmatprep.subr.bf16.mxu0 0
        %1625 = vmatpush1.bf16.msra.mxu0 0
        %1626 = vmatprep.subr.bf16.mxu0 0
        %1627 = vmatpush1.bf16.msra.mxu0 0
        %1628 = vmatprep.subr.bf16.mxu0 0
        %1629 = vmatpush1.bf16.msra.mxu0 0
        %1630 = vmatprep.subr.bf16.mxu0 0
        %1631 = vmatpush1.bf16.msra.mxu0 0
        %1632 = vmatprep.subr.bf16.mxu0 0
        %1633 = vmatpush1.bf16.msra.mxu0 0
        %1634 = vmatprep.subr.bf16.mxu0 0
        %1635 = vmatpush1.bf16.msra.mxu0 0
        %1636 = vmatprep.subr.bf16.mxu0 0
        %1637 = vmatpush1.bf16.msra.mxu0 0
        %1638 = vmatprep.subr.bf16.mxu0 0
        %1639 = vmatpush1.bf16.msra.mxu0 0
        %1640 = vmatprep.mubr.bf16.mxu0 0
        %1641 = vmatmul.mubr.bf16.gmra.mrb[0].mxu0 %v1607
        %v1642 = vpop.f32.mrb[0].mxu0
        %v1643 = vadd.f32 0.0, %v1642
        %v1644 = vpop.f32.mrb[0].mxu0
        %v1645 = vadd.f32 0.0, %v1644
        %v1646 = vpop.f32.mrb[0].mxu0
        %v1647 = vpop.f32.mrb[0].mxu0
        %1648 = vdwg.mxu0
        %1649 = vmatprep.subr.bf16.mxu0 0
        %1650 = vmatpush1.bf16.msra.mxu0 %v1170
        %1651 = vmatprep.subr.bf16.mxu0 0
        %1652 = vmatpush1.bf16.msra.mxu0 %v1173
        %1653 = vmatprep.subr.bf16.mxu0 0
        %1654 = vmatpush1.bf16.msra.mxu0 %v1176
        %1655 = vmatprep.subr.bf16.mxu0 0
        %1656 = vmatpush1.bf16.msra.mxu0 %v1179
        %1657 = vmatprep.subr.bf16.mxu0 0
        %1658 = vmatpush1.bf16.msra.mxu0 %v1182
        %1659 = vmatprep.subr.bf16.mxu0 0
        %1660 = vmatpush1.bf16.msra.mxu0 %v1185
        %1661 = vmatprep.subr.bf16.mxu0 0
        %1662 = vmatpush1.bf16.msra.mxu0 %v1188
        %1663 = vmatprep.subr.bf16.mxu0 0
        %1664 = vmatpush1.bf16.msra.mxu0 %v1191
        %1665 = vmatprep.subr.bf16.mxu0 0
        %1666 = vmatpush1.bf16.msra.mxu0 0
        %1667 = vmatprep.subr.bf16.mxu0 0
        %1668 = vmatpush1.bf16.msra.mxu0 0
        %1669 = vmatprep.subr.bf16.mxu0 0
        %1670 = vmatpush1.bf16.msra.mxu0 0
        %1671 = vmatprep.subr.bf16.mxu0 0
        %1672 = vmatpush1.bf16.msra.mxu0 0
        %1673 = vmatprep.subr.bf16.mxu0 0
        %1674 = vmatpush1.bf16.msra.mxu0 0
        %1675 = vmatprep.subr.bf16.mxu0 0
        %1676 = vmatpush1.bf16.msra.mxu0 0
        %1677 = vmatprep.subr.bf16.mxu0 0
        %1678 = vmatpush1.bf16.msra.mxu0 0
        %1679 = vmatprep.subr.bf16.mxu0 0
        %1680 = vmatpush1.bf16.msra.mxu0 0
        %1681 = vmatprep.mubr.bf16.mxu0 0
        %1682 = vmatmul.mubr.bf16.gmra.mrb[0].mxu0 %v1607
        %v1683 = vpop.f32.mrb[0].mxu0
        %v1684 = vadd.f32 0.0, %v1683
        %v1685 = vpop.f32.mrb[0].mxu0
        %v1686 = vpop.f32.mrb[0].mxu0
        %v1687 = vpop.f32.mrb[0].mxu0
        %1688 = vdwg.mxu0
        %v1689 = vadd.f32 %v1458, %v1643
        %v1690 = vxor.u32 %v1689, 2147483648
        %v1691 = vmul.f32 %v1690, 1.442695
        %v1692 = vpow.pop %v1691
        %v1693 = vadd.f32 %v1692, 1.0
        %v1694 = vrcp.pop %v1693
        %v1695 = vmul.f32 1.0, %v1694
        %v1696 = vadd.f32 %v1460, %v1645
        %v1697 = vxor.u32 %v1696, 2147483648
        %v1698 = vmul.f32 %v1697, 1.442695
        %v1699 = vpow.pop %v1698
        %v1700 = vadd.f32 %v1699, 1.0
        %v1701 = vrcp.pop %v1700
        %v1702 = vmul.f32 1.0, %v1701
        %v1703 = vadd.f32 %v1684, %v586
        %v1704 = vmul.f32 %v1695, %v1703
        %v1705 = vadd.f32 %v1499, %v1704
        %v1706 = vtanh.pop %v1705
        %v1707 = vsub.f32 %v1331, %v1706
        %v1708 = vmul.f32 %v1702, %v1707
        %v1709 = vadd.f32 %v1706, %v1708
        %vm1710 = vcmp.gt.s32.totalorder %v493, 1
        %v1711 = vsel %vm1710, 1, 0
        %1712 = vset.pattern.permute.xlu0 0
        %1713 = vperm.xlu0 %1712, %v1711
        %v1714 = vpop.permute.xlu0 %1713
        %vm1715 = vcmp.eq.s32.totalorder %v1714, 1
        %v1716 = vsel %vm1715, %v1606, %v1324
        %vm1717 = vcmp.gt.s32.totalorder %v493, 6
        %v1718 = vsel %vm1717, 1, 0
        %1719 = vset.pattern.permute.xlu0 0
        %1720 = vperm.xlu0 %1719, %v1718
        %v1721 = vpop.permute.xlu0 %1720
        %vm1722 = vcmp.eq.s32.totalorder %v1721, 1
        %v1723 = vsel %vm1722, %v1709, %v1331
        %s1724 = scalar_lea.vmem %s431, 8 [#allocation2]
        %v1725 = vld [vmem:[%s1724] sm:$0xf]
        %v1727 = vsel %vm655, %v1725, 0
        %1729 = vmatprep.subr.bf16.mxu0 %v644
        %1730 = vmatpush1.bf16.msra.mxu0 %v643
        %1731 = vmatprep.subr.bf16.mxu0 %v647
        %1732 = vmatpush1.bf16.msra.mxu0 %v646
        %1733 = vmatprep.subr.bf16.mxu0 0
        %1734 = vmatpush1.bf16.msra.mxu0 0
        %1735 = vmatprep.subr.bf16.mxu0 0
        %1736 = vmatpush1.bf16.msra.mxu0 0
        %1737 = vmatprep.subr.bf16.mxu0 0
        %1738 = vmatpush1.bf16.msra.mxu0 0
        %1739 = vmatprep.subr.bf16.mxu0 0
        %1740 = vmatpush1.bf16.msra.mxu0 0
        %1741 = vmatprep.subr.bf16.mxu0 0
        %1742 = vmatpush1.bf16.msra.mxu0 0
        %1743 = vmatprep.subr.bf16.mxu0 0
        %1744 = vmatpush1.bf16.msra.mxu0 0
        %1745 = vmatprep.subr.bf16.mxu0 0
        %1746 = vmatpush1.bf16.msra.mxu0 0
        %1747 = vmatprep.subr.bf16.mxu0 0
        %1748 = vmatpush1.bf16.msra.mxu0 0
        %1749 = vmatprep.subr.bf16.mxu0 0
        %1750 = vmatpush1.bf16.msra.mxu0 0
        %1751 = vmatprep.subr.bf16.mxu0 0
        %1752 = vmatpush1.bf16.msra.mxu0 0
        %1753 = vmatprep.subr.bf16.mxu0 0
        %1754 = vmatpush1.bf16.msra.mxu0 0
        %1755 = vmatprep.subr.bf16.mxu0 0
        %1756 = vmatpush1.bf16.msra.mxu0 0
        %1757 = vmatprep.subr.bf16.mxu0 0
        %1758 = vmatpush1.bf16.msra.mxu0 0
        %1759 = vmatprep.subr.bf16.mxu0 0
        %1760 = vmatpush1.bf16.msra.mxu0 0
        %1761 = vmatprep.mubr.bf16.mxu0 0
        %1762 = vmatmul.mubr.bf16.gmra.mrb[0].mxu0 %v1727
        %v1763 = vpop.f32.mrb[0].mxu0
        %v1764 = vadd.f32 %v593, %v1763
        %v1765 = vpop.f32.mrb[0].mxu0
        %v1766 = vadd.f32 %v597, %v1765
        %v1767 = vpop.f32.mrb[0].mxu0
        %v1768 = vpop.f32.mrb[0].mxu0
        %1769 = vdwg.mxu0
        %1770 = vmatprep.subr.bf16.mxu0 0
        %1771 = vmatpush1.bf16.msra.mxu0 %v645
        %1772 = vmatprep.subr.bf16.mxu0 0
        %1773 = vmatpush1.bf16.msra.mxu0 %v648
        %1774 = vmatprep.subr.bf16.mxu0 0
        %1775 = vmatpush1.bf16.msra.mxu0 0
        %1776 = vmatprep.subr.bf16.mxu0 0
        %1777 = vmatpush1.bf16.msra.mxu0 0
        %1778 = vmatprep.subr.bf16.mxu0 0
        %1779 = vmatpush1.bf16.msra.mxu0 0
        %1780 = vmatprep.subr.bf16.mxu0 0
        %1781 = vmatpush1.bf16.msra.mxu0 0
        %1782 = vmatprep.subr.bf16.mxu0 0
        %1783 = vmatpush1.bf16.msra.mxu0 0
        %1784 = vmatprep.subr.bf16.mxu0 0
        %1785 = vmatpush1.bf16.msra.mxu0 0
        %1786 = vmatprep.subr.bf16.mxu0 0
        %1787 = vmatpush1.bf16.msra.mxu0 0
        %1788 = vmatprep.subr.bf16.mxu0 0
        %1789 = vmatpush1.bf16.msra.mxu0 0
        %1790 = vmatprep.subr.bf16.mxu0 0
        %1791 = vmatpush1.bf16.msra.mxu0 0
        %1792 = vmatprep.subr.bf16.mxu0 0
        %1793 = vmatpush1.bf16.msra.mxu0 0
        %1794 = vmatprep.subr.bf16.mxu0 0
        %1795 = vmatpush1.bf16.msra.mxu0 0
        %1796 = vmatprep.subr.bf16.mxu0 0
        %1797 = vmatpush1.bf16.msra.mxu0 0
        %1798 = vmatprep.subr.bf16.mxu0 0
        %1799 = vmatpush1.bf16.msra.mxu0 0
        %1800 = vmatprep.subr.bf16.mxu0 0
        %1801 = vmatpush1.bf16.msra.mxu0 0
        %1802 = vmatprep.mubr.bf16.mxu0 0
        %1803 = vmatmul.mubr.bf16.gmra.mrb[0].mxu0 %v1727
        %v1804 = vpop.f32.mrb[0].mxu0
        %v1805 = vadd.f32 %v601, %v1804
        %v1806 = vpop.f32.mrb[0].mxu0
        %v1807 = vpop.f32.mrb[0].mxu0
        %v1808 = vpop.f32.mrb[0].mxu0
        %1809 = vdwg.mxu0
        %s1810 = scalar_lea.vmem %s431, 20 [#allocation2]
        %v1811 = vld [vmem:[%s1810] sm:$0xf]
        %v1813 = vsel %vm655, %v1811, 0
        %1815 = vmatprep.subr.bf16.mxu0 %v763
        %1816 = vmatpush1.bf16.msra.mxu0 %v762
        %1817 = vmatprep.subr.bf16.mxu0 %v766
        %1818 = vmatpush1.bf16.msra.mxu0 %v765
        %1819 = vmatprep.subr.bf16.mxu0 0
        %1820 = vmatpush1.bf16.msra.mxu0 0
        %1821 = vmatprep.subr.bf16.mxu0 0
        %1822 = vmatpush1.bf16.msra.mxu0 0
        %1823 = vmatprep.subr.bf16.mxu0 0
        %1824 = vmatpush1.bf16.msra.mxu0 0
        %1825 = vmatprep.subr.bf16.mxu0 0
        %1826 = vmatpush1.bf16.msra.mxu0 0
        %1827 = vmatprep.subr.bf16.mxu0 0
        %1828 = vmatpush1.bf16.msra.mxu0 0
        %1829 = vmatprep.subr.bf16.mxu0 0
        %1830 = vmatpush1.bf16.msra.mxu0 0
        %1831 = vmatprep.subr.bf16.mxu0 0
        %1832 = vmatpush1.bf16.msra.mxu0 0
        %1833 = vmatprep.subr.bf16.mxu0 0
        %1834 = vmatpush1.bf16.msra.mxu0 0
        %1835 = vmatprep.subr.bf16.mxu0 0
        %1836 = vmatpush1.bf16.msra.mxu0 0
        %1837 = vmatprep.subr.bf16.mxu0 0
        %1838 = vmatpush1.bf16.msra.mxu0 0
        %1839 = vmatprep.subr.bf16.mxu0 0
        %1840 = vmatpush1.bf16.msra.mxu0 0
        %1841 = vmatprep.subr.bf16.mxu0 0
        %1842 = vmatpush1.bf16.msra.mxu0 0
        %1843 = vmatprep.subr.bf16.mxu0 0
        %1844 = vmatpush1.bf16.msra.mxu0 0
        %1845 = vmatprep.subr.bf16.mxu0 0
        %1846 = vmatpush1.bf16.msra.mxu0 0
        %1847 = vmatprep.mubr.bf16.mxu0 0
        %1848 = vmatmul.mubr.bf16.gmra.mrb[0].mxu0 %v1813
        %v1849 = vpop.f32.mrb[0].mxu0
        %v1850 = vadd.f32 %v610, %v1849
        %v1851 = vpop.f32.mrb[0].mxu0
        %v1852 = vadd.f32 %v614, %v1851
        %v1853 = vpop.f32.mrb[0].mxu0
        %v1854 = vpop.f32.mrb[0].mxu0
        %1855 = vdwg.mxu0
        %1856 = vmatprep.subr.bf16.mxu0 0
        %1857 = vmatpush1.bf16.msra.mxu0 %v764
        %1858 = vmatprep.subr.bf16.mxu0 0
        %1859 = vmatpush1.bf16.msra.mxu0 %v767
        %1860 = vmatprep.subr.bf16.mxu0 0
        %1861 = vmatpush1.bf16.msra.mxu0 0
        %1862 = vmatprep.subr.bf16.mxu0 0
        %1863 = vmatpush1.bf16.msra.mxu0 0
        %1864 = vmatprep.subr.bf16.mxu0 0
        %1865 = vmatpush1.bf16.msra.mxu0 0
        %1866 = vmatprep.subr.bf16.mxu0 0
        %1867 = vmatpush1.bf16.msra.mxu0 0
        %1868 = vmatprep.subr.bf16.mxu0 0
        %1869 = vmatpush1.bf16.msra.mxu0 0
        %1870 = vmatprep.subr.bf16.mxu0 0
        %1871 = vmatpush1.bf16.msra.mxu0 0
        %1872 = vmatprep.subr.bf16.mxu0 0
        %1873 = vmatpush1.bf16.msra.mxu0 0
        %1874 = vmatprep.subr.bf16.mxu0 0
        %1875 = vmatpush1.bf16.msra.mxu0 0
        %1876 = vmatprep.subr.bf16.mxu0 0
        %1877 = vmatpush1.bf16.msra.mxu0 0
        %1878 = vmatprep.subr.bf16.mxu0 0
        %1879 = vmatpush1.bf16.msra.mxu0 0
        %1880 = vmatprep.subr.bf16.mxu0 0
        %1881 = vmatpush1.bf16.msra.mxu0 0
        %1882 = vmatprep.subr.bf16.mxu0 0
        %1883 = vmatpush1.bf16.msra.mxu0 0
        %1884 = vmatprep.subr.bf16.mxu0 0
        %1885 = vmatpush1.bf16.msra.mxu0 0
        %1886 = vmatprep.subr.bf16.mxu0 0
        %1887 = vmatpush1.bf16.msra.mxu0 0
        %1888 = vmatprep.mubr.bf16.mxu0 0
        %1889 = vmatmul.mubr.bf16.gmra.mrb[0].mxu0 %v1813
        %v1890 = vpop.f32.mrb[0].mxu0
        %v1891 = vadd.f32 %v618, %v1890
        %v1892 = vpop.f32.mrb[0].mxu0
        %v1893 = vpop.f32.mrb[0].mxu0
        %v1894 = vpop.f32.mrb[0].mxu0
        %1895 = vdwg.mxu0
        %v1896 = vpack.c.bf16 %v1716, %v1716
        %1897 = vmatprep.subr.bf16.mxu0 %v939
        %1898 = vmatpush1.bf16.msra.mxu0 %v938
        %1899 = vmatprep.subr.bf16.mxu0 %v942
        %1900 = vmatpush1.bf16.msra.mxu0 %v941
        %1901 = vmatprep.subr.bf16.mxu0 %v945
        %1902 = vmatpush1.bf16.msra.mxu0 %v944
        %1903 = vmatprep.subr.bf16.mxu0 %v948
        %1904 = vmatpush1.bf16.msra.mxu0 %v947
        %1905 = vmatprep.subr.bf16.mxu0 %v951
        %1906 = vmatpush1.bf16.msra.mxu0 %v950
        %1907 = vmatprep.subr.bf16.mxu0 %v954
        %1908 = vmatpush1.bf16.msra.mxu0 %v953
        %1909 = vmatprep.subr.bf16.mxu0 %v957
        %1910 = vmatpush1.bf16.msra.mxu0 %v956
        %1911 = vmatprep.subr.bf16.mxu0 %v960
        %1912 = vmatpush1.bf16.msra.mxu0 %v959
        %1913 = vmatprep.subr.bf16.mxu0 0
        %1914 = vmatpush1.bf16.msra.mxu0 0
        %1915 = vmatprep.subr.bf16.mxu0 0
        %1916 = vmatpush1.bf16.msra.mxu0 0
        %1917 = vmatprep.subr.bf16.mxu0 0
        %1918 = vmatpush1.bf16.msra.mxu0 0
        %1919 = vmatprep.subr.bf16.mxu0 0
        %1920 = vmatpush1.bf16.msra.mxu0 0
        %1921 = vmatprep.subr.bf16.mxu0 0
        %1922 = vmatpush1.bf16.msra.mxu0 0
        %1923 = vmatprep.subr.bf16.mxu0 0
        %1924 = vmatpush1.bf16.msra.mxu0 0
        %1925 = vmatprep.subr.bf16.mxu0 0
        %1926 = vmatpush1.bf16.msra.mxu0 0
        %1927 = vmatprep.subr.bf16.mxu0 0
        %1928 = vmatpush1.bf16.msra.mxu0 0
        %1929 = vmatprep.mubr.bf16.mxu0 0
        %1930 = vmatmul.mubr.bf16.gmra.mrb[0].mxu0 %v1896
        %v1931 = vpop.f32.mrb[0].mxu0
        %v1932 = vadd.f32 0.0, %v1931
        %v1933 = vpop.f32.mrb[0].mxu0
        %v1934 = vadd.f32 0.0, %v1933
        %v1935 = vpop.f32.mrb[0].mxu0
        %v1936 = vpop.f32.mrb[0].mxu0
        %1937 = vdwg.mxu0
        %1938 = vmatprep.subr.bf16.mxu0 0
        %1939 = vmatpush1.bf16.msra.mxu0 %v940
        %1940 = vmatprep.subr.bf16.mxu0 0
        %1941 = vmatpush1.bf16.msra.mxu0 %v943
        %1942 = vmatprep.subr.bf16.mxu0 0
        %1943 = vmatpush1.bf16.msra.mxu0 %v946
        %1944 = vmatprep.subr.bf16.mxu0 0
        %1945 = vmatpush1.bf16.msra.mxu0 %v949
        %1946 = vmatprep.subr.bf16.mxu0 0
        %1947 = vmatpush1.bf16.msra.mxu0 %v952
        %1948 = vmatprep.subr.bf16.mxu0 0
        %1949 = vmatpush1.bf16.msra.mxu0 %v955
        %1950 = vmatprep.subr.bf16.mxu0 0
        %1951 = vmatpush1.bf16.msra.mxu0 %v958
        %1952 = vmatprep.subr.bf16.mxu0 0
        %1953 = vmatpush1.bf16.msra.mxu0 %v961
        %1954 = vmatprep.subr.bf16.mxu0 0
        %1955 = vmatpush1.bf16.msra.mxu0 0
        %1956 = vmatprep.subr.bf16.mxu0 0
        %1957 = vmatpush1.bf16.msra.mxu0 0
        %1958 = vmatprep.subr.bf16.mxu0 0
        %1959 = vmatpush1.bf16.msra.mxu0 0
        %1960 = vmatprep.subr.bf16.mxu0 0
        %1961 = vmatpush1.bf16.msra.mxu0 0
        %1962 = vmatprep.subr.bf16.mxu0 0
        %1963 = vmatpush1.bf16.msra.mxu0 0
        %1964 = vmatprep.subr.bf16.mxu0 0
        %1965 = vmatpush1.bf16.msra.mxu0 0
        %1966 = vmatprep.subr.bf16.mxu0 0
        %1967 = vmatpush1.bf16.msra.mxu0 0
        %1968 = vmatprep.subr.bf16.mxu0 0
        %1969 = vmatpush1.bf16.msra.mxu0 0
        %1970 = vmatprep.mubr.bf16.mxu0 0
        %1971 = vmatmul.mubr.bf16.gmra.mrb[0].mxu0 %v1896
        %v1972 = vpop.f32.mrb[0].mxu0
        %v1973 = vadd.f32 0.0, %v1972
        %v1974 = vpop.f32.mrb[0].mxu0
        %v1975 = vpop.f32.mrb[0].mxu0
        %v1976 = vpop.f32.mrb[0].mxu0
        %1977 = vdwg.mxu0
        %v1978 = vadd.f32 %v1764, %v1932
        %v1979 = vxor.u32 %v1978, 2147483648
        %v1980 = vmul.f32 %v1979, 1.442695
        %v1981 = vpow.pop %v1980
        %v1982 = vadd.f32 %v1981, 1.0
        %v1983 = vrcp.pop %v1982
        %v1984 = vmul.f32 1.0, %v1983
        %v1985 = vadd.f32 %v1766, %v1934
        %v1986 = vxor.u32 %v1985, 2147483648
        %v1987 = vmul.f32 %v1986, 1.442695
        %v1988 = vpow.pop %v1987
        %v1989 = vadd.f32 %v1988, 1.0
        %v1990 = vrcp.pop %v1989
        %v1991 = vmul.f32 1.0, %v1990
        %v1992 = vadd.f32 %v1973, %v579
        %v1993 = vmul.f32 %v1984, %v1992
        %v1994 = vadd.f32 %v1805, %v1993
        %v1995 = vtanh.pop %v1994
        %v1996 = vsub.f32 %v1716, %v1995
        %v1997 = vmul.f32 %v1991, %v1996
        %v1998 = vadd.f32 %v1995, %v1997
        %v1999 = vpack.c.bf16 %v1723, %v1723
        %2000 = vmatprep.subr.bf16.mxu0 %v1169
        %2001 = vmatpush1.bf16.msra.mxu0 %v1168
        %2002 = vmatprep.subr.bf16.mxu0 %v1172
        %2003 = vmatpush1.bf16.msra.mxu0 %v1171
        %2004 = vmatprep.subr.bf16.mxu0 %v1175
        %2005 = vmatpush1.bf16.msra.mxu0 %v1174
        %2006 = vmatprep.subr.bf16.mxu0 %v1178
        %2007 = vmatpush1.bf16.msra.mxu0 %v1177
        %2008 = vmatprep.subr.bf16.mxu0 %v1181
        %2009 = vmatpush1.bf16.msra.mxu0 %v1180
        %2010 = vmatprep.subr.bf16.mxu0 %v1184
        %2011 = vmatpush1.bf16.msra.mxu0 %v1183
        %2012 = vmatprep.subr.bf16.mxu0 %v1187
        %2013 = vmatpush1.bf16.msra.mxu0 %v1186
        %2014 = vmatprep.subr.bf16.mxu0 %v1190
        %2015 = vmatpush1.bf16.msra.mxu0 %v1189
        %2016 = vmatprep.subr.bf16.mxu0 0
        %2017 = vmatpush1.bf16.msra.mxu0 0
        %2018 = vmatprep.subr.bf16.mxu0 0
        %2019 = vmatpush1.bf16.msra.mxu0 0
        %2020 = vmatprep.subr.bf16.mxu0 0
        %2021 = vmatpush1.bf16.msra.mxu0 0
        %2022 = vmatprep.subr.bf16.mxu0 0
        %2023 = vmatpush1.bf16.msra.mxu0 0
        %2024 = vmatprep.subr.bf16.mxu0 0
        %2025 = vmatpush1.bf16.msra.mxu0 0
        %2026 = vmatprep.subr.bf16.mxu0 0
        %2027 = vmatpush1.bf16.msra.mxu0 0
        %2028 = vmatprep.subr.bf16.mxu0 0
        %2029 = vmatpush1.bf16.msra.mxu0 0
        %2030 = vmatprep.subr.bf16.mxu0 0
        %2031 = vmatpush1.bf16.msra.mxu0 0
        %2032 = vmatprep.mubr.bf16.mxu0 0
        %2033 = vmatmul.mubr.bf16.gmra.mrb[0].mxu0 %v1999
        %v2034 = vpop.f32.mrb[0].mxu0
        %v2035 = vadd.f32 0.0, %v2034
        %v2036 = vpop.f32.mrb[0].mxu0
        %v2037 = vadd.f32 0.0, %v2036
        %v2038 = vpop.f32.mrb[0].mxu0
        %v2039 = vpop.f32.mrb[0].mxu0
        %2040 = vdwg.mxu0
        %2041 = vmatprep.subr.bf16.mxu0 0
        %2042 = vmatpush1.bf16.msra.mxu0 %v1170
        %2043 = vmatprep.subr.bf16.mxu0 0
        %2044 = vmatpush1.bf16.msra.mxu0 %v1173
        %2045 = vmatprep.subr.bf16.mxu0 0
        %2046 = vmatpush1.bf16.msra.mxu0 %v1176
        %2047 = vmatprep.subr.bf16.mxu0 0
        %2048 = vmatpush1.bf16.msra.mxu0 %v1179
        %2049 = vmatprep.subr.bf16.mxu0 0
        %2050 = vmatpush1.bf16.msra.mxu0 %v1182
        %2051 = vmatprep.subr.bf16.mxu0 0
        %2052 = vmatpush1.bf16.msra.mxu0 %v1185
        %2053 = vmatprep.subr.bf16.mxu0 0
        %2054 = vmatpush1.bf16.msra.mxu0 %v1188
        %2055 = vmatprep.subr.bf16.mxu0 0
        %2056 = vmatpush1.bf16.msra.mxu0 %v1191
        %2057 = vmatprep.subr.bf16.mxu0 0
        %2058 = vmatpush1.bf16.msra.mxu0 0
        %2059 = vmatprep.subr.bf16.mxu0 0
        %2060 = vmatpush1.bf16.msra.mxu0 0
        %2061 = vmatprep.subr.bf16.mxu0 0
        %2062 = vmatpush1.bf16.msra.mxu0 0
        %2063 = vmatprep.subr.bf16.mxu0 0
        %2064 = vmatpush1.bf16.msra.mxu0 0
        %2065 = vmatprep.subr.bf16.mxu0 0
        %2066 = vmatpush1.bf16.msra.mxu0 0
        %2067 = vmatprep.subr.bf16.mxu0 0
        %2068 = vmatpush1.bf16.msra.mxu0 0
        %2069 = vmatprep.subr.bf16.mxu0 0
        %2070 = vmatpush1.bf16.msra.mxu0 0
        %2071 = vmatprep.subr.bf16.mxu0 0
        %2072 = vmatpush1.bf16.msra.mxu0 0
        %2073 = vmatprep.mubr.bf16.mxu0 0
        %2074 = vmatmul.mubr.bf16.gmra.mrb[0].mxu0 %v1999
        %v2075 = vpop.f32.mrb[0].mxu0
        %v2076 = vadd.f32 0.0, %v2075
        %v2077 = vpop.f32.mrb[0].mxu0
        %v2078 = vpop.f32.mrb[0].mxu0
        %v2079 = vpop.f32.mrb[0].mxu0
        %2080 = vdwg.mxu0
        %v2081 = vadd.f32 %v1850, %v2035
        %v2082 = vxor.u32 %v2081, 2147483648
        %v2083 = vmul.f32 %v2082, 1.442695
        %v2084 = vpow.pop %v2083
        %v2085 = vadd.f32 %v2084, 1.0
        %v2086 = vrcp.pop %v2085
        %v2087 = vmul.f32 1.0, %v2086
        %v2088 = vadd.f32 %v1852, %v2037
        %v2089 = vxor.u32 %v2088, 2147483648
        %v2090 = vmul.f32 %v2089, 1.442695
        %v2091 = vpow.pop %v2090
        %v2092 = vadd.f32 %v2091, 1.0
        %v2093 = vrcp.pop %v2092
        %v2094 = vmul.f32 1.0, %v2093
        %v2095 = vadd.f32 %v2076, %v586
        %v2096 = vmul.f32 %v2087, %v2095
        %v2097 = vadd.f32 %v1891, %v2096
        %v2098 = vtanh.pop %v2097
        %v2099 = vsub.f32 %v1723, %v2098
        %v2100 = vmul.f32 %v2094, %v2099
        %v2101 = vadd.f32 %v2098, %v2100
        %vm2102 = vcmp.gt.s32.totalorder %v493, 2
        %v2103 = vsel %vm2102, 1, 0
        %2104 = vset.pattern.permute.xlu0 0
        %2105 = vperm.xlu0 %2104, %v2103
        %v2106 = vpop.permute.xlu0 %2105
        %vm2107 = vcmp.eq.s32.totalorder %v2106, 1
        %v2108 = vsel %vm2107, %v1998, %v1716
        %vm2109 = vcmp.gt.s32.totalorder %v493, 5
        %v2110 = vsel %vm2109, 1, 0
        %2111 = vset.pattern.permute.xlu0 0
        %2112 = vperm.xlu0 %2111, %v2110
        %v2113 = vpop.permute.xlu0 %2112
        %vm2114 = vcmp.eq.s32.totalorder %v2113, 1
        %v2115 = vsel %vm2114, %v2101, %v1723
        %s2116 = scalar_lea.vmem %s431, 12 [#allocation2]
        %v2117 = vld [vmem:[%s2116] sm:$0xf]
        %v2119 = vsel %vm655, %v2117, 0
        %2121 = vmatprep.subr.bf16.mxu0 %v644
        %2122 = vmatpush1.bf16.msra.mxu0 %v643
        %2123 = vmatprep.subr.bf16.mxu0 %v647
        %2124 = vmatpush1.bf16.msra.mxu0 %v646
        %2125 = vmatprep.subr.bf16.mxu0 0
        %2126 = vmatpush1.bf16.msra.mxu0 0
        %2127 = vmatprep.subr.bf16.mxu0 0
        %2128 = vmatpush1.bf16.msra.mxu0 0
        %2129 = vmatprep.subr.bf16.mxu0 0
        %2130 = vmatpush1.bf16.msra.mxu0 0
        %2131 = vmatprep.subr.bf16.mxu0 0
        %2132 = vmatpush1.bf16.msra.mxu0 0
        %2133 = vmatprep.subr.bf16.mxu0 0
        %2134 = vmatpush1.bf16.msra.mxu0 0
        %2135 = vmatprep.subr.bf16.mxu0 0
        %2136 = vmatpush1.bf16.msra.mxu0 0
        %2137 = vmatprep.subr.bf16.mxu0 0
        %2138 = vmatpush1.bf16.msra.mxu0 0
        %2139 = vmatprep.subr.bf16.mxu0 0
        %2140 = vmatpush1.bf16.msra.mxu0 0
        %2141 = vmatprep.subr.bf16.mxu0 0
        %2142 = vmatpush1.bf16.msra.mxu0 0
        %2143 = vmatprep.subr.bf16.mxu0 0
        %2144 = vmatpush1.bf16.msra.mxu0 0
        %2145 = vmatprep.subr.bf16.mxu0 0
        %2146 = vmatpush1.bf16.msra.mxu0 0
        %2147 = vmatprep.subr.bf16.mxu0 0
        %2148 = vmatpush1.bf16.msra.mxu0 0
        %2149 = vmatprep.subr.bf16.mxu0 0
        %2150 = vmatpush1.bf16.msra.mxu0 0
        %2151 = vmatprep.subr.bf16.mxu0 0
        %2152 = vmatpush1.bf16.msra.mxu0 0
        %2153 = vmatprep.mubr.bf16.mxu0 0
        %2154 = vmatmul.mubr.bf16.gmra.mrb[0].mxu0 %v2119
        %v2155 = vpop.f32.mrb[0].mxu0
        %v2156 = vadd.f32 %v593, %v2155
        %v2157 = vpop.f32.mrb[0].mxu0
        %v2158 = vadd.f32 %v597, %v2157
        %v2159 = vpop.f32.mrb[0].mxu0
        %v2160 = vpop.f32.mrb[0].mxu0
        %2161 = vdwg.mxu0
        %2162 = vmatprep.subr.bf16.mxu0 0
        %2163 = vmatpush1.bf16.msra.mxu0 %v645
        %2164 = vmatprep.subr.bf16.mxu0 0
        %2165 = vmatpush1.bf16.msra.mxu0 %v648
        %2166 = vmatprep.subr.bf16.mxu0 0
        %2167 = vmatpush1.bf16.msra.mxu0 0
        %2168 = vmatprep.subr.bf16.mxu0 0
        %2169 = vmatpush1.bf16.msra.mxu0 0
        %2170 = vmatprep.subr.bf16.mxu0 0
        %2171 = vmatpush1.bf16.msra.mxu0 0
        %2172 = vmatprep.subr.bf16.mxu0 0
        %2173 = vmatpush1.bf16.msra.mxu0 0
        %2174 = vmatprep.subr.bf16.mxu0 0
        %2175 = vmatpush1.bf16.msra.mxu0 0
        %2176 = vmatprep.subr.bf16.mxu0 0
        %2177 = vmatpush1.bf16.msra.mxu0 0
        %2178 = vmatprep.subr.bf16.mxu0 0
        %2179 = vmatpush1.bf16.msra.mxu0 0
        %2180 = vmatprep.subr.bf16.mxu0 0
        %2181 = vmatpush1.bf16.msra.mxu0 0
        %2182 = vmatprep.subr.bf16.mxu0 0
        %2183 = vmatpush1.bf16.msra.mxu0 0
        %2184 = vmatprep.subr.bf16.mxu0 0
        %2185 = vmatpush1.bf16.msra.mxu0 0
        %2186 = vmatprep.subr.bf16.mxu0 0
        %2187 = vmatpush1.bf16.msra.mxu0 0
        %2188 = vmatprep.subr.bf16.mxu0 0
        %2189 = vmatpush1.bf16.msra.mxu0 0
        %2190 = vmatprep.subr.bf16.mxu0 0
        %2191 = vmatpush1.bf16.msra.mxu0 0
        %2192 = vmatprep.subr.bf16.mxu0 0
        %2193 = vmatpush1.bf16.msra.mxu0 0
        %2194 = vmatprep.mubr.bf16.mxu0 0
        %2195 = vmatmul.mubr.bf16.gmra.mrb[0].mxu0 %v2119
        %v2196 = vpop.f32.mrb[0].mxu0
        %v2197 = vadd.f32 %v601, %v2196
        %v2198 = vpop.f32.mrb[0].mxu0
        %v2199 = vpop.f32.mrb[0].mxu0
        %v2200 = vpop.f32.mrb[0].mxu0
        %2201 = vdwg.mxu0
        %s2202 = scalar_lea.vmem %s431, 16 [#allocation2]
        %v2203 = vld [vmem:[%s2202] sm:$0xf]
        %v2205 = vsel %vm655, %v2203, 0
        %2207 = vmatprep.subr.bf16.mxu0 %v763
        %2208 = vmatpush1.bf16.msra.mxu0 %v762
        %2209 = vmatprep.subr.bf16.mxu0 %v766
        %2210 = vmatpush1.bf16.msra.mxu0 %v765
        %2211 = vmatprep.subr.bf16.mxu0 0
        %2212 = vmatpush1.bf16.msra.mxu0 0
        %2213 = vmatprep.subr.bf16.mxu0 0
        %2214 = vmatpush1.bf16.msra.mxu0 0
        %2215 = vmatprep.subr.bf16.mxu0 0
        %2216 = vmatpush1.bf16.msra.mxu0 0
        %2217 = vmatprep.subr.bf16.mxu0 0
        %2218 = vmatpush1.bf16.msra.mxu0 0
        %2219 = vmatprep.subr.bf16.mxu0 0
        %2220 = vmatpush1.bf16.msra.mxu0 0
        %2221 = vmatprep.subr.bf16.mxu0 0
        %2222 = vmatpush1.bf16.msra.mxu0 0
        %2223 = vmatprep.subr.bf16.mxu0 0
        %2224 = vmatpush1.bf16.msra.mxu0 0
        %2225 = vmatprep.subr.bf16.mxu0 0
        %2226 = vmatpush1.bf16.msra.mxu0 0
        %2227 = vmatprep.subr.bf16.mxu0 0
        %2228 = vmatpush1.bf16.msra.mxu0 0
        %2229 = vmatprep.subr.bf16.mxu0 0
        %2230 = vmatpush1.bf16.msra.mxu0 0
        %2231 = vmatprep.subr.bf16.mxu0 0
        %2232 = vmatpush1.bf16.msra.mxu0 0
        %2233 = vmatprep.subr.bf16.mxu0 0
        %2234 = vmatpush1.bf16.msra.mxu0 0
        %2235 = vmatprep.subr.bf16.mxu0 0
        %2236 = vmatpush1.bf16.msra.mxu0 0
        %2237 = vmatprep.subr.bf16.mxu0 0
        %2238 = vmatpush1.bf16.msra.mxu0 0
        %2239 = vmatprep.mubr.bf16.mxu0 0
        %2240 = vmatmul.mubr.bf16.gmra.mrb[0].mxu0 %v2205
        %v2241 = vpop.f32.mrb[0].mxu0
        %v2242 = vadd.f32 %v610, %v2241
        %v2243 = vpop.f32.mrb[0].mxu0
        %v2244 = vadd.f32 %v614, %v2243
        %v2245 = vpop.f32.mrb[0].mxu0
        %v2246 = vpop.f32.mrb[0].mxu0
        %2247 = vdwg.mxu0
        %2248 = vmatprep.subr.bf16.mxu0 0
        %2249 = vmatpush1.bf16.msra.mxu0 %v764
        %2250 = vmatprep.subr.bf16.mxu0 0
        %2251 = vmatpush1.bf16.msra.mxu0 %v767
        %2252 = vmatprep.subr.bf16.mxu0 0
        %2253 = vmatpush1.bf16.msra.mxu0 0
        %2254 = vmatprep.subr.bf16.mxu0 0
        %2255 = vmatpush1.bf16.msra.mxu0 0
        %2256 = vmatprep.subr.bf16.mxu0 0
        %2257 = vmatpush1.bf16.msra.mxu0 0
        %2258 = vmatprep.subr.bf16.mxu0 0
        %2259 = vmatpush1.bf16.msra.mxu0 0
        %2260 = vmatprep.subr.bf16.mxu0 0
        %2261 = vmatpush1.bf16.msra.mxu0 0
        %2262 = vmatprep.subr.bf16.mxu0 0
        %2263 = vmatpush1.bf16.msra.mxu0 0
        %2264 = vmatprep.subr.bf16.mxu0 0
        %2265 = vmatpush1.bf16.msra.mxu0 0
        %2266 = vmatprep.subr.bf16.mxu0 0
        %2267 = vmatpush1.bf16.msra.mxu0 0
        %2268 = vmatprep.subr.bf16.mxu0 0
        %2269 = vmatpush1.bf16.msra.mxu0 0
        %2270 = vmatprep.subr.bf16.mxu0 0
        %2271 = vmatpush1.bf16.msra.mxu0 0
        %2272 = vmatprep.subr.bf16.mxu0 0
        %2273 = vmatpush1.bf16.msra.mxu0 0
        %2274 = vmatprep.subr.bf16.mxu0 0
        %2275 = vmatpush1.bf16.msra.mxu0 0
        %2276 = vmatprep.subr.bf16.mxu0 0
        %2277 = vmatpush1.bf16.msra.mxu0 0
        %2278 = vmatprep.subr.bf16.mxu0 0
        %2279 = vmatpush1.bf16.msra.mxu0 0
        %2280 = vmatprep.mubr.bf16.mxu0 0
        %2281 = vmatmul.mubr.bf16.gmra.mrb[0].mxu0 %v2205
        %v2282 = vpop.f32.mrb[0].mxu0
        %v2283 = vadd.f32 %v618, %v2282
        %v2284 = vpop.f32.mrb[0].mxu0
        %v2285 = vpop.f32.mrb[0].mxu0
        %v2286 = vpop.f32.mrb[0].mxu0
        %2287 = vdwg.mxu0
        %v2288 = vpack.c.bf16 %v2108, %v2108
        %2289 = vmatprep.subr.bf16.mxu0 %v939
        %2290 = vmatpush1.bf16.msra.mxu0 %v938
        %2291 = vmatprep.subr.bf16.mxu0 %v942
        %2292 = vmatpush1.bf16.msra.mxu0 %v941
        %2293 = vmatprep.subr.bf16.mxu0 %v945
        %2294 = vmatpush1.bf16.msra.mxu0 %v944
        %2295 = vmatprep.subr.bf16.mxu0 %v948
        %2296 = vmatpush1.bf16.msra.mxu0 %v947
        %2297 = vmatprep.subr.bf16.mxu0 %v951
        %2298 = vmatpush1.bf16.msra.mxu0 %v950
        %2299 = vmatprep.subr.bf16.mxu0 %v954
        %2300 = vmatpush1.bf16.msra.mxu0 %v953
        %2301 = vmatprep.subr.bf16.mxu0 %v957
        %2302 = vmatpush1.bf16.msra.mxu0 %v956
        %2303 = vmatprep.subr.bf16.mxu0 %v960
        %2304 = vmatpush1.bf16.msra.mxu0 %v959
        %2305 = vmatprep.subr.bf16.mxu0 0
        %2306 = vmatpush1.bf16.msra.mxu0 0
        %2307 = vmatprep.subr.bf16.mxu0 0
        %2308 = vmatpush1.bf16.msra.mxu0 0
        %2309 = vmatprep.subr.bf16.mxu0 0
        %2310 = vmatpush1.bf16.msra.mxu0 0
        %2311 = vmatprep.subr.bf16.mxu0 0
        %2312 = vmatpush1.bf16.msra.mxu0 0
        %2313 = vmatprep.subr.bf16.mxu0 0
        %2314 = vmatpush1.bf16.msra.mxu0 0
        %2315 = vmatprep.subr.bf16.mxu0 0
        %2316 = vmatpush1.bf16.msra.mxu0 0
        %2317 = vmatprep.subr.bf16.mxu0 0
        %2318 = vmatpush1.bf16.msra.mxu0 0
        %2319 = vmatprep.subr.bf16.mxu0 0
        %2320 = vmatpush1.bf16.msra.mxu0 0
        %2321 = vmatprep.mubr.bf16.mxu0 0
        %2322 = vmatmul.mubr.bf16.gmra.mrb[0].mxu0 %v2288
        %v2323 = vpop.f32.mrb[0].mxu0
        %v2324 = vadd.f32 0.0, %v2323
        %v2325 = vpop.f32.mrb[0].mxu0
        %v2326 = vadd.f32 0.0, %v2325
        %v2327 = vpop.f32.mrb[0].mxu0
        %v2328 = vpop.f32.mrb[0].mxu0
        %2329 = vdwg.mxu0
        %2330 = vmatprep.subr.bf16.mxu0 0
        %2331 = vmatpush1.bf16.msra.mxu0 %v940
        %2332 = vmatprep.subr.bf16.mxu0 0
        %2333 = vmatpush1.bf16.msra.mxu0 %v943
        %2334 = vmatprep.subr.bf16.mxu0 0
        %2335 = vmatpush1.bf16.msra.mxu0 %v946
        %2336 = vmatprep.subr.bf16.mxu0 0
        %2337 = vmatpush1.bf16.msra.mxu0 %v949
        %2338 = vmatprep.subr.bf16.mxu0 0
        %2339 = vmatpush1.bf16.msra.mxu0 %v952
        %2340 = vmatprep.subr.bf16.mxu0 0
        %2341 = vmatpush1.bf16.msra.mxu0 %v955
        %2342 = vmatprep.subr.bf16.mxu0 0
        %2343 = vmatpush1.bf16.msra.mxu0 %v958
        %2344 = vmatprep.subr.bf16.mxu0 0
        %2345 = vmatpush1.bf16.msra.mxu0 %v961
        %2346 = vmatprep.subr.bf16.mxu0 0
        %2347 = vmatpush1.bf16.msra.mxu0 0
        %2348 = vmatprep.subr.bf16.mxu0 0
        %2349 = vmatpush1.bf16.msra.mxu0 0
        %2350 = vmatprep.subr.bf16.mxu0 0
        %2351 = vmatpush1.bf16.msra.mxu0 0
        %2352 = vmatprep.subr.bf16.mxu0 0
        %2353 = vmatpush1.bf16.msra.mxu0 0
        %2354 = vmatprep.subr.bf16.mxu0 0
        %2355 = vmatpush1.bf16.msra.mxu0 0
        %2356 = vmatprep.subr.bf16.mxu0 0
        %2357 = vmatpush1.bf16.msra.mxu0 0
        %2358 = vmatprep.subr.bf16.mxu0 0
        %2359 = vmatpush1.bf16.msra.mxu0 0
        %2360 = vmatprep.subr.bf16.mxu0 0
        %2361 = vmatpush1.bf16.msra.mxu0 0
        %2362 = vmatprep.mubr.bf16.mxu0 0
        %2363 = vmatmul.mubr.bf16.gmra.mrb[0].mxu0 %v2288
        %v2364 = vpop.f32.mrb[0].mxu0
        %v2365 = vadd.f32 0.0, %v2364
        %v2366 = vpop.f32.mrb[0].mxu0
        %v2367 = vpop.f32.mrb[0].mxu0
        %v2368 = vpop.f32.mrb[0].mxu0
        %2369 = vdwg.mxu0
        %v2370 = vadd.f32 %v2156, %v2324
        %v2371 = vxor.u32 %v2370, 2147483648
        %v2372 = vmul.f32 %v2371, 1.442695
        %v2373 = vpow.pop %v2372
        %v2374 = vadd.f32 %v2373, 1.0
        %v2375 = vrcp.pop %v2374
        %v2376 = vmul.f32 1.0, %v2375
        %v2377 = vadd.f32 %v2158, %v2326
        %v2378 = vxor.u32 %v2377, 2147483648
        %v2379 = vmul.f32 %v2378, 1.442695
        %v2380 = vpow.pop %v2379
        %v2381 = vadd.f32 %v2380, 1.0
        %v2382 = vrcp.pop %v2381
        %v2383 = vmul.f32 1.0, %v2382
        %v2384 = vadd.f32 %v2365, %v579
        %v2385 = vmul.f32 %v2376, %v2384
        %v2386 = vadd.f32 %v2197, %v2385
        %v2387 = vtanh.pop %v2386
        %v2388 = vsub.f32 %v2108, %v2387
        %v2389 = vmul.f32 %v2383, %v2388
        %v2390 = vadd.f32 %v2387, %v2389
        %v2391 = vpack.c.bf16 %v2115, %v2115
        %2392 = vmatprep.subr.bf16.mxu0 %v1169
        %2393 = vmatpush1.bf16.msra.mxu0 %v1168
        %2394 = vmatprep.subr.bf16.mxu0 %v1172
        %2395 = vmatpush1.bf16.msra.mxu0 %v1171
        %2396 = vmatprep.subr.bf16.mxu0 %v1175
        %2397 = vmatpush1.bf16.msra.mxu0 %v1174
        %2398 = vmatprep.subr.bf16.mxu0 %v1178
        %2399 = vmatpush1.bf16.msra.mxu0 %v1177
        %2400 = vmatprep.subr.bf16.mxu0 %v1181
        %2401 = vmatpush1.bf16.msra.mxu0 %v1180
        %2402 = vmatprep.subr.bf16.mxu0 %v1184
        %2403 = vmatpush1.bf16.msra.mxu0 %v1183
        %2404 = vmatprep.subr.bf16.mxu0 %v1187
        %2405 = vmatpush1.bf16.msra.mxu0 %v1186
        %2406 = vmatprep.subr.bf16.mxu0 %v1190
        %2407 = vmatpush1.bf16.msra.mxu0 %v1189
        %2408 = vmatprep.subr.bf16.mxu0 0
        %2409 = vmatpush1.bf16.msra.mxu0 0
        %2410 = vmatprep.subr.bf16.mxu0 0
        %2411 = vmatpush1.bf16.msra.mxu0 0
        %2412 = vmatprep.subr.bf16.mxu0 0
        %2413 = vmatpush1.bf16.msra.mxu0 0
        %2414 = vmatprep.subr.bf16.mxu0 0
        %2415 = vmatpush1.bf16.msra.mxu0 0
        %2416 = vmatprep.subr.bf16.mxu0 0
        %2417 = vmatpush1.bf16.msra.mxu0 0
        %2418 = vmatprep.subr.bf16.mxu0 0
        %2419 = vmatpush1.bf16.msra.mxu0 0
        %2420 = vmatprep.subr.bf16.mxu0 0
        %2421 = vmatpush1.bf16.msra.mxu0 0
        %2422 = vmatprep.subr.bf16.mxu0 0
        %2423 = vmatpush1.bf16.msra.mxu0 0
        %2424 = vmatprep.mubr.bf16.mxu0 0
        %2425 = vmatmul.mubr.bf16.gmra.mrb[0].mxu0 %v2391
        %v2426 = vpop.f32.mrb[0].mxu0
        %v2427 = vadd.f32 0.0, %v2426
        %v2428 = vpop.f32.mrb[0].mxu0
        %v2429 = vadd.f32 0.0, %v2428
        %v2430 = vpop.f32.mrb[0].mxu0
        %v2431 = vpop.f32.mrb[0].mxu0
        %2432 = vdwg.mxu0
        %2433 = vmatprep.subr.bf16.mxu0 0
        %2434 = vmatpush1.bf16.msra.mxu0 %v1170
        %2435 = vmatprep.subr.bf16.mxu0 0
        %2436 = vmatpush1.bf16.msra.mxu0 %v1173
        %2437 = vmatprep.subr.bf16.mxu0 0
        %2438 = vmatpush1.bf16.msra.mxu0 %v1176
        %2439 = vmatprep.subr.bf16.mxu0 0
        %2440 = vmatpush1.bf16.msra.mxu0 %v1179
        %2441 = vmatprep.subr.bf16.mxu0 0
        %2442 = vmatpush1.bf16.msra.mxu0 %v1182
        %2443 = vmatprep.subr.bf16.mxu0 0
        %2444 = vmatpush1.bf16.msra.mxu0 %v1185
        %2445 = vmatprep.subr.bf16.mxu0 0
        %2446 = vmatpush1.bf16.msra.mxu0 %v1188
        %2447 = vmatprep.subr.bf16.mxu0 0
        %2448 = vmatpush1.bf16.msra.mxu0 %v1191
        %2449 = vmatprep.subr.bf16.mxu0 0
        %2450 = vmatpush1.bf16.msra.mxu0 0
        %2451 = vmatprep.subr.bf16.mxu0 0
        %2452 = vmatpush1.bf16.msra.mxu0 0
        %2453 = vmatprep.subr.bf16.mxu0 0
        %2454 = vmatpush1.bf16.msra.mxu0 0
        %2455 = vmatprep.subr.bf16.mxu0 0
        %2456 = vmatpush1.bf16.msra.mxu0 0
        %2457 = vmatprep.subr.bf16.mxu0 0
        %2458 = vmatpush1.bf16.msra.mxu0 0
        %2459 = vmatprep.subr.bf16.mxu0 0
        %2460 = vmatpush1.bf16.msra.mxu0 0
        %2461 = vmatprep.subr.bf16.mxu0 0
        %2462 = vmatpush1.bf16.msra.mxu0 0
        %2463 = vmatprep.subr.bf16.mxu0 0
        %2464 = vmatpush1.bf16.msra.mxu0 0
        %2465 = vmatprep.mubr.bf16.mxu0 0
        %2466 = vmatmul.mubr.bf16.gmra.mrb[0].mxu0 %v2391
        %v2467 = vpop.f32.mrb[0].mxu0
        %v2468 = vadd.f32 0.0, %v2467
        %v2469 = vpop.f32.mrb[0].mxu0
        %v2470 = vpop.f32.mrb[0].mxu0
        %v2471 = vpop.f32.mrb[0].mxu0
        %2472 = vdwg.mxu0
        %v2473 = vadd.f32 %v2242, %v2427
        %v2474 = vxor.u32 %v2473, 2147483648
        %v2475 = vmul.f32 %v2474, 1.442695
        %v2476 = vpow.pop %v2475
        %v2477 = vadd.f32 %v2476, 1.0
        %v2478 = vrcp.pop %v2477
        %v2479 = vmul.f32 1.0, %v2478
        %v2480 = vadd.f32 %v2244, %v2429
        %v2481 = vxor.u32 %v2480, 2147483648
        %v2482 = vmul.f32 %v2481, 1.442695
        %v2483 = vpow.pop %v2482
        %v2484 = vadd.f32 %v2483, 1.0
        %v2485 = vrcp.pop %v2484
        %v2486 = vmul.f32 1.0, %v2485
        %v2487 = vadd.f32 %v2468, %v586
        %v2488 = vmul.f32 %v2479, %v2487
        %v2489 = vadd.f32 %v2283, %v2488
        %v2490 = vtanh.pop %v2489
        %v2491 = vsub.f32 %v2115, %v2490
        %v2492 = vmul.f32 %v2486, %v2491
        %v2493 = vadd.f32 %v2490, %v2492
        %vm2494 = vcmp.gt.s32.totalorder %v493, 3
        %v2495 = vsel %vm2494, 1, 0
        %2496 = vset.pattern.permute.xlu0 0
        %2497 = vperm.xlu0 %2496, %v2495
        %v2498 = vpop.permute.xlu0 %2497
        %vm2499 = vcmp.eq.s32.totalorder %v2498, 1
        %v2500 = vsel %vm2499, %v2390, %v2108
        %vm2501 = vcmp.gt.s32.totalorder %v493, 4
        %v2502 = vsel %vm2501, 1, 0
        %2503 = vset.pattern.permute.xlu0 0
        %2504 = vperm.xlu0 %2503, %v2502
        %v2505 = vpop.permute.xlu0 %2504
        %vm2506 = vcmp.eq.s32.totalorder %v2505, 1
        %v2507 = vsel %vm2506, %v2493, %v2115
        %2508 = vmatprep.subr.bf16.mxu0 %v644
        %2509 = vmatpush1.bf16.msra.mxu0 %v643
        %2510 = vmatprep.subr.bf16.mxu0 %v647
        %2511 = vmatpush1.bf16.msra.mxu0 %v646
        %2512 = vmatprep.subr.bf16.mxu0 0
        %2513 = vmatpush1.bf16.msra.mxu0 0
        %2514 = vmatprep.subr.bf16.mxu0 0
        %2515 = vmatpush1.bf16.msra.mxu0 0
        %2516 = vmatprep.subr.bf16.mxu0 0
        %2517 = vmatpush1.bf16.msra.mxu0 0
        %2518 = vmatprep.subr.bf16.mxu0 0
        %2519 = vmatpush1.bf16.msra.mxu0 0
        %2520 = vmatprep.subr.bf16.mxu0 0
        %2521 = vmatpush1.bf16.msra.mxu0 0
        %2522 = vmatprep.subr.bf16.mxu0 0
        %2523 = vmatpush1.bf16.msra.mxu0 0
        %2524 = vmatprep.subr.bf16.mxu0 0
        %2525 = vmatpush1.bf16.msra.mxu0 0
        %2526 = vmatprep.subr.bf16.mxu0 0
        %2527 = vmatpush1.bf16.msra.mxu0 0
        %2528 = vmatprep.subr.bf16.mxu0 0
        %2529 = vmatpush1.bf16.msra.mxu0 0
        %2530 = vmatprep.subr.bf16.mxu0 0
        %2531 = vmatpush1.bf16.msra.mxu0 0
        %2532 = vmatprep.subr.bf16.mxu0 0
        %2533 = vmatpush1.bf16.msra.mxu0 0
        %2534 = vmatprep.subr.bf16.mxu0 0
        %2535 = vmatpush1.bf16.msra.mxu0 0
        %2536 = vmatprep.subr.bf16.mxu0 0
        %2537 = vmatpush1.bf16.msra.mxu0 0
        %2538 = vmatprep.subr.bf16.mxu0 0
        %2539 = vmatpush1.bf16.msra.mxu0 0
        %2540 = vmatprep.mubr.bf16.mxu0 0
        %2541 = vmatmul.mubr.bf16.gmra.mrb[0].mxu0 %v2205
        %v2542 = vpop.f32.mrb[0].mxu0
        %v2543 = vadd.f32 %v593, %v2542
        %v2544 = vpop.f32.mrb[0].mxu0
        %v2545 = vadd.f32 %v597, %v2544
        %v2546 = vpop.f32.mrb[0].mxu0
        %v2547 = vpop.f32.mrb[0].mxu0
        %2548 = vdwg.mxu0
        %2549 = vmatprep.subr.bf16.mxu0 0
        %2550 = vmatpush1.bf16.msra.mxu0 %v645
        %2551 = vmatprep.subr.bf16.mxu0 0
        %2552 = vmatpush1.bf16.msra.mxu0 %v648
        %2553 = vmatprep.subr.bf16.mxu0 0
        %2554 = vmatpush1.bf16.msra.mxu0 0
        %2555 = vmatprep.subr.bf16.mxu0 0
        %2556 = vmatpush1.bf16.msra.mxu0 0
        %2557 = vmatprep.subr.bf16.mxu0 0
        %2558 = vmatpush1.bf16.msra.mxu0 0
        %2559 = vmatprep.subr.bf16.mxu0 0
        %2560 = vmatpush1.bf16.msra.mxu0 0
        %2561 = vmatprep.subr.bf16.mxu0 0
        %2562 = vmatpush1.bf16.msra.mxu0 0
        %2563 = vmatprep.subr.bf16.mxu0 0
        %2564 = vmatpush1.bf16.msra.mxu0 0
        %2565 = vmatprep.subr.bf16.mxu0 0
        %2566 = vmatpush1.bf16.msra.mxu0 0
        %2567 = vmatprep.subr.bf16.mxu0 0
        %2568 = vmatpush1.bf16.msra.mxu0 0
        %2569 = vmatprep.subr.bf16.mxu0 0
        %2570 = vmatpush1.bf16.msra.mxu0 0
        %2571 = vmatprep.subr.bf16.mxu0 0
        %2572 = vmatpush1.bf16.msra.mxu0 0
        %2573 = vmatprep.subr.bf16.mxu0 0
        %2574 = vmatpush1.bf16.msra.mxu0 0
        %2575 = vmatprep.subr.bf16.mxu0 0
        %2576 = vmatpush1.bf16.msra.mxu0 0
        %2577 = vmatprep.subr.bf16.mxu0 0
        %2578 = vmatpush1.bf16.msra.mxu0 0
        %2579 = vmatprep.subr.bf16.mxu0 0
        %2580 = vmatpush1.bf16.msra.mxu0 0
        %2581 = vmatprep.mubr.bf16.mxu0 0
        %2582 = vmatmul.mubr.bf16.gmra.mrb[0].mxu0 %v2205
        %v2583 = vpop.f32.mrb[0].mxu0
        %v2584 = vadd.f32 %v601, %v2583
        %v2585 = vpop.f32.mrb[0].mxu0
        %v2586 = vpop.f32.mrb[0].mxu0
        %v2587 = vpop.f32.mrb[0].mxu0
        %2588 = vdwg.mxu0
        %2589 = vmatprep.subr.bf16.mxu0 %v763
        %2590 = vmatpush1.bf16.msra.mxu0 %v762
        %2591 = vmatprep.subr.bf16.mxu0 %v766
        %2592 = vmatpush1.bf16.msra.mxu0 %v765
        %2593 = vmatprep.subr.bf16.mxu0 0
        %2594 = vmatpush1.bf16.msra.mxu0 0
        %2595 = vmatprep.subr.bf16.mxu0 0
        %2596 = vmatpush1.bf16.msra.mxu0 0
        %2597 = vmatprep.subr.bf16.mxu0 0
        %2598 = vmatpush1.bf16.msra.mxu0 0
        %2599 = vmatprep.subr.bf16.mxu0 0
        %2600 = vmatpush1.bf16.msra.mxu0 0
        %2601 = vmatprep.subr.bf16.mxu0 0
        %2602 = vmatpush1.bf16.msra.mxu0 0
        %2603 = vmatprep.subr.bf16.mxu0 0
        %2604 = vmatpush1.bf16.msra.mxu0 0
        %2605 = vmatprep.subr.bf16.mxu0 0
        %2606 = vmatpush1.bf16.msra.mxu0 0
        %2607 = vmatprep.subr.bf16.mxu0 0
        %2608 = vmatpush1.bf16.msra.mxu0 0
        %2609 = vmatprep.subr.bf16.mxu0 0
        %2610 = vmatpush1.bf16.msra.mxu0 0
        %2611 = vmatprep.subr.bf16.mxu0 0
        %2612 = vmatpush1.bf16.msra.mxu0 0
        %2613 = vmatprep.subr.bf16.mxu0 0
        %2614 = vmatpush1.bf16.msra.mxu0 0
        %2615 = vmatprep.subr.bf16.mxu0 0
        %2616 = vmatpush1.bf16.msra.mxu0 0
        %2617 = vmatprep.subr.bf16.mxu0 0
        %2618 = vmatpush1.bf16.msra.mxu0 0
        %2619 = vmatprep.subr.bf16.mxu0 0
        %2620 = vmatpush1.bf16.msra.mxu0 0
        %2621 = vmatprep.mubr.bf16.mxu0 0
        %2622 = vmatmul.mubr.bf16.gmra.mrb[0].mxu0 %v2119
        %v2623 = vpop.f32.mrb[0].mxu0
        %v2624 = vadd.f32 %v610, %v2623
        %v2625 = vpop.f32.mrb[0].mxu0
        %v2626 = vadd.f32 %v614, %v2625
        %v2627 = vpop.f32.mrb[0].mxu0
        %v2628 = vpop.f32.mrb[0].mxu0
        %2629 = vdwg.mxu0
        %2630 = vmatprep.subr.bf16.mxu0 0
        %2631 = vmatpush1.bf16.msra.mxu0 %v764
        %2632 = vmatprep.subr.bf16.mxu0 0
        %2633 = vmatpush1.bf16.msra.mxu0 %v767
        %2634 = vmatprep.subr.bf16.mxu0 0
        %2635 = vmatpush1.bf16.msra.mxu0 0
        %2636 = vmatprep.subr.bf16.mxu0 0
        %2637 = vmatpush1.bf16.msra.mxu0 0
        %2638 = vmatprep.subr.bf16.mxu0 0
        %2639 = vmatpush1.bf16.msra.mxu0 0
        %2640 = vmatprep.subr.bf16.mxu0 0
        %2641 = vmatpush1.bf16.msra.mxu0 0
        %2642 = vmatprep.subr.bf16.mxu0 0
        %2643 = vmatpush1.bf16.msra.mxu0 0
        %2644 = vmatprep.subr.bf16.mxu0 0
        %2645 = vmatpush1.bf16.msra.mxu0 0
        %2646 = vmatprep.subr.bf16.mxu0 0
        %2647 = vmatpush1.bf16.msra.mxu0 0
        %2648 = vmatprep.subr.bf16.mxu0 0
        %2649 = vmatpush1.bf16.msra.mxu0 0
        %2650 = vmatprep.subr.bf16.mxu0 0
        %2651 = vmatpush1.bf16.msra.mxu0 0
        %2652 = vmatprep.subr.bf16.mxu0 0
        %2653 = vmatpush1.bf16.msra.mxu0 0
        %2654 = vmatprep.subr.bf16.mxu0 0
        %2655 = vmatpush1.bf16.msra.mxu0 0
        %2656 = vmatprep.subr.bf16.mxu0 0
        %2657 = vmatpush1.bf16.msra.mxu0 0
        %2658 = vmatprep.subr.bf16.mxu0 0
        %2659 = vmatpush1.bf16.msra.mxu0 0
        %2660 = vmatprep.subr.bf16.mxu0 0
        %2661 = vmatpush1.bf16.msra.mxu0 0
        %2662 = vmatprep.mubr.bf16.mxu0 0
        %2663 = vmatmul.mubr.bf16.gmra.mrb[0].mxu0 %v2119
        %v2664 = vpop.f32.mrb[0].mxu0
        %v2665 = vadd.f32 %v618, %v2664
        %v2666 = vpop.f32.mrb[0].mxu0
        %v2667 = vpop.f32.mrb[0].mxu0
        %v2668 = vpop.f32.mrb[0].mxu0
        %2669 = vdwg.mxu0
        %v2670 = vpack.c.bf16 %v2500, %v2500
        %2671 = vmatprep.subr.bf16.mxu0 %v939
        %2672 = vmatpush1.bf16.msra.mxu0 %v938
        %2673 = vmatprep.subr.bf16.mxu0 %v942
        %2674 = vmatpush1.bf16.msra.mxu0 %v941
        %2675 = vmatprep.subr.bf16.mxu0 %v945
        %2676 = vmatpush1.bf16.msra.mxu0 %v944
        %2677 = vmatprep.subr.bf16.mxu0 %v948
        %2678 = vmatpush1.bf16.msra.mxu0 %v947
        %2679 = vmatprep.subr.bf16.mxu0 %v951
        %2680 = vmatpush1.bf16.msra.mxu0 %v950
        %2681 = vmatprep.subr.bf16.mxu0 %v954
        %2682 = vmatpush1.bf16.msra.mxu0 %v953
        %2683 = vmatprep.subr.bf16.mxu0 %v957
        %2684 = vmatpush1.bf16.msra.mxu0 %v956
        %2685 = vmatprep.subr.bf16.mxu0 %v960
        %2686 = vmatpush1.bf16.msra.mxu0 %v959
        %2687 = vmatprep.subr.bf16.mxu0 0
        %2688 = vmatpush1.bf16.msra.mxu0 0
        %2689 = vmatprep.subr.bf16.mxu0 0
        %2690 = vmatpush1.bf16.msra.mxu0 0
        %2691 = vmatprep.subr.bf16.mxu0 0
        %2692 = vmatpush1.bf16.msra.mxu0 0
        %2693 = vmatprep.subr.bf16.mxu0 0
        %2694 = vmatpush1.bf16.msra.mxu0 0
        %2695 = vmatprep.subr.bf16.mxu0 0
        %2696 = vmatpush1.bf16.msra.mxu0 0
        %2697 = vmatprep.subr.bf16.mxu0 0
        %2698 = vmatpush1.bf16.msra.mxu0 0
        %2699 = vmatprep.subr.bf16.mxu0 0
        %2700 = vmatpush1.bf16.msra.mxu0 0
        %2701 = vmatprep.subr.bf16.mxu0 0
        %2702 = vmatpush1.bf16.msra.mxu0 0
        %2703 = vmatprep.mubr.bf16.mxu0 0
        %2704 = vmatmul.mubr.bf16.gmra.mrb[0].mxu0 %v2670
        %v2705 = vpop.f32.mrb[0].mxu0
        %v2706 = vadd.f32 0.0, %v2705
        %v2707 = vpop.f32.mrb[0].mxu0
        %v2708 = vadd.f32 0.0, %v2707
        %v2709 = vpop.f32.mrb[0].mxu0
        %v2710 = vpop.f32.mrb[0].mxu0
        %2711 = vdwg.mxu0
        %2712 = vmatprep.subr.bf16.mxu0 0
        %2713 = vmatpush1.bf16.msra.mxu0 %v940
        %2714 = vmatprep.subr.bf16.mxu0 0
        %2715 = vmatpush1.bf16.msra.mxu0 %v943
        %2716 = vmatprep.subr.bf16.mxu0 0
        %2717 = vmatpush1.bf16.msra.mxu0 %v946
        %2718 = vmatprep.subr.bf16.mxu0 0
        %2719 = vmatpush1.bf16.msra.mxu0 %v949
        %2720 = vmatprep.subr.bf16.mxu0 0
        %2721 = vmatpush1.bf16.msra.mxu0 %v952
        %2722 = vmatprep.subr.bf16.mxu0 0
        %2723 = vmatpush1.bf16.msra.mxu0 %v955
        %2724 = vmatprep.subr.bf16.mxu0 0
        %2725 = vmatpush1.bf16.msra.mxu0 %v958
        %2726 = vmatprep.subr.bf16.mxu0 0
        %2727 = vmatpush1.bf16.msra.mxu0 %v961
        %2728 = vmatprep.subr.bf16.mxu0 0
        %2729 = vmatpush1.bf16.msra.mxu0 0
        %2730 = vmatprep.subr.bf16.mxu0 0
        %2731 = vmatpush1.bf16.msra.mxu0 0
        %2732 = vmatprep.subr.bf16.mxu0 0
        %2733 = vmatpush1.bf16.msra.mxu0 0
        %2734 = vmatprep.subr.bf16.mxu0 0
        %2735 = vmatpush1.bf16.msra.mxu0 0
        %2736 = vmatprep.subr.bf16.mxu0 0
        %2737 = vmatpush1.bf16.msra.mxu0 0
        %2738 = vmatprep.subr.bf16.mxu0 0
        %2739 = vmatpush1.bf16.msra.mxu0 0
        %2740 = vmatprep.subr.bf16.mxu0 0
        %2741 = vmatpush1.bf16.msra.mxu0 0
        %2742 = vmatprep.subr.bf16.mxu0 0
        %2743 = vmatpush1.bf16.msra.mxu0 0
        %2744 = vmatprep.mubr.bf16.mxu0 0
        %2745 = vmatmul.mubr.bf16.gmra.mrb[0].mxu0 %v2670
        %v2746 = vpop.f32.mrb[0].mxu0
        %v2747 = vadd.f32 0.0, %v2746
        %v2748 = vpop.f32.mrb[0].mxu0
        %v2749 = vpop.f32.mrb[0].mxu0
        %v2750 = vpop.f32.mrb[0].mxu0
        %2751 = vdwg.mxu0
        %v2752 = vadd.f32 %v2543, %v2706
        %v2753 = vxor.u32 %v2752, 2147483648
        %v2754 = vmul.f32 %v2753, 1.442695
        %v2755 = vpow.pop %v2754
        %v2756 = vadd.f32 %v2755, 1.0
        %v2757 = vrcp.pop %v2756
        %v2758 = vmul.f32 1.0, %v2757
        %v2759 = vadd.f32 %v2545, %v2708
        %v2760 = vxor.u32 %v2759, 2147483648
        %v2761 = vmul.f32 %v2760, 1.442695
        %v2762 = vpow.pop %v2761
        %v2763 = vadd.f32 %v2762, 1.0
        %v2764 = vrcp.pop %v2763
        %v2765 = vmul.f32 1.0, %v2764
        %v2766 = vadd.f32 %v2747, %v579
        %v2767 = vmul.f32 %v2758, %v2766
        %v2768 = vadd.f32 %v2584, %v2767
        %v2769 = vtanh.pop %v2768
        %v2770 = vsub.f32 %v2500, %v2769
        %v2771 = vmul.f32 %v2765, %v2770
        %v2772 = vadd.f32 %v2769, %v2771
        %v2773 = vpack.c.bf16 %v2507, %v2507
        %2774 = vmatprep.subr.bf16.mxu0 %v1169
        %2775 = vmatpush1.bf16.msra.mxu0 %v1168
        %2776 = vmatprep.subr.bf16.mxu0 %v1172
        %2777 = vmatpush1.bf16.msra.mxu0 %v1171
        %2778 = vmatprep.subr.bf16.mxu0 %v1175
        %2779 = vmatpush1.bf16.msra.mxu0 %v1174
        %2780 = vmatprep.subr.bf16.mxu0 %v1178
        %2781 = vmatpush1.bf16.msra.mxu0 %v1177
        %2782 = vmatprep.subr.bf16.mxu0 %v1181
        %2783 = vmatpush1.bf16.msra.mxu0 %v1180
        %2784 = vmatprep.subr.bf16.mxu0 %v1184
        %2785 = vmatpush1.bf16.msra.mxu0 %v1183
        %2786 = vmatprep.subr.bf16.mxu0 %v1187
        %2787 = vmatpush1.bf16.msra.mxu0 %v1186
        %2788 = vmatprep.subr.bf16.mxu0 %v1190
        %2789 = vmatpush1.bf16.msra.mxu0 %v1189
        %2790 = vmatprep.subr.bf16.mxu0 0
        %2791 = vmatpush1.bf16.msra.mxu0 0
        %2792 = vmatprep.subr.bf16.mxu0 0
        %2793 = vmatpush1.bf16.msra.mxu0 0
        %2794 = vmatprep.subr.bf16.mxu0 0
        %2795 = vmatpush1.bf16.msra.mxu0 0
        %2796 = vmatprep.subr.bf16.mxu0 0
        %2797 = vmatpush1.bf16.msra.mxu0 0
        %2798 = vmatprep.subr.bf16.mxu0 0
        %2799 = vmatpush1.bf16.msra.mxu0 0
        %2800 = vmatprep.subr.bf16.mxu0 0
        %2801 = vmatpush1.bf16.msra.mxu0 0
        %2802 = vmatprep.subr.bf16.mxu0 0
        %2803 = vmatpush1.bf16.msra.mxu0 0
        %2804 = vmatprep.subr.bf16.mxu0 0
        %2805 = vmatpush1.bf16.msra.mxu0 0
        %2806 = vmatprep.mubr.bf16.mxu0 0
        %2807 = vmatmul.mubr.bf16.gmra.mrb[0].mxu0 %v2773
        %v2808 = vpop.f32.mrb[0].mxu0
        %v2809 = vadd.f32 0.0, %v2808
        %v2810 = vpop.f32.mrb[0].mxu0
        %v2811 = vadd.f32 0.0, %v2810
        %v2812 = vpop.f32.mrb[0].mxu0
        %v2813 = vpop.f32.mrb[0].mxu0
        %2814 = vdwg.mxu0
        %2815 = vmatprep.subr.bf16.mxu0 0
        %2816 = vmatpush1.bf16.msra.mxu0 %v1170
        %2817 = vmatprep.subr.bf16.mxu0 0
        %2818 = vmatpush1.bf16.msra.mxu0 %v1173
        %2819 = vmatprep.subr.bf16.mxu0 0
        %2820 = vmatpush1.bf16.msra.mxu0 %v1176
        %2821 = vmatprep.subr.bf16.mxu0 0
        %2822 = vmatpush1.bf16.msra.mxu0 %v1179
        %2823 = vmatprep.subr.bf16.mxu0 0
        %2824 = vmatpush1.bf16.msra.mxu0 %v1182
        %2825 = vmatprep.subr.bf16.mxu0 0
        %2826 = vmatpush1.bf16.msra.mxu0 %v1185
        %2827 = vmatprep.subr.bf16.mxu0 0
        %2828 = vmatpush1.bf16.msra.mxu0 %v1188
        %2829 = vmatprep.subr.bf16.mxu0 0
        %2830 = vmatpush1.bf16.msra.mxu0 %v1191
        %2831 = vmatprep.subr.bf16.mxu0 0
        %2832 = vmatpush1.bf16.msra.mxu0 0
        %2833 = vmatprep.subr.bf16.mxu0 0
        %2834 = vmatpush1.bf16.msra.mxu0 0
        %2835 = vmatprep.subr.bf16.mxu0 0
        %2836 = vmatpush1.bf16.msra.mxu0 0
        %2837 = vmatprep.subr.bf16.mxu0 0
        %2838 = vmatpush1.bf16.msra.mxu0 0
        %2839 = vmatprep.subr.bf16.mxu0 0
        %2840 = vmatpush1.bf16.msra.mxu0 0
        %2841 = vmatprep.subr.bf16.mxu0 0
        %2842 = vmatpush1.bf16.msra.mxu0 0
        %2843 = vmatprep.subr.bf16.mxu0 0
        %2844 = vmatpush1.bf16.msra.mxu0 0
        %2845 = vmatprep.subr.bf16.mxu0 0
        %2846 = vmatpush1.bf16.msra.mxu0 0
        %2847 = vmatprep.mubr.bf16.mxu0 0
        %2848 = vmatmul.mubr.bf16.gmra.mrb[0].mxu0 %v2773
        %v2849 = vpop.f32.mrb[0].mxu0
        %v2850 = vadd.f32 0.0, %v2849
        %v2851 = vpop.f32.mrb[0].mxu0
        %v2852 = vpop.f32.mrb[0].mxu0
        %v2853 = vpop.f32.mrb[0].mxu0
        %2854 = vdwg.mxu0
        %v2855 = vadd.f32 %v2624, %v2809
        %v2856 = vxor.u32 %v2855, 2147483648
        %v2857 = vmul.f32 %v2856, 1.442695
        %v2858 = vpow.pop %v2857
        %v2859 = vadd.f32 %v2858, 1.0
        %v2860 = vrcp.pop %v2859
        %v2861 = vmul.f32 1.0, %v2860
        %v2862 = vadd.f32 %v2626, %v2811
        %v2863 = vxor.u32 %v2862, 2147483648
        %v2864 = vmul.f32 %v2863, 1.442695
        %v2865 = vpow.pop %v2864
        %v2866 = vadd.f32 %v2865, 1.0
        %v2867 = vrcp.pop %v2866
        %v2868 = vmul.f32 1.0, %v2867
        %v2869 = vadd.f32 %v2850, %v586
        %v2870 = vmul.f32 %v2861, %v2869
        %v2871 = vadd.f32 %v2665, %v2870
        %v2872 = vtanh.pop %v2871
        %v2873 = vsub.f32 %v2507, %v2872
        %v2874 = vmul.f32 %v2868, %v2873
        %v2875 = vadd.f32 %v2872, %v2874
        %v2876 = vsel %vm2506, %v2772, %v2500
        %v2877 = vsel %vm2499, %v2875, %v2507
        %2878 = vmatprep.subr.bf16.mxu0 %v644
        %2879 = vmatpush1.bf16.msra.mxu0 %v643
        %2880 = vmatprep.subr.bf16.mxu0 %v647
        %2881 = vmatpush1.bf16.msra.mxu0 %v646
        %2882 = vmatprep.subr.bf16.mxu0 0
        %2883 = vmatpush1.bf16.msra.mxu0 0
        %2884 = vmatprep.subr.bf16.mxu0 0
        %2885 = vmatpush1.bf16.msra.mxu0 0
        %2886 = vmatprep.subr.bf16.mxu0 0
        %2887 = vmatpush1.bf16.msra.mxu0 0
        %2888 = vmatprep.subr.bf16.mxu0 0
        %2889 = vmatpush1.bf16.msra.mxu0 0
        %2890 = vmatprep.subr.bf16.mxu0 0
        %2891 = vmatpush1.bf16.msra.mxu0 0
        %2892 = vmatprep.subr.bf16.mxu0 0
        %2893 = vmatpush1.bf16.msra.mxu0 0
        %2894 = vmatprep.subr.bf16.mxu0 0
        %2895 = vmatpush1.bf16.msra.mxu0 0
        %2896 = vmatprep.subr.bf16.mxu0 0
        %2897 = vmatpush1.bf16.msra.mxu0 0
        %2898 = vmatprep.subr.bf16.mxu0 0
        %2899 = vmatpush1.bf16.msra.mxu0 0
        %2900 = vmatprep.subr.bf16.mxu0 0
        %2901 = vmatpush1.bf16.msra.mxu0 0
        %2902 = vmatprep.subr.bf16.mxu0 0
        %2903 = vmatpush1.bf16.msra.mxu0 0
        %2904 = vmatprep.subr.bf16.mxu0 0
        %2905 = vmatpush1.bf16.msra.mxu0 0
        %2906 = vmatprep.subr.bf16.mxu0 0
        %2907 = vmatpush1.bf16.msra.mxu0 0
        %2908 = vmatprep.subr.bf16.mxu0 0
        %2909 = vmatpush1.bf16.msra.mxu0 0
        %2910 = vmatprep.mubr.bf16.mxu0 0
        %2911 = vmatmul.mubr.bf16.gmra.mrb[0].mxu0 %v1813
        %v2912 = vpop.f32.mrb[0].mxu0
        %v2913 = vadd.f32 %v593, %v2912
        %v2914 = vpop.f32.mrb[0].mxu0
        %v2915 = vadd.f32 %v597, %v2914
        %v2916 = vpop.f32.mrb[0].mxu0
        %v2917 = vpop.f32.mrb[0].mxu0
        %2918 = vdwg.mxu0
        %2919 = vmatprep.subr.bf16.mxu0 0
        %2920 = vmatpush1.bf16.msra.mxu0 %v645
        %2921 = vmatprep.subr.bf16.mxu0 0
        %2922 = vmatpush1.bf16.msra.mxu0 %v648
        %2923 = vmatprep.subr.bf16.mxu0 0
        %2924 = vmatpush1.bf16.msra.mxu0 0
        %2925 = vmatprep.subr.bf16.mxu0 0
        %2926 = vmatpush1.bf16.msra.mxu0 0
        %2927 = vmatprep.subr.bf16.mxu0 0
        %2928 = vmatpush1.bf16.msra.mxu0 0
        %2929 = vmatprep.subr.bf16.mxu0 0
        %2930 = vmatpush1.bf16.msra.mxu0 0
        %2931 = vmatprep.subr.bf16.mxu0 0
        %2932 = vmatpush1.bf16.msra.mxu0 0
        %2933 = vmatprep.subr.bf16.mxu0 0
        %2934 = vmatpush1.bf16.msra.mxu0 0
        %2935 = vmatprep.subr.bf16.mxu0 0
        %2936 = vmatpush1.bf16.msra.mxu0 0
        %2937 = vmatprep.subr.bf16.mxu0 0
        %2938 = vmatpush1.bf16.msra.mxu0 0
        %2939 = vmatprep.subr.bf16.mxu0 0
        %2940 = vmatpush1.bf16.msra.mxu0 0
        %2941 = vmatprep.subr.bf16.mxu0 0
        %2942 = vmatpush1.bf16.msra.mxu0 0
        %2943 = vmatprep.subr.bf16.mxu0 0
        %2944 = vmatpush1.bf16.msra.mxu0 0
        %2945 = vmatprep.subr.bf16.mxu0 0
        %2946 = vmatpush1.bf16.msra.mxu0 0
        %2947 = vmatprep.subr.bf16.mxu0 0
        %2948 = vmatpush1.bf16.msra.mxu0 0
        %2949 = vmatprep.subr.bf16.mxu0 0
        %2950 = vmatpush1.bf16.msra.mxu0 0
        %2951 = vmatprep.mubr.bf16.mxu0 0
        %2952 = vmatmul.mubr.bf16.gmra.mrb[0].mxu0 %v1813
        %v2953 = vpop.f32.mrb[0].mxu0
        %v2954 = vadd.f32 %v601, %v2953
        %v2955 = vpop.f32.mrb[0].mxu0
        %v2956 = vpop.f32.mrb[0].mxu0
        %v2957 = vpop.f32.mrb[0].mxu0
        %2958 = vdwg.mxu0
        %2959 = vmatprep.subr.bf16.mxu0 %v763
        %2960 = vmatpush1.bf16.msra.mxu0 %v762
        %2961 = vmatprep.subr.bf16.mxu0 %v766
        %2962 = vmatpush1.bf16.msra.mxu0 %v765
        %2963 = vmatprep.subr.bf16.mxu0 0
        %2964 = vmatpush1.bf16.msra.mxu0 0
        %2965 = vmatprep.subr.bf16.mxu0 0
        %2966 = vmatpush1.bf16.msra.mxu0 0
        %2967 = vmatprep.subr.bf16.mxu0 0
        %2968 = vmatpush1.bf16.msra.mxu0 0
        %2969 = vmatprep.subr.bf16.mxu0 0
        %2970 = vmatpush1.bf16.msra.mxu0 0
        %2971 = vmatprep.subr.bf16.mxu0 0
        %2972 = vmatpush1.bf16.msra.mxu0 0
        %2973 = vmatprep.subr.bf16.mxu0 0
        %2974 = vmatpush1.bf16.msra.mxu0 0
        %2975 = vmatprep.subr.bf16.mxu0 0
        %2976 = vmatpush1.bf16.msra.mxu0 0
        %2977 = vmatprep.subr.bf16.mxu0 0
        %2978 = vmatpush1.bf16.msra.mxu0 0
        %2979 = vmatprep.subr.bf16.mxu0 0
        %2980 = vmatpush1.bf16.msra.mxu0 0
        %2981 = vmatprep.subr.bf16.mxu0 0
        %2982 = vmatpush1.bf16.msra.mxu0 0
        %2983 = vmatprep.subr.bf16.mxu0 0
        %2984 = vmatpush1.bf16.msra.mxu0 0
        %2985 = vmatprep.subr.bf16.mxu0 0
        %2986 = vmatpush1.bf16.msra.mxu0 0
        %2987 = vmatprep.subr.bf16.mxu0 0
        %2988 = vmatpush1.bf16.msra.mxu0 0
        %2989 = vmatprep.subr.bf16.mxu0 0
        %2990 = vmatpush1.bf16.msra.mxu0 0
        %2991 = vmatprep.mubr.bf16.mxu0 0
        %2992 = vmatmul.mubr.bf16.gmra.mrb[0].mxu0 %v1727
        %v2993 = vpop.f32.mrb[0].mxu0
        %v2994 = vadd.f32 %v610, %v2993
        %v2995 = vpop.f32.mrb[0].mxu0
        %v2996 = vadd.f32 %v614, %v2995
        %v2997 = vpop.f32.mrb[0].mxu0
        %v2998 = vpop.f32.mrb[0].mxu0
        %2999 = vdwg.mxu0
        %3000 = vmatprep.subr.bf16.mxu0 0
        %3001 = vmatpush1.bf16.msra.mxu0 %v764
        %3002 = vmatprep.subr.bf16.mxu0 0
        %3003 = vmatpush1.bf16.msra.mxu0 %v767
        %3004 = vmatprep.subr.bf16.mxu0 0
        %3005 = vmatpush1.bf16.msra.mxu0 0
        %3006 = vmatprep.subr.bf16.mxu0 0
        %3007 = vmatpush1.bf16.msra.mxu0 0
        %3008 = vmatprep.subr.bf16.mxu0 0
        %3009 = vmatpush1.bf16.msra.mxu0 0
        %3010 = vmatprep.subr.bf16.mxu0 0
        %3011 = vmatpush1.bf16.msra.mxu0 0
        %3012 = vmatprep.subr.bf16.mxu0 0
        %3013 = vmatpush1.bf16.msra.mxu0 0
        %3014 = vmatprep.subr.bf16.mxu0 0
        %3015 = vmatpush1.bf16.msra.mxu0 0
        %3016 = vmatprep.subr.bf16.mxu0 0
        %3017 = vmatpush1.bf16.msra.mxu0 0
        %3018 = vmatprep.subr.bf16.mxu0 0
        %3019 = vmatpush1.bf16.msra.mxu0 0
        %3020 = vmatprep.subr.bf16.mxu0 0
        %3021 = vmatpush1.bf16.msra.mxu0 0
        %3022 = vmatprep.subr.bf16.mxu0 0
        %3023 = vmatpush1.bf16.msra.mxu0 0
        %3024 = vmatprep.subr.bf16.mxu0 0
        %3025 = vmatpush1.bf16.msra.mxu0 0
        %3026 = vmatprep.subr.bf16.mxu0 0
        %3027 = vmatpush1.bf16.msra.mxu0 0
        %3028 = vmatprep.subr.bf16.mxu0 0
        %3029 = vmatpush1.bf16.msra.mxu0 0
        %3030 = vmatprep.subr.bf16.mxu0 0
        %3031 = vmatpush1.bf16.msra.mxu0 0
        %3032 = vmatprep.mubr.bf16.mxu0 0
        %3033 = vmatmul.mubr.bf16.gmra.mrb[0].mxu0 %v1727
        %v3034 = vpop.f32.mrb[0].mxu0
        %v3035 = vadd.f32 %v618, %v3034
        %v3036 = vpop.f32.mrb[0].mxu0
        %v3037 = vpop.f32.mrb[0].mxu0
        %v3038 = vpop.f32.mrb[0].mxu0
        %3039 = vdwg.mxu0
        %v3040 = vpack.c.bf16 %v2876, %v2876
        %3041 = vmatprep.subr.bf16.mxu0 %v939
        %3042 = vmatpush1.bf16.msra.mxu0 %v938
        %3043 = vmatprep.subr.bf16.mxu0 %v942
        %3044 = vmatpush1.bf16.msra.mxu0 %v941
        %3045 = vmatprep.subr.bf16.mxu0 %v945
        %3046 = vmatpush1.bf16.msra.mxu0 %v944
        %3047 = vmatprep.subr.bf16.mxu0 %v948
        %3048 = vmatpush1.bf16.msra.mxu0 %v947
        %3049 = vmatprep.subr.bf16.mxu0 %v951
        %3050 = vmatpush1.bf16.msra.mxu0 %v950
        %3051 = vmatprep.subr.bf16.mxu0 %v954
        %3052 = vmatpush1.bf16.msra.mxu0 %v953
        %3053 = vmatprep.subr.bf16.mxu0 %v957
        %3054 = vmatpush1.bf16.msra.mxu0 %v956
        %3055 = vmatprep.subr.bf16.mxu0 %v960
        %3056 = vmatpush1.bf16.msra.mxu0 %v959
        %3057 = vmatprep.subr.bf16.mxu0 0
        %3058 = vmatpush1.bf16.msra.mxu0 0
        %3059 = vmatprep.subr.bf16.mxu0 0
        %3060 = vmatpush1.bf16.msra.mxu0 0
        %3061 = vmatprep.subr.bf16.mxu0 0
        %3062 = vmatpush1.bf16.msra.mxu0 0
        %3063 = vmatprep.subr.bf16.mxu0 0
        %3064 = vmatpush1.bf16.msra.mxu0 0
        %3065 = vmatprep.subr.bf16.mxu0 0
        %3066 = vmatpush1.bf16.msra.mxu0 0
        %3067 = vmatprep.subr.bf16.mxu0 0
        %3068 = vmatpush1.bf16.msra.mxu0 0
        %3069 = vmatprep.subr.bf16.mxu0 0
        %3070 = vmatpush1.bf16.msra.mxu0 0
        %3071 = vmatprep.subr.bf16.mxu0 0
        %3072 = vmatpush1.bf16.msra.mxu0 0
        %3073 = vmatprep.mubr.bf16.mxu0 0
        %3074 = vmatmul.mubr.bf16.gmra.mrb[0].mxu0 %v3040
        %v3075 = vpop.f32.mrb[0].mxu0
        %v3076 = vadd.f32 0.0, %v3075
        %v3077 = vpop.f32.mrb[0].mxu0
        %v3078 = vadd.f32 0.0, %v3077
        %v3079 = vpop.f32.mrb[0].mxu0
        %v3080 = vpop.f32.mrb[0].mxu0
        %3081 = vdwg.mxu0
        %3082 = vmatprep.subr.bf16.mxu0 0
        %3083 = vmatpush1.bf16.msra.mxu0 %v940
        %3084 = vmatprep.subr.bf16.mxu0 0
        %3085 = vmatpush1.bf16.msra.mxu0 %v943
        %3086 = vmatprep.subr.bf16.mxu0 0
        %3087 = vmatpush1.bf16.msra.mxu0 %v946
        %3088 = vmatprep.subr.bf16.mxu0 0
        %3089 = vmatpush1.bf16.msra.mxu0 %v949
        %3090 = vmatprep.subr.bf16.mxu0 0
        %3091 = vmatpush1.bf16.msra.mxu0 %v952
        %3092 = vmatprep.subr.bf16.mxu0 0
        %3093 = vmatpush1.bf16.msra.mxu0 %v955
        %3094 = vmatprep.subr.bf16.mxu0 0
        %3095 = vmatpush1.bf16.msra.mxu0 %v958
        %3096 = vmatprep.subr.bf16.mxu0 0
        %3097 = vmatpush1.bf16.msra.mxu0 %v961
        %3098 = vmatprep.subr.bf16.mxu0 0
        %3099 = vmatpush1.bf16.msra.mxu0 0
        %3100 = vmatprep.subr.bf16.mxu0 0
        %3101 = vmatpush1.bf16.msra.mxu0 0
        %3102 = vmatprep.subr.bf16.mxu0 0
        %3103 = vmatpush1.bf16.msra.mxu0 0
        %3104 = vmatprep.subr.bf16.mxu0 0
        %3105 = vmatpush1.bf16.msra.mxu0 0
        %3106 = vmatprep.subr.bf16.mxu0 0
        %3107 = vmatpush1.bf16.msra.mxu0 0
        %3108 = vmatprep.subr.bf16.mxu0 0
        %3109 = vmatpush1.bf16.msra.mxu0 0
        %3110 = vmatprep.subr.bf16.mxu0 0
        %3111 = vmatpush1.bf16.msra.mxu0 0
        %3112 = vmatprep.subr.bf16.mxu0 0
        %3113 = vmatpush1.bf16.msra.mxu0 0
        %3114 = vmatprep.mubr.bf16.mxu0 0
        %3115 = vmatmul.mubr.bf16.gmra.mrb[0].mxu0 %v3040
        %v3116 = vpop.f32.mrb[0].mxu0
        %v3117 = vadd.f32 0.0, %v3116
        %v3118 = vpop.f32.mrb[0].mxu0
        %v3119 = vpop.f32.mrb[0].mxu0
        %v3120 = vpop.f32.mrb[0].mxu0
        %3121 = vdwg.mxu0
        %v3122 = vadd.f32 %v2913, %v3076
        %v3123 = vxor.u32 %v3122, 2147483648
        %v3124 = vmul.f32 %v3123, 1.442695
        %v3125 = vpow.pop %v3124
        %v3126 = vadd.f32 %v3125, 1.0
        %v3127 = vrcp.pop %v3126
        %v3128 = vmul.f32 1.0, %v3127
        %v3129 = vadd.f32 %v2915, %v3078
        %v3130 = vxor.u32 %v3129, 2147483648
        %v3131 = vmul.f32 %v3130, 1.442695
        %v3132 = vpow.pop %v3131
        %v3133 = vadd.f32 %v3132, 1.0
        %v3134 = vrcp.pop %v3133
        %v3135 = vmul.f32 1.0, %v3134
        %v3136 = vadd.f32 %v3117, %v579
        %v3137 = vmul.f32 %v3128, %v3136
        %v3138 = vadd.f32 %v2954, %v3137
        %v3139 = vtanh.pop %v3138
        %v3140 = vsub.f32 %v2876, %v3139
        %v3141 = vmul.f32 %v3135, %v3140
        %v3142 = vadd.f32 %v3139, %v3141
        %v3143 = vpack.c.bf16 %v2877, %v2877
        %3144 = vmatprep.subr.bf16.mxu0 %v1169
        %3145 = vmatpush1.bf16.msra.mxu0 %v1168
        %3146 = vmatprep.subr.bf16.mxu0 %v1172
        %3147 = vmatpush1.bf16.msra.mxu0 %v1171
        %3148 = vmatprep.subr.bf16.mxu0 %v1175
        %3149 = vmatpush1.bf16.msra.mxu0 %v1174
        %3150 = vmatprep.subr.bf16.mxu0 %v1178
        %3151 = vmatpush1.bf16.msra.mxu0 %v1177
        %3152 = vmatprep.subr.bf16.mxu0 %v1181
        %3153 = vmatpush1.bf16.msra.mxu0 %v1180
        %3154 = vmatprep.subr.bf16.mxu0 %v1184
        %3155 = vmatpush1.bf16.msra.mxu0 %v1183
        %3156 = vmatprep.subr.bf16.mxu0 %v1187
        %3157 = vmatpush1.bf16.msra.mxu0 %v1186
        %3158 = vmatprep.subr.bf16.mxu0 %v1190
        %3159 = vmatpush1.bf16.msra.mxu0 %v1189
        %3160 = vmatprep.subr.bf16.mxu0 0
        %3161 = vmatpush1.bf16.msra.mxu0 0
        %3162 = vmatprep.subr.bf16.mxu0 0
        %3163 = vmatpush1.bf16.msra.mxu0 0
        %3164 = vmatprep.subr.bf16.mxu0 0
        %3165 = vmatpush1.bf16.msra.mxu0 0
        %3166 = vmatprep.subr.bf16.mxu0 0
        %3167 = vmatpush1.bf16.msra.mxu0 0
        %3168 = vmatprep.subr.bf16.mxu0 0
        %3169 = vmatpush1.bf16.msra.mxu0 0
        %3170 = vmatprep.subr.bf16.mxu0 0
        %3171 = vmatpush1.bf16.msra.mxu0 0
        %3172 = vmatprep.subr.bf16.mxu0 0
        %3173 = vmatpush1.bf16.msra.mxu0 0
        %3174 = vmatprep.subr.bf16.mxu0 0
        %3175 = vmatpush1.bf16.msra.mxu0 0
        %3176 = vmatprep.mubr.bf16.mxu0 0
        %3177 = vmatmul.mubr.bf16.gmra.mrb[0].mxu0 %v3143
        %v3178 = vpop.f32.mrb[0].mxu0
        %v3179 = vadd.f32 0.0, %v3178
        %v3180 = vpop.f32.mrb[0].mxu0
        %v3181 = vadd.f32 0.0, %v3180
        %v3182 = vpop.f32.mrb[0].mxu0
        %v3183 = vpop.f32.mrb[0].mxu0
        %3184 = vdwg.mxu0
        %3185 = vmatprep.subr.bf16.mxu0 0
        %3186 = vmatpush1.bf16.msra.mxu0 %v1170
        %3187 = vmatprep.subr.bf16.mxu0 0
        %3188 = vmatpush1.bf16.msra.mxu0 %v1173
        %3189 = vmatprep.subr.bf16.mxu0 0
        %3190 = vmatpush1.bf16.msra.mxu0 %v1176
        %3191 = vmatprep.subr.bf16.mxu0 0
        %3192 = vmatpush1.bf16.msra.mxu0 %v1179
        %3193 = vmatprep.subr.bf16.mxu0 0
        %3194 = vmatpush1.bf16.msra.mxu0 %v1182
        %3195 = vmatprep.subr.bf16.mxu0 0
        %3196 = vmatpush1.bf16.msra.mxu0 %v1185
        %3197 = vmatprep.subr.bf16.mxu0 0
        %3198 = vmatpush1.bf16.msra.mxu0 %v1188
        %3199 = vmatprep.subr.bf16.mxu0 0
        %3200 = vmatpush1.bf16.msra.mxu0 %v1191
        %3201 = vmatprep.subr.bf16.mxu0 0
        %3202 = vmatpush1.bf16.msra.mxu0 0
        %3203 = vmatprep.subr.bf16.mxu0 0
        %3204 = vmatpush1.bf16.msra.mxu0 0
        %3205 = vmatprep.subr.bf16.mxu0 0
        %3206 = vmatpush1.bf16.msra.mxu0 0
        %3207 = vmatprep.subr.bf16.mxu0 0
        %3208 = vmatpush1.bf16.msra.mxu0 0
        %3209 = vmatprep.subr.bf16.mxu0 0
        %3210 = vmatpush1.bf16.msra.mxu0 0
        %3211 = vmatprep.subr.bf16.mxu0 0
        %3212 = vmatpush1.bf16.msra.mxu0 0
        %3213 = vmatprep.subr.bf16.mxu0 0
        %3214 = vmatpush1.bf16.msra.mxu0 0
        %3215 = vmatprep.subr.bf16.mxu0 0
        %3216 = vmatpush1.bf16.msra.mxu0 0
        %3217 = vmatprep.mubr.bf16.mxu0 0
        %3218 = vmatmul.mubr.bf16.gmra.mrb[0].mxu0 %v3143
        %v3219 = vpop.f32.mrb[0].mxu0
        %v3220 = vadd.f32 0.0, %v3219
        %v3221 = vpop.f32.mrb[0].mxu0
        %v3222 = vpop.f32.mrb[0].mxu0
        %v3223 = vpop.f32.mrb[0].mxu0
        %3224 = vdwg.mxu0
        %v3225 = vadd.f32 %v2994, %v3179
        %v3226 = vxor.u32 %v3225, 2147483648
        %v3227 = vmul.f32 %v3226, 1.442695
        %v3228 = vpow.pop %v3227
        %v3229 = vadd.f32 %v3228, 1.0
        %v3230 = vrcp.pop %v3229
        %v3231 = vmul.f32 1.0, %v3230
        %v3232 = vadd.f32 %v2996, %v3181
        %v3233 = vxor.u32 %v3232, 2147483648
        %v3234 = vmul.f32 %v3233, 1.442695
        %v3235 = vpow.pop %v3234
        %v3236 = vadd.f32 %v3235, 1.0
        %v3237 = vrcp.pop %v3236
        %v3238 = vmul.f32 1.0, %v3237
        %v3239 = vadd.f32 %v3220, %v586
        %v3240 = vmul.f32 %v3231, %v3239
        %v3241 = vadd.f32 %v3035, %v3240
        %v3242 = vtanh.pop %v3241
        %v3243 = vsub.f32 %v2877, %v3242
        %v3244 = vmul.f32 %v3238, %v3243
        %v3245 = vadd.f32 %v3242, %v3244
        %v3246 = vsel %vm2114, %v3142, %v2876
        %v3247 = vsel %vm2107, %v3245, %v2877
        %3248 = vmatprep.subr.bf16.mxu0 %v644
        %3249 = vmatpush1.bf16.msra.mxu0 %v643
        %3250 = vmatprep.subr.bf16.mxu0 %v647
        %3251 = vmatpush1.bf16.msra.mxu0 %v646
        %3252 = vmatprep.subr.bf16.mxu0 0
        %3253 = vmatpush1.bf16.msra.mxu0 0
        %3254 = vmatprep.subr.bf16.mxu0 0
        %3255 = vmatpush1.bf16.msra.mxu0 0
        %3256 = vmatprep.subr.bf16.mxu0 0
        %3257 = vmatpush1.bf16.msra.mxu0 0
        %3258 = vmatprep.subr.bf16.mxu0 0
        %3259 = vmatpush1.bf16.msra.mxu0 0
        %3260 = vmatprep.subr.bf16.mxu0 0
        %3261 = vmatpush1.bf16.msra.mxu0 0
        %3262 = vmatprep.subr.bf16.mxu0 0
        %3263 = vmatpush1.bf16.msra.mxu0 0
        %3264 = vmatprep.subr.bf16.mxu0 0
        %3265 = vmatpush1.bf16.msra.mxu0 0
        %3266 = vmatprep.subr.bf16.mxu0 0
        %3267 = vmatpush1.bf16.msra.mxu0 0
        %3268 = vmatprep.subr.bf16.mxu0 0
        %3269 = vmatpush1.bf16.msra.mxu0 0
        %3270 = vmatprep.subr.bf16.mxu0 0
        %3271 = vmatpush1.bf16.msra.mxu0 0
        %3272 = vmatprep.subr.bf16.mxu0 0
        %3273 = vmatpush1.bf16.msra.mxu0 0
        %3274 = vmatprep.subr.bf16.mxu0 0
        %3275 = vmatpush1.bf16.msra.mxu0 0
        %3276 = vmatprep.subr.bf16.mxu0 0
        %3277 = vmatpush1.bf16.msra.mxu0 0
        %3278 = vmatprep.subr.bf16.mxu0 0
        %3279 = vmatpush1.bf16.msra.mxu0 0
        %3280 = vmatprep.mubr.bf16.mxu0 0
        %3281 = vmatmul.mubr.bf16.gmra.mrb[0].mxu0 %v1421
        %v3282 = vpop.f32.mrb[0].mxu0
        %v3283 = vadd.f32 %v593, %v3282
        %v3284 = vpop.f32.mrb[0].mxu0
        %v3285 = vadd.f32 %v597, %v3284
        %v3286 = vpop.f32.mrb[0].mxu0
        %v3287 = vpop.f32.mrb[0].mxu0
        %3288 = vdwg.mxu0
        %3289 = vmatprep.subr.bf16.mxu0 0
        %3290 = vmatpush1.bf16.msra.mxu0 %v645
        %3291 = vmatprep.subr.bf16.mxu0 0
        %3292 = vmatpush1.bf16.msra.mxu0 %v648
        %3293 = vmatprep.subr.bf16.mxu0 0
        %3294 = vmatpush1.bf16.msra.mxu0 0
        %3295 = vmatprep.subr.bf16.mxu0 0
        %3296 = vmatpush1.bf16.msra.mxu0 0
        %3297 = vmatprep.subr.bf16.mxu0 0
        %3298 = vmatpush1.bf16.msra.mxu0 0
        %3299 = vmatprep.subr.bf16.mxu0 0
        %3300 = vmatpush1.bf16.msra.mxu0 0
        %3301 = vmatprep.subr.bf16.mxu0 0
        %3302 = vmatpush1.bf16.msra.mxu0 0
        %3303 = vmatprep.subr.bf16.mxu0 0
        %3304 = vmatpush1.bf16.msra.mxu0 0
        %3305 = vmatprep.subr.bf16.mxu0 0
        %3306 = vmatpush1.bf16.msra.mxu0 0
        %3307 = vmatprep.subr.bf16.mxu0 0
        %3308 = vmatpush1.bf16.msra.mxu0 0
        %3309 = vmatprep.subr.bf16.mxu0 0
        %3310 = vmatpush1.bf16.msra.mxu0 0
        %3311 = vmatprep.subr.bf16.mxu0 0
        %3312 = vmatpush1.bf16.msra.mxu0 0
        %3313 = vmatprep.subr.bf16.mxu0 0
        %3314 = vmatpush1.bf16.msra.mxu0 0
        %3315 = vmatprep.subr.bf16.mxu0 0
        %3316 = vmatpush1.bf16.msra.mxu0 0
        %3317 = vmatprep.subr.bf16.mxu0 0
        %3318 = vmatpush1.bf16.msra.mxu0 0
        %3319 = vmatprep.subr.bf16.mxu0 0
        %3320 = vmatpush1.bf16.msra.mxu0 0
        %3321 = vmatprep.mubr.bf16.mxu0 0
        %3322 = vmatmul.mubr.bf16.gmra.mrb[0].mxu0 %v1421
        %v3323 = vpop.f32.mrb[0].mxu0
        %v3324 = vadd.f32 %v601, %v3323
        %v3325 = vpop.f32.mrb[0].mxu0
        %v3326 = vpop.f32.mrb[0].mxu0
        %v3327 = vpop.f32.mrb[0].mxu0
        %3328 = vdwg.mxu0
        %3329 = vmatprep.subr.bf16.mxu0 %v763
        %3330 = vmatpush1.bf16.msra.mxu0 %v762
        %3331 = vmatprep.subr.bf16.mxu0 %v766
        %3332 = vmatpush1.bf16.msra.mxu0 %v765
        %3333 = vmatprep.subr.bf16.mxu0 0
        %3334 = vmatpush1.bf16.msra.mxu0 0
        %3335 = vmatprep.subr.bf16.mxu0 0
        %3336 = vmatpush1.bf16.msra.mxu0 0
        %3337 = vmatprep.subr.bf16.mxu0 0
        %3338 = vmatpush1.bf16.msra.mxu0 0
        %3339 = vmatprep.subr.bf16.mxu0 0
        %3340 = vmatpush1.bf16.msra.mxu0 0
        %3341 = vmatprep.subr.bf16.mxu0 0
        %3342 = vmatpush1.bf16.msra.mxu0 0
        %3343 = vmatprep.subr.bf16.mxu0 0
        %3344 = vmatpush1.bf16.msra.mxu0 0
        %3345 = vmatprep.subr.bf16.mxu0 0
        %3346 = vmatpush1.bf16.msra.mxu0 0
        %3347 = vmatprep.subr.bf16.mxu0 0
        %3348 = vmatpush1.bf16.msra.mxu0 0
        %3349 = vmatprep.subr.bf16.mxu0 0
        %3350 = vmatpush1.bf16.msra.mxu0 0
        %3351 = vmatprep.subr.bf16.mxu0 0
        %3352 = vmatpush1.bf16.msra.mxu0 0
        %3353 = vmatprep.subr.bf16.mxu0 0
        %3354 = vmatpush1.bf16.msra.mxu0 0
        %3355 = vmatprep.subr.bf16.mxu0 0
        %3356 = vmatpush1.bf16.msra.mxu0 0
        %3357 = vmatprep.subr.bf16.mxu0 0
        %3358 = vmatpush1.bf16.msra.mxu0 0
        %3359 = vmatprep.subr.bf16.mxu0 0
        %3360 = vmatpush1.bf16.msra.mxu0 0
        %3361 = vmatprep.mubr.bf16.mxu0 0
        %3362 = vmatmul.mubr.bf16.gmra.mrb[0].mxu0 %v1335
        %v3363 = vpop.f32.mrb[0].mxu0
        %v3364 = vadd.f32 %v610, %v3363
        %v3365 = vpop.f32.mrb[0].mxu0
        %v3366 = vadd.f32 %v614, %v3365
        %v3367 = vpop.f32.mrb[0].mxu0
        %v3368 = vpop.f32.mrb[0].mxu0
        %3369 = vdwg.mxu0
        %3370 = vmatprep.subr.bf16.mxu0 0
        %3371 = vmatpush1.bf16.msra.mxu0 %v764
        %3372 = vmatprep.subr.bf16.mxu0 0
        %3373 = vmatpush1.bf16.msra.mxu0 %v767
        %3374 = vmatprep.subr.bf16.mxu0 0
        %3375 = vmatpush1.bf16.msra.mxu0 0
        %3376 = vmatprep.subr.bf16.mxu0 0
        %3377 = vmatpush1.bf16.msra.mxu0 0
        %3378 = vmatprep.subr.bf16.mxu0 0
        %3379 = vmatpush1.bf16.msra.mxu0 0
        %3380 = vmatprep.subr.bf16.mxu0 0
        %3381 = vmatpush1.bf16.msra.mxu0 0
        %3382 = vmatprep.subr.bf16.mxu0 0
        %3383 = vmatpush1.bf16.msra.mxu0 0
        %3384 = vmatprep.subr.bf16.mxu0 0
        %3385 = vmatpush1.bf16.msra.mxu0 0
        %3386 = vmatprep.subr.bf16.mxu0 0
        %3387 = vmatpush1.bf16.msra.mxu0 0
        %3388 = vmatprep.subr.bf16.mxu0 0
        %3389 = vmatpush1.bf16.msra.mxu0 0
        %3390 = vmatprep.subr.bf16.mxu0 0
        %3391 = vmatpush1.bf16.msra.mxu0 0
        %3392 = vmatprep.subr.bf16.mxu0 0
        %3393 = vmatpush1.bf16.msra.mxu0 0
        %3394 = vmatprep.subr.bf16.mxu0 0
        %3395 = vmatpush1.bf16.msra.mxu0 0
        %3396 = vmatprep.subr.bf16.mxu0 0
        %3397 = vmatpush1.bf16.msra.mxu0 0
        %3398 = vmatprep.subr.bf16.mxu0 0
        %3399 = vmatpush1.bf16.msra.mxu0 0
        %3400 = vmatprep.subr.bf16.mxu0 0
        %3401 = vmatpush1.bf16.msra.mxu0 0
        %3402 = vmatprep.mubr.bf16.mxu0 0
        %3403 = vmatmul.mubr.bf16.gmra.mrb[0].mxu0 %v1335
        %v3404 = vpop.f32.mrb[0].mxu0
        %v3405 = vadd.f32 %v618, %v3404
        %v3406 = vpop.f32.mrb[0].mxu0
        %v3407 = vpop.f32.mrb[0].mxu0
        %v3408 = vpop.f32.mrb[0].mxu0
        %3409 = vdwg.mxu0
        %v3410 = vpack.c.bf16 %v3246, %v3246
        %3411 = vmatprep.subr.bf16.mxu0 %v939
        %3412 = vmatpush1.bf16.msra.mxu0 %v938
        %3413 = vmatprep.subr.bf16.mxu0 %v942
        %3414 = vmatpush1.bf16.msra.mxu0 %v941
        %3415 = vmatprep.subr.bf16.mxu0 %v945
        %3416 = vmatpush1.bf16.msra.mxu0 %v944
        %3417 = vmatprep.subr.bf16.mxu0 %v948
        %3418 = vmatpush1.bf16.msra.mxu0 %v947
        %3419 = vmatprep.subr.bf16.mxu0 %v951
        %3420 = vmatpush1.bf16.msra.mxu0 %v950
        %3421 = vmatprep.subr.bf16.mxu0 %v954
        %3422 = vmatpush1.bf16.msra.mxu0 %v953
        %3423 = vmatprep.subr.bf16.mxu0 %v957
        %3424 = vmatpush1.bf16.msra.mxu0 %v956
        %3425 = vmatprep.subr.bf16.mxu0 %v960
        %3426 = vmatpush1.bf16.msra.mxu0 %v959
        %3427 = vmatprep.subr.bf16.mxu0 0
        %3428 = vmatpush1.bf16.msra.mxu0 0
        %3429 = vmatprep.subr.bf16.mxu0 0
        %3430 = vmatpush1.bf16.msra.mxu0 0
        %3431 = vmatprep.subr.bf16.mxu0 0
        %3432 = vmatpush1.bf16.msra.mxu0 0
        %3433 = vmatprep.subr.bf16.mxu0 0
        %3434 = vmatpush1.bf16.msra.mxu0 0
        %3435 = vmatprep.subr.bf16.mxu0 0
        %3436 = vmatpush1.bf16.msra.mxu0 0
        %3437 = vmatprep.subr.bf16.mxu0 0
        %3438 = vmatpush1.bf16.msra.mxu0 0
        %3439 = vmatprep.subr.bf16.mxu0 0
        %3440 = vmatpush1.bf16.msra.mxu0 0
        %3441 = vmatprep.subr.bf16.mxu0 0
        %3442 = vmatpush1.bf16.msra.mxu0 0
        %3443 = vmatprep.mubr.bf16.mxu0 0
        %3444 = vmatmul.mubr.bf16.gmra.mrb[0].mxu0 %v3410
        %v3445 = vpop.f32.mrb[0].mxu0
        %v3446 = vadd.f32 0.0, %v3445
        %v3447 = vpop.f32.mrb[0].mxu0
        %v3448 = vadd.f32 0.0, %v3447
        %v3449 = vpop.f32.mrb[0].mxu0
        %v3450 = vpop.f32.mrb[0].mxu0
        %3451 = vdwg.mxu0
        %3452 = vmatprep.subr.bf16.mxu0 0
        %3453 = vmatpush1.bf16.msra.mxu0 %v940
        %3454 = vmatprep.subr.bf16.mxu0 0
        %3455 = vmatpush1.bf16.msra.mxu0 %v943
        %3456 = vmatprep.subr.bf16.mxu0 0
        %3457 = vmatpush1.bf16.msra.mxu0 %v946
        %3458 = vmatprep.subr.bf16.mxu0 0
        %3459 = vmatpush1.bf16.msra.mxu0 %v949
        %3460 = vmatprep.subr.bf16.mxu0 0
        %3461 = vmatpush1.bf16.msra.mxu0 %v952
        %3462 = vmatprep.subr.bf16.mxu0 0
        %3463 = vmatpush1.bf16.msra.mxu0 %v955
        %3464 = vmatprep.subr.bf16.mxu0 0
        %3465 = vmatpush1.bf16.msra.mxu0 %v958
        %3466 = vmatprep.subr.bf16.mxu0 0
        %3467 = vmatpush1.bf16.msra.mxu0 %v961
        %3468 = vmatprep.subr.bf16.mxu0 0
        %3469 = vmatpush1.bf16.msra.mxu0 0
        %3470 = vmatprep.subr.bf16.mxu0 0
        %3471 = vmatpush1.bf16.msra.mxu0 0
        %3472 = vmatprep.subr.bf16.mxu0 0
        %3473 = vmatpush1.bf16.msra.mxu0 0
        %3474 = vmatprep.subr.bf16.mxu0 0
        %3475 = vmatpush1.bf16.msra.mxu0 0
        %3476 = vmatprep.subr.bf16.mxu0 0
        %3477 = vmatpush1.bf16.msra.mxu0 0
        %3478 = vmatprep.subr.bf16.mxu0 0
        %3479 = vmatpush1.bf16.msra.mxu0 0
        %3480 = vmatprep.subr.bf16.mxu0 0
        %3481 = vmatpush1.bf16.msra.mxu0 0
        %3482 = vmatprep.subr.bf16.mxu0 0
        %3483 = vmatpush1.bf16.msra.mxu0 0
        %3484 = vmatprep.mubr.bf16.mxu0 0
        %3485 = vmatmul.mubr.bf16.gmra.mrb[0].mxu0 %v3410
        %v3486 = vpop.f32.mrb[0].mxu0
        %v3487 = vadd.f32 0.0, %v3486
        %v3488 = vpop.f32.mrb[0].mxu0
        %v3489 = vpop.f32.mrb[0].mxu0
        %v3490 = vpop.f32.mrb[0].mxu0
        %3491 = vdwg.mxu0
        %v3492 = vadd.f32 %v3283, %v3446
        %v3493 = vxor.u32 %v3492, 2147483648
        %v3494 = vmul.f32 %v3493, 1.442695
        %v3495 = vpow.pop %v3494
        %v3496 = vadd.f32 %v3495, 1.0
        %v3497 = vrcp.pop %v3496
        %v3498 = vmul.f32 1.0, %v3497
        %v3499 = vadd.f32 %v3285, %v3448
        %v3500 = vxor.u32 %v3499, 2147483648
        %v3501 = vmul.f32 %v3500, 1.442695
        %v3502 = vpow.pop %v3501
        %v3503 = vadd.f32 %v3502, 1.0
        %v3504 = vrcp.pop %v3503
        %v3505 = vmul.f32 1.0, %v3504
        %v3506 = vadd.f32 %v3487, %v579
        %v3507 = vmul.f32 %v3498, %v3506
        %v3508 = vadd.f32 %v3324, %v3507
        %v3509 = vtanh.pop %v3508
        %v3510 = vsub.f32 %v3246, %v3509
        %v3511 = vmul.f32 %v3505, %v3510
        %v3512 = vadd.f32 %v3509, %v3511
        %v3513 = vpack.c.bf16 %v3247, %v3247
        %3514 = vmatprep.subr.bf16.mxu0 %v1169
        %3515 = vmatpush1.bf16.msra.mxu0 %v1168
        %3516 = vmatprep.subr.bf16.mxu0 %v1172
        %3517 = vmatpush1.bf16.msra.mxu0 %v1171
        %3518 = vmatprep.subr.bf16.mxu0 %v1175
        %3519 = vmatpush1.bf16.msra.mxu0 %v1174
        %3520 = vmatprep.subr.bf16.mxu0 %v1178
        %3521 = vmatpush1.bf16.msra.mxu0 %v1177
        %3522 = vmatprep.subr.bf16.mxu0 %v1181
        %3523 = vmatpush1.bf16.msra.mxu0 %v1180
        %3524 = vmatprep.subr.bf16.mxu0 %v1184
        %3525 = vmatpush1.bf16.msra.mxu0 %v1183
        %3526 = vmatprep.subr.bf16.mxu0 %v1187
        %3527 = vmatpush1.bf16.msra.mxu0 %v1186
        %3528 = vmatprep.subr.bf16.mxu0 %v1190
        %3529 = vmatpush1.bf16.msra.mxu0 %v1189
        %3530 = vmatprep.subr.bf16.mxu0 0
        %3531 = vmatpush1.bf16.msra.mxu0 0
        %3532 = vmatprep.subr.bf16.mxu0 0
        %3533 = vmatpush1.bf16.msra.mxu0 0
        %3534 = vmatprep.subr.bf16.mxu0 0
        %3535 = vmatpush1.bf16.msra.mxu0 0
        %3536 = vmatprep.subr.bf16.mxu0 0
        %3537 = vmatpush1.bf16.msra.mxu0 0
        %3538 = vmatprep.subr.bf16.mxu0 0
        %3539 = vmatpush1.bf16.msra.mxu0 0
        %3540 = vmatprep.subr.bf16.mxu0 0
        %3541 = vmatpush1.bf16.msra.mxu0 0
        %3542 = vmatprep.subr.bf16.mxu0 0
        %3543 = vmatpush1.bf16.msra.mxu0 0
        %3544 = vmatprep.subr.bf16.mxu0 0
        %3545 = vmatpush1.bf16.msra.mxu0 0
        %3546 = vmatprep.mubr.bf16.mxu0 0
        %3547 = vmatmul.mubr.bf16.gmra.mrb[0].mxu0 %v3513
        %v3548 = vpop.f32.mrb[0].mxu0
        %v3549 = vadd.f32 0.0, %v3548
        %v3550 = vpop.f32.mrb[0].mxu0
        %v3551 = vadd.f32 0.0, %v3550
        %v3552 = vpop.f32.mrb[0].mxu0
        %v3553 = vpop.f32.mrb[0].mxu0
        %3554 = vdwg.mxu0
        %3555 = vmatprep.subr.bf16.mxu0 0
        %3556 = vmatpush1.bf16.msra.mxu0 %v1170
        %3557 = vmatprep.subr.bf16.mxu0 0
        %3558 = vmatpush1.bf16.msra.mxu0 %v1173
        %3559 = vmatprep.subr.bf16.mxu0 0
        %3560 = vmatpush1.bf16.msra.mxu0 %v1176
        %3561 = vmatprep.subr.bf16.mxu0 0
        %3562 = vmatpush1.bf16.msra.mxu0 %v1179
        %3563 = vmatprep.subr.bf16.mxu0 0
        %3564 = vmatpush1.bf16.msra.mxu0 %v1182
        %3565 = vmatprep.subr.bf16.mxu0 0
        %3566 = vmatpush1.bf16.msra.mxu0 %v1185
        %3567 = vmatprep.subr.bf16.mxu0 0
        %3568 = vmatpush1.bf16.msra.mxu0 %v1188
        %3569 = vmatprep.subr.bf16.mxu0 0
        %3570 = vmatpush1.bf16.msra.mxu0 %v1191
        %3571 = vmatprep.subr.bf16.mxu0 0
        %3572 = vmatpush1.bf16.msra.mxu0 0
        %3573 = vmatprep.subr.bf16.mxu0 0
        %3574 = vmatpush1.bf16.msra.mxu0 0
        %3575 = vmatprep.subr.bf16.mxu0 0
        %3576 = vmatpush1.bf16.msra.mxu0 0
        %3577 = vmatprep.subr.bf16.mxu0 0
        %3578 = vmatpush1.bf16.msra.mxu0 0
        %3579 = vmatprep.subr.bf16.mxu0 0
        %3580 = vmatpush1.bf16.msra.mxu0 0
        %3581 = vmatprep.subr.bf16.mxu0 0
        %3582 = vmatpush1.bf16.msra.mxu0 0
        %3583 = vmatprep.subr.bf16.mxu0 0
        %3584 = vmatpush1.bf16.msra.mxu0 0
        %3585 = vmatprep.subr.bf16.mxu0 0
        %3586 = vmatpush1.bf16.msra.mxu0 0
        %3587 = vmatprep.mubr.bf16.mxu0 0
        %3588 = vmatmul.mubr.bf16.gmra.mrb[0].mxu0 %v3513
        %v3589 = vpop.f32.mrb[0].mxu0
        %v3590 = vadd.f32 0.0, %v3589
        %v3591 = vpop.f32.mrb[0].mxu0
        %v3592 = vpop.f32.mrb[0].mxu0
        %v3593 = vpop.f32.mrb[0].mxu0
        %3594 = vdwg.mxu0
        %v3595 = vadd.f32 %v3364, %v3549
        %v3596 = vxor.u32 %v3595, 2147483648
        %v3597 = vmul.f32 %v3596, 1.442695
        %v3598 = vpow.pop %v3597
        %v3599 = vadd.f32 %v3598, 1.0
        %v3600 = vrcp.pop %v3599
        %v3601 = vmul.f32 1.0, %v3600
        %v3602 = vadd.f32 %v3366, %v3551
        %v3603 = vxor.u32 %v3602, 2147483648
        %v3604 = vmul.f32 %v3603, 1.442695
        %v3605 = vpow.pop %v3604
        %v3606 = vadd.f32 %v3605, 1.0
        %v3607 = vrcp.pop %v3606
        %v3608 = vmul.f32 1.0, %v3607
        %v3609 = vadd.f32 %v3590, %v586
        %v3610 = vmul.f32 %v3601, %v3609
        %v3611 = vadd.f32 %v3405, %v3610
        %v3612 = vtanh.pop %v3611
        %v3613 = vsub.f32 %v3247, %v3612
        %v3614 = vmul.f32 %v3608, %v3613
        %v3615 = vadd.f32 %v3612, %v3614
        %v3616 = vsel %vm1722, %v3512, %v3246
        %v3617 = vsel %vm1715, %v3615, %v3247
        %3618 = vmatprep.subr.bf16.mxu0 %v644
        %3619 = vmatpush1.bf16.msra.mxu0 %v643
        %3620 = vmatprep.subr.bf16.mxu0 %v647
        %3621 = vmatpush1.bf16.msra.mxu0 %v646
        %3622 = vmatprep.subr.bf16.mxu0 0
        %3623 = vmatpush1.bf16.msra.mxu0 0
        %3624 = vmatprep.subr.bf16.mxu0 0
        %3625 = vmatpush1.bf16.msra.mxu0 0
        %3626 = vmatprep.subr.bf16.mxu0 0
        %3627 = vmatpush1.bf16.msra.mxu0 0
        %3628 = vmatprep.subr.bf16.mxu0 0
        %3629 = vmatpush1.bf16.msra.mxu0 0
        %3630 = vmatprep.subr.bf16.mxu0 0
        %3631 = vmatpush1.bf16.msra.mxu0 0
        %3632 = vmatprep.subr.bf16.mxu0 0
        %3633 = vmatpush1.bf16.msra.mxu0 0
        %3634 = vmatprep.subr.bf16.mxu0 0
        %3635 = vmatpush1.bf16.msra.mxu0 0
        %3636 = vmatprep.subr.bf16.mxu0 0
        %3637 = vmatpush1.bf16.msra.mxu0 0
        %3638 = vmatprep.subr.bf16.mxu0 0
        %3639 = vmatpush1.bf16.msra.mxu0 0
        %3640 = vmatprep.subr.bf16.mxu0 0
        %3641 = vmatpush1.bf16.msra.mxu0 0
        %3642 = vmatprep.subr.bf16.mxu0 0
        %3643 = vmatpush1.bf16.msra.mxu0 0
        %3644 = vmatprep.subr.bf16.mxu0 0
        %3645 = vmatpush1.bf16.msra.mxu0 0
        %3646 = vmatprep.subr.bf16.mxu0 0
        %3647 = vmatpush1.bf16.msra.mxu0 0
        %3648 = vmatprep.subr.bf16.mxu0 0
        %3649 = vmatpush1.bf16.msra.mxu0 0
        %3650 = vmatprep.mubr.bf16.mxu0 0
        %3651 = vmatmul.mubr.bf16.gmra.mrb[0].mxu0 %v775
        %v3652 = vpop.f32.mrb[0].mxu0
        %v3653 = vadd.f32 %v593, %v3652
        %v3654 = vpop.f32.mrb[0].mxu0
        %v3655 = vadd.f32 %v597, %v3654
        %v3656 = vpop.f32.mrb[0].mxu0
        %v3657 = vpop.f32.mrb[0].mxu0
        %3658 = vdwg.mxu0
        %3659 = vmatprep.subr.bf16.mxu0 0
        %3660 = vmatpush1.bf16.msra.mxu0 %v645
        %3661 = vmatprep.subr.bf16.mxu0 0
        %3662 = vmatpush1.bf16.msra.mxu0 %v648
        %3663 = vmatprep.subr.bf16.mxu0 0
        %3664 = vmatpush1.bf16.msra.mxu0 0
        %3665 = vmatprep.subr.bf16.mxu0 0
        %3666 = vmatpush1.bf16.msra.mxu0 0
        %3667 = vmatprep.subr.bf16.mxu0 0
        %3668 = vmatpush1.bf16.msra.mxu0 0
        %3669 = vmatprep.subr.bf16.mxu0 0
        %3670 = vmatpush1.bf16.msra.mxu0 0
        %3671 = vmatprep.subr.bf16.mxu0 0
        %3672 = vmatpush1.bf16.msra.mxu0 0
        %3673 = vmatprep.subr.bf16.mxu0 0
        %3674 = vmatpush1.bf16.msra.mxu0 0
        %3675 = vmatprep.subr.bf16.mxu0 0
        %3676 = vmatpush1.bf16.msra.mxu0 0
        %3677 = vmatprep.subr.bf16.mxu0 0
        %3678 = vmatpush1.bf16.msra.mxu0 0
        %3679 = vmatprep.subr.bf16.mxu0 0
        %3680 = vmatpush1.bf16.msra.mxu0 0
        %3681 = vmatprep.subr.bf16.mxu0 0
        %3682 = vmatpush1.bf16.msra.mxu0 0
        %3683 = vmatprep.subr.bf16.mxu0 0
        %3684 = vmatpush1.bf16.msra.mxu0 0
        %3685 = vmatprep.subr.bf16.mxu0 0
        %3686 = vmatpush1.bf16.msra.mxu0 0
        %3687 = vmatprep.subr.bf16.mxu0 0
        %3688 = vmatpush1.bf16.msra.mxu0 0
        %3689 = vmatprep.subr.bf16.mxu0 0
        %3690 = vmatpush1.bf16.msra.mxu0 0
        %3691 = vmatprep.mubr.bf16.mxu0 0
        %3692 = vmatmul.mubr.bf16.gmra.mrb[0].mxu0 %v775
        %v3693 = vpop.f32.mrb[0].mxu0
        %v3694 = vadd.f32 %v601, %v3693
        %v3695 = vpop.f32.mrb[0].mxu0
        %v3696 = vpop.f32.mrb[0].mxu0
        %v3697 = vpop.f32.mrb[0].mxu0
        %3698 = vdwg.mxu0
        %3699 = vmatprep.subr.bf16.mxu0 %v763
        %3700 = vmatpush1.bf16.msra.mxu0 %v762
        %3701 = vmatprep.subr.bf16.mxu0 %v766
        %3702 = vmatpush1.bf16.msra.mxu0 %v765
        %3703 = vmatprep.subr.bf16.mxu0 0
        %3704 = vmatpush1.bf16.msra.mxu0 0
        %3705 = vmatprep.subr.bf16.mxu0 0
        %3706 = vmatpush1.bf16.msra.mxu0 0
        %3707 = vmatprep.subr.bf16.mxu0 0
        %3708 = vmatpush1.bf16.msra.mxu0 0
        %3709 = vmatprep.subr.bf16.mxu0 0
        %3710 = vmatpush1.bf16.msra.mxu0 0
        %3711 = vmatprep.subr.bf16.mxu0 0
        %3712 = vmatpush1.bf16.msra.mxu0 0
        %3713 = vmatprep.subr.bf16.mxu0 0
        %3714 = vmatpush1.bf16.msra.mxu0 0
        %3715 = vmatprep.subr.bf16.mxu0 0
        %3716 = vmatpush1.bf16.msra.mxu0 0
        %3717 = vmatprep.subr.bf16.mxu0 0
        %3718 = vmatpush1.bf16.msra.mxu0 0
        %3719 = vmatprep.subr.bf16.mxu0 0
        %3720 = vmatpush1.bf16.msra.mxu0 0
        %3721 = vmatprep.subr.bf16.mxu0 0
        %3722 = vmatpush1.bf16.msra.mxu0 0
        %3723 = vmatprep.subr.bf16.mxu0 0
        %3724 = vmatpush1.bf16.msra.mxu0 0
        %3725 = vmatprep.subr.bf16.mxu0 0
        %3726 = vmatpush1.bf16.msra.mxu0 0
        %3727 = vmatprep.subr.bf16.mxu0 0
        %3728 = vmatpush1.bf16.msra.mxu0 0
        %3729 = vmatprep.subr.bf16.mxu0 0
        %3730 = vmatpush1.bf16.msra.mxu0 0
        %3731 = vmatprep.mubr.bf16.mxu0 0
        %3732 = vmatmul.mubr.bf16.gmra.mrb[0].mxu0 %v657
        %v3733 = vpop.f32.mrb[0].mxu0
        %v3734 = vadd.f32 %v610, %v3733
        %v3735 = vpop.f32.mrb[0].mxu0
        %v3736 = vadd.f32 %v614, %v3735
        %v3737 = vpop.f32.mrb[0].mxu0
        %v3738 = vpop.f32.mrb[0].mxu0
        %3739 = vdwg.mxu0
        %3740 = vmatprep.subr.bf16.mxu0 0
        %3741 = vmatpush1.bf16.msra.mxu0 %v764
        %3742 = vmatprep.subr.bf16.mxu0 0
        %3743 = vmatpush1.bf16.msra.mxu0 %v767
        %3744 = vmatprep.subr.bf16.mxu0 0
        %3745 = vmatpush1.bf16.msra.mxu0 0
        %3746 = vmatprep.subr.bf16.mxu0 0
        %3747 = vmatpush1.bf16.msra.mxu0 0
        %3748 = vmatprep.subr.bf16.mxu0 0
        %3749 = vmatpush1.bf16.msra.mxu0 0
        %3750 = vmatprep.subr.bf16.mxu0 0
        %3751 = vmatpush1.bf16.msra.mxu0 0
        %3752 = vmatprep.subr.bf16.mxu0 0
        %3753 = vmatpush1.bf16.msra.mxu0 0
        %3754 = vmatprep.subr.bf16.mxu0 0
        %3755 = vmatpush1.bf16.msra.mxu0 0
        %3756 = vmatprep.subr.bf16.mxu0 0
        %3757 = vmatpush1.bf16.msra.mxu0 0
        %3758 = vmatprep.subr.bf16.mxu0 0
        %3759 = vmatpush1.bf16.msra.mxu0 0
        %3760 = vmatprep.subr.bf16.mxu0 0
        %3761 = vmatpush1.bf16.msra.mxu0 0
        %3762 = vmatprep.subr.bf16.mxu0 0
        %3763 = vmatpush1.bf16.msra.mxu0 0
        %3764 = vmatprep.subr.bf16.mxu0 0
        %3765 = vmatpush1.bf16.msra.mxu0 0
        %3766 = vmatprep.subr.bf16.mxu0 0
        %3767 = vmatpush1.bf16.msra.mxu0 0
        %3768 = vmatprep.subr.bf16.mxu0 0
        %3769 = vmatpush1.bf16.msra.mxu0 0
        %3770 = vmatprep.subr.bf16.mxu0 0
        %3771 = vmatpush1.bf16.msra.mxu0 0
        %3772 = vmatprep.mubr.bf16.mxu0 0
        %3773 = vmatmul.mubr.bf16.gmra.mrb[0].mxu0 %v657
        %v3774 = vpop.f32.mrb[0].mxu0
        %v3775 = vadd.f32 %v618, %v3774
        %v3776 = vpop.f32.mrb[0].mxu0
        %v3777 = vpop.f32.mrb[0].mxu0
        %v3778 = vpop.f32.mrb[0].mxu0
        %3779 = vdwg.mxu0
        %v3780 = vpack.c.bf16 %v3616, %v3616
        %3781 = vmatprep.subr.bf16.mxu0 %v939
        %3782 = vmatpush1.bf16.msra.mxu0 %v938
        %3783 = vmatprep.subr.bf16.mxu0 %v942
        %3784 = vmatpush1.bf16.msra.mxu0 %v941
        %3785 = vmatprep.subr.bf16.mxu0 %v945
        %3786 = vmatpush1.bf16.msra.mxu0 %v944
        %3787 = vmatprep.subr.bf16.mxu0 %v948
        %3788 = vmatpush1.bf16.msra.mxu0 %v947
        %3789 = vmatprep.subr.bf16.mxu0 %v951
        %3790 = vmatpush1.bf16.msra.mxu0 %v950
        %3791 = vmatprep.subr.bf16.mxu0 %v954
        %3792 = vmatpush1.bf16.msra.mxu0 %v953
        %3793 = vmatprep.subr.bf16.mxu0 %v957
        %3794 = vmatpush1.bf16.msra.mxu0 %v956
        %3795 = vmatprep.subr.bf16.mxu0 %v960
        %3796 = vmatpush1.bf16.msra.mxu0 %v959
        %3797 = vmatprep.subr.bf16.mxu0 0
        %3798 = vmatpush1.bf16.msra.mxu0 0
        %3799 = vmatprep.subr.bf16.mxu0 0
        %3800 = vmatpush1.bf16.msra.mxu0 0
        %3801 = vmatprep.subr.bf16.mxu0 0
        %3802 = vmatpush1.bf16.msra.mxu0 0
        %3803 = vmatprep.subr.bf16.mxu0 0
        %3804 = vmatpush1.bf16.msra.mxu0 0
        %3805 = vmatprep.subr.bf16.mxu0 0
        %3806 = vmatpush1.bf16.msra.mxu0 0
        %3807 = vmatprep.subr.bf16.mxu0 0
        %3808 = vmatpush1.bf16.msra.mxu0 0
        %3809 = vmatprep.subr.bf16.mxu0 0
        %3810 = vmatpush1.bf16.msra.mxu0 0
        %3811 = vmatprep.subr.bf16.mxu0 0
        %3812 = vmatpush1.bf16.msra.mxu0 0
        %3813 = vmatprep.mubr.bf16.mxu0 0
        %3814 = vmatmul.mubr.bf16.gmra.mrb[0].mxu0 %v3780
        %v3815 = vpop.f32.mrb[0].mxu0
        %v3816 = vadd.f32 0.0, %v3815
        %v3817 = vpop.f32.mrb[0].mxu0
        %v3818 = vadd.f32 0.0, %v3817
        %v3819 = vpop.f32.mrb[0].mxu0
        %v3820 = vpop.f32.mrb[0].mxu0
        %3821 = vdwg.mxu0
        %3822 = vmatprep.subr.bf16.mxu0 0
        %3823 = vmatpush1.bf16.msra.mxu0 %v940
        %3824 = vmatprep.subr.bf16.mxu0 0
        %3825 = vmatpush1.bf16.msra.mxu0 %v943
        %3826 = vmatprep.subr.bf16.mxu0 0
        %3827 = vmatpush1.bf16.msra.mxu0 %v946
        %3828 = vmatprep.subr.bf16.mxu0 0
        %3829 = vmatpush1.bf16.msra.mxu0 %v949
        %3830 = vmatprep.subr.bf16.mxu0 0
        %3831 = vmatpush1.bf16.msra.mxu0 %v952
        %3832 = vmatprep.subr.bf16.mxu0 0
        %3833 = vmatpush1.bf16.msra.mxu0 %v955
        %3834 = vmatprep.subr.bf16.mxu0 0
        %3835 = vmatpush1.bf16.msra.mxu0 %v958
        %3836 = vmatprep.subr.bf16.mxu0 0
        %3837 = vmatpush1.bf16.msra.mxu0 %v961
        %3838 = vmatprep.subr.bf16.mxu0 0
        %3839 = vmatpush1.bf16.msra.mxu0 0
        %3840 = vmatprep.subr.bf16.mxu0 0
        %3841 = vmatpush1.bf16.msra.mxu0 0
        %3842 = vmatprep.subr.bf16.mxu0 0
        %3843 = vmatpush1.bf16.msra.mxu0 0
        %3844 = vmatprep.subr.bf16.mxu0 0
        %3845 = vmatpush1.bf16.msra.mxu0 0
        %3846 = vmatprep.subr.bf16.mxu0 0
        %3847 = vmatpush1.bf16.msra.mxu0 0
        %3848 = vmatprep.subr.bf16.mxu0 0
        %3849 = vmatpush1.bf16.msra.mxu0 0
        %3850 = vmatprep.subr.bf16.mxu0 0
        %3851 = vmatpush1.bf16.msra.mxu0 0
        %3852 = vmatprep.subr.bf16.mxu0 0
        %3853 = vmatpush1.bf16.msra.mxu0 0
        %3854 = vmatprep.mubr.bf16.mxu0 0
        %3855 = vmatmul.mubr.bf16.gmra.mrb[0].mxu0 %v3780
        %v3856 = vpop.f32.mrb[0].mxu0
        %v3857 = vadd.f32 0.0, %v3856
        %v3858 = vpop.f32.mrb[0].mxu0
        %v3859 = vpop.f32.mrb[0].mxu0
        %v3860 = vpop.f32.mrb[0].mxu0
        %3861 = vdwg.mxu0
        %v3862 = vadd.f32 %v3653, %v3816
        %v3863 = vxor.u32 %v3862, 2147483648
        %v3864 = vmul.f32 %v3863, 1.442695
        %v3865 = vpow.pop %v3864
        %v3866 = vadd.f32 %v3865, 1.0
        %v3867 = vrcp.pop %v3866
        %v3868 = vmul.f32 1.0, %v3867
        %v3869 = vadd.f32 %v3655, %v3818
        %v3870 = vxor.u32 %v3869, 2147483648
        %v3871 = vmul.f32 %v3870, 1.442695
        %v3872 = vpow.pop %v3871
        %v3873 = vadd.f32 %v3872, 1.0
        %v3874 = vrcp.pop %v3873
        %v3875 = vmul.f32 1.0, %v3874
        %v3876 = vadd.f32 %v3857, %v579
        %v3877 = vmul.f32 %v3868, %v3876
        %v3878 = vadd.f32 %v3694, %v3877
        %v3879 = vtanh.pop %v3878
        %v3880 = vsub.f32 %v3616, %v3879
        %v3881 = vmul.f32 %v3875, %v3880
        %v3882 = vadd.f32 %v3879, %v3881
        %v3883 = vpack.c.bf16 %v3617, %v3617
        %3884 = vmatprep.subr.bf16.mxu0 %v1169
        %3885 = vmatpush1.bf16.msra.mxu0 %v1168
        %3886 = vmatprep.subr.bf16.mxu0 %v1172
        %3887 = vmatpush1.bf16.msra.mxu0 %v1171
        %3888 = vmatprep.subr.bf16.mxu0 %v1175
        %3889 = vmatpush1.bf16.msra.mxu0 %v1174
        %3890 = vmatprep.subr.bf16.mxu0 %v1178
        %3891 = vmatpush1.bf16.msra.mxu0 %v1177
        %3892 = vmatprep.subr.bf16.mxu0 %v1181
        %3893 = vmatpush1.bf16.msra.mxu0 %v1180
        %3894 = vmatprep.subr.bf16.mxu0 %v1184
        %3895 = vmatpush1.bf16.msra.mxu0 %v1183
        %3896 = vmatprep.subr.bf16.mxu0 %v1187
        %3897 = vmatpush1.bf16.msra.mxu0 %v1186
        %3898 = vmatprep.subr.bf16.mxu0 %v1190
        %3899 = vmatpush1.bf16.msra.mxu0 %v1189
        %3900 = vmatprep.subr.bf16.mxu0 0
        %3901 = vmatpush1.bf16.msra.mxu0 0
        %3902 = vmatprep.subr.bf16.mxu0 0
        %3903 = vmatpush1.bf16.msra.mxu0 0
        %3904 = vmatprep.subr.bf16.mxu0 0
        %3905 = vmatpush1.bf16.msra.mxu0 0
        %3906 = vmatprep.subr.bf16.mxu0 0
        %3907 = vmatpush1.bf16.msra.mxu0 0
        %3908 = vmatprep.subr.bf16.mxu0 0
        %3909 = vmatpush1.bf16.msra.mxu0 0
        %3910 = vmatprep.subr.bf16.mxu0 0
        %3911 = vmatpush1.bf16.msra.mxu0 0
        %3912 = vmatprep.subr.bf16.mxu0 0
        %3913 = vmatpush1.bf16.msra.mxu0 0
        %3914 = vmatprep.subr.bf16.mxu0 0
        %3915 = vmatpush1.bf16.msra.mxu0 0
        %3916 = vmatprep.mubr.bf16.mxu0 0
        %3917 = vmatmul.mubr.bf16.gmra.mrb[0].mxu0 %v3883
        %v3918 = vpop.f32.mrb[0].mxu0
        %v3919 = vadd.f32 0.0, %v3918
        %v3920 = vpop.f32.mrb[0].mxu0
        %v3921 = vadd.f32 0.0, %v3920
        %v3922 = vpop.f32.mrb[0].mxu0
        %v3923 = vpop.f32.mrb[0].mxu0
        %3924 = vdwg.mxu0
        %3925 = vmatprep.subr.bf16.mxu0 0
        %3926 = vmatpush1.bf16.msra.mxu0 %v1170
        %3927 = vmatprep.subr.bf16.mxu0 0
        %3928 = vmatpush1.bf16.msra.mxu0 %v1173
        %3929 = vmatprep.subr.bf16.mxu0 0
        %3930 = vmatpush1.bf16.msra.mxu0 %v1176
        %3931 = vmatprep.subr.bf16.mxu0 0
        %3932 = vmatpush1.bf16.msra.mxu0 %v1179
        %3933 = vmatprep.subr.bf16.mxu0 0
        %3934 = vmatpush1.bf16.msra.mxu0 %v1182
        %3935 = vmatprep.subr.bf16.mxu0 0
        %3936 = vmatpush1.bf16.msra.mxu0 %v1185
        %3937 = vmatprep.subr.bf16.mxu0 0
        %3938 = vmatpush1.bf16.msra.mxu0 %v1188
        %3939 = vmatprep.subr.bf16.mxu0 0
        %3940 = vmatpush1.bf16.msra.mxu0 %v1191
        %3941 = vmatprep.subr.bf16.mxu0 0
        %3942 = vmatpush1.bf16.msra.mxu0 0
        %3943 = vmatprep.subr.bf16.mxu0 0
        %3944 = vmatpush1.bf16.msra.mxu0 0
        %3945 = vmatprep.subr.bf16.mxu0 0
        %3946 = vmatpush1.bf16.msra.mxu0 0
        %3947 = vmatprep.subr.bf16.mxu0 0
        %3948 = vmatpush1.bf16.msra.mxu0 0
        %3949 = vmatprep.subr.bf16.mxu0 0
        %3950 = vmatpush1.bf16.msra.mxu0 0
        %3951 = vmatprep.subr.bf16.mxu0 0
        %3952 = vmatpush1.bf16.msra.mxu0 0
        %3953 = vmatprep.subr.bf16.mxu0 0
        %3954 = vmatpush1.bf16.msra.mxu0 0
        %3955 = vmatprep.subr.bf16.mxu0 0
        %3956 = vmatpush1.bf16.msra.mxu0 0
        %3957 = vmatprep.mubr.bf16.mxu0 0
        %3958 = vmatmul.mubr.bf16.gmra.mrb[0].mxu0 %v3883
        %v3959 = vpop.f32.mrb[0].mxu0
        %v3960 = vadd.f32 0.0, %v3959
        %v3961 = vpop.f32.mrb[0].mxu0
        %v3962 = vpop.f32.mrb[0].mxu0
        %v3963 = vpop.f32.mrb[0].mxu0
        %3964 = vdwg.mxu0
        %v3965 = vadd.f32 %v3734, %v3919
        %v3966 = vxor.u32 %v3965, 2147483648
        %v3967 = vmul.f32 %v3966, 1.442695
        %v3968 = vpow.pop %v3967
        %v3969 = vadd.f32 %v3968, 1.0
        %v3970 = vrcp.pop %v3969
        %v3971 = vmul.f32 1.0, %v3970
        %v3972 = vadd.f32 %v3736, %v3921
        %v3973 = vxor.u32 %v3972, 2147483648
        %v3974 = vmul.f32 %v3973, 1.442695
        %v3975 = vpow.pop %v3974
        %v3976 = vadd.f32 %v3975, 1.0
        %v3977 = vrcp.pop %v3976
        %v3978 = vmul.f32 1.0, %v3977
        %v3979 = vadd.f32 %v3960, %v586
        %v3980 = vmul.f32 %v3971, %v3979
        %v3981 = vadd.f32 %v3775, %v3980
        %v3982 = vtanh.pop %v3981
        %v3983 = vsub.f32 %v3617, %v3982
        %v3984 = vmul.f32 %v3978, %v3983
        %v3985 = vadd.f32 %v3982, %v3984
        %v3986 = vsel %vm1330, %v3882, %v3616
        %v3987 = vsel %vm1323, %v3985, %v3617
        %v3988 = vpack.c.bf16 %v3986, %v3986
        %v3989 = vld [vmem:[%s10] sm:$0xf]
        %v3990 = vld [vmem:[%s10 + $0x4] sm:$0xf]
        %v3991 = vld [vmem:[%s10 + $0x8] sm:$0xf]
        %v3992 = vld [vmem:[%s10 + $0xc] sm:$0xf]
        %v3993 = vld [vmem:[%s10 + $0x10] sm:$0xf]
        %v3994 = vld [vmem:[%s10 + $0x14] sm:$0xf]
        %v3995 = vld [vmem:[%s10 + $0x18] sm:$0xf]
        %v3996 = vld [vmem:[%s10 + $0x1c] sm:$0xf]
        %v3997 = vld [vmem:[%s10 + $0x20] sm:$0xf]
        %v3998 = vld [vmem:[%s10 + $0x24] sm:$0xf]
        %v3999 = vld [vmem:[%s10 + $0x28] sm:$0xf]
        %v4000 = vld [vmem:[%s10 + $0x2c] sm:$0xf]
        %v4001 = vld [vmem:[%s10 + $0x30] sm:$0xf]
        %v4002 = vld [vmem:[%s10 + $0x34] sm:$0xf]
        %v4003 = vld [vmem:[%s10 + $0x38] sm:$0xf]
        %v4004 = vld [vmem:[%s10 + $0x3c] sm:$0xf]
        %v4005 = vpack.c.bf16 %v3987, %v3987
        %s4006 = scalar_lea.vmem %s10, 64
        %v4007 = vld [vmem:[%s4006] sm:$0xf]
        %v4008 = vld [vmem:[%s4006 + $0x4] sm:$0xf]
        %v4009 = vld [vmem:[%s4006 + $0x8] sm:$0xf]
        %v4010 = vld [vmem:[%s4006 + $0xc] sm:$0xf]
        %v4011 = vld [vmem:[%s4006 + $0x10] sm:$0xf]
        %v4012 = vld [vmem:[%s4006 + $0x14] sm:$0xf]
        %v4013 = vld [vmem:[%s4006 + $0x18] sm:$0xf]
        %v4014 = vld [vmem:[%s4006 + $0x1c] sm:$0xf]
        %v4015 = vld [vmem:[%s4006 + $0x20] sm:$0xf]
        %v4016 = vld [vmem:[%s4006 + $0x24] sm:$0xf]
        %v4017 = vld [vmem:[%s4006 + $0x28] sm:$0xf]
        %v4018 = vld [vmem:[%s4006 + $0x2c] sm:$0xf]
        %v4019 = vld [vmem:[%s4006 + $0x30] sm:$0xf]
        %v4020 = vld [vmem:[%s4006 + $0x34] sm:$0xf]
        %v4021 = vld [vmem:[%s4006 + $0x38] sm:$0xf]
        %v4022 = vld [vmem:[%s4006 + $0x3c] sm:$0xf]
        %v4039 = vunpack.c.l.b16 %v4007
        %v4040 = vunpack.c.l.b16 %v4008
        %v4041 = vunpack.c.l.b16 %v4009
        %v4042 = vunpack.c.l.b16 %v4010
        %v4043 = vunpack.c.l.b16 %v4011
        %v4044 = vunpack.c.l.b16 %v4012
        %v4045 = vunpack.c.l.b16 %v4013
        %v4046 = vunpack.c.l.b16 %v4014
        %v4047 = vunpack.c.l.b16 %v4015
        %v4048 = vunpack.c.l.b16 %v4016
        %v4049 = vunpack.c.l.b16 %v4017
        %v4050 = vunpack.c.l.b16 %v4018
        %v4051 = vunpack.c.l.b16 %v4019
        %v4052 = vunpack.c.l.b16 %v4020
        %v4053 = vunpack.c.l.b16 %v4021
        %v4054 = vunpack.c.l.b16 %v4022
        %v4055 = vpack.c.b16 %v4040, %v4039
        %v4056 = vpack.c.b16 %v4042, %v4041
        %v4057 = vpack.c.b16 %v4044, %v4043
        %v4058 = vpack.c.b16 %v4046, %v4045
        %v4059 = vpack.c.b16 %v4048, %v4047
        %v4060 = vpack.c.b16 %v4050, %v4049
        %v4061 = vpack.c.b16 %v4052, %v4051
        %v4062 = vpack.c.b16 %v4054, %v4053
        %4071 = vmatprep.subr.bf16.mxu0 0
        %4072 = vmatpush1.bf16.msra.mxu0 %v4055
        %4073 = vmatprep.subr.bf16.mxu0 0
        %4074 = vmatpush1.bf16.msra.mxu0 %v4056
        %4075 = vmatprep.subr.bf16.mxu0 0
        %4076 = vmatpush1.bf16.msra.mxu0 %v4057
        %4077 = vmatprep.subr.bf16.mxu0 0
        %4078 = vmatpush1.bf16.msra.mxu0 %v4058
        %4079 = vmatprep.subr.bf16.mxu0 0
        %4080 = vmatpush1.bf16.msra.mxu0 %v4059
        %4081 = vmatprep.subr.bf16.mxu0 0
        %4082 = vmatpush1.bf16.msra.mxu0 %v4060
        %4083 = vmatprep.subr.bf16.mxu0 0
        %4084 = vmatpush1.bf16.msra.mxu0 %v4061
        %4085 = vmatprep.subr.bf16.mxu0 0
        %4086 = vmatpush1.bf16.msra.mxu0 %v4062
        %4087 = vmatprep.subr.bf16.mxu0 0
        %4088 = vmatpush1.bf16.msra.mxu0 0
        %4089 = vmatprep.subr.bf16.mxu0 0
        %4090 = vmatpush1.bf16.msra.mxu0 0
        %4091 = vmatprep.subr.bf16.mxu0 0
        %4092 = vmatpush1.bf16.msra.mxu0 0
        %4093 = vmatprep.subr.bf16.mxu0 0
        %4094 = vmatpush1.bf16.msra.mxu0 0
        %4095 = vmatprep.subr.bf16.mxu0 0
        %4096 = vmatpush1.bf16.msra.mxu0 0
        %4097 = vmatprep.subr.bf16.mxu0 0
        %4098 = vmatpush1.bf16.msra.mxu0 0
        %4099 = vmatprep.subr.bf16.mxu0 0
        %4100 = vmatpush1.bf16.msra.mxu0 0
        %4101 = vmatprep.subr.bf16.mxu0 0
        %4102 = vmatpush1.bf16.msra.mxu0 0
        %4103 = vmatprep.mubr.bf16.mxu0 0
        %4104 = vmatmul.mubr.bf16.gmra.mrb[0].mxu0 %v4005
        %v4105 = vpop.f32.mrb[0].mxu0
        %v4106 = vadd.f32 0.0, %v4105
        %v4107 = vpop.f32.mrb[0].mxu0
        %v4108 = vpop.f32.mrb[0].mxu0
        %v4109 = vpop.f32.mrb[0].mxu0
        %4110 = vdwg.mxu0
        %v4127 = vunpack.c.l.b16 %v3989
        %v4128 = vunpack.c.l.b16 %v3990
        %v4129 = vunpack.c.l.b16 %v3991
        %v4130 = vunpack.c.l.b16 %v3992
        %v4131 = vunpack.c.l.b16 %v3993
        %v4132 = vunpack.c.l.b16 %v3994
        %v4133 = vunpack.c.l.b16 %v3995
        %v4134 = vunpack.c.l.b16 %v3996
        %v4135 = vunpack.c.l.b16 %v3997
        %v4136 = vunpack.c.l.b16 %v3998
        %v4137 = vunpack.c.l.b16 %v3999
        %v4138 = vunpack.c.l.b16 %v4000
        %v4139 = vunpack.c.l.b16 %v4001
        %v4140 = vunpack.c.l.b16 %v4002
        %v4141 = vunpack.c.l.b16 %v4003
        %v4142 = vunpack.c.l.b16 %v4004
        %v4143 = vpack.c.b16 %v4128, %v4127
        %v4144 = vpack.c.b16 %v4130, %v4129
        %v4145 = vpack.c.b16 %v4132, %v4131
        %v4146 = vpack.c.b16 %v4134, %v4133
        %v4147 = vpack.c.b16 %v4136, %v4135
        %v4148 = vpack.c.b16 %v4138, %v4137
        %v4149 = vpack.c.b16 %v4140, %v4139
        %v4150 = vpack.c.b16 %v4142, %v4141
        %4159 = vmatprep.subr.bf16.mxu0 0
        %4160 = vmatpush1.bf16.msra.mxu0 %v4143
        %4161 = vmatprep.subr.bf16.mxu0 0
        %4162 = vmatpush1.bf16.msra.mxu0 %v4144
        %4163 = vmatprep.subr.bf16.mxu0 0
        %4164 = vmatpush1.bf16.msra.mxu0 %v4145
        %4165 = vmatprep.subr.bf16.mxu0 0
        %4166 = vmatpush1.bf16.msra.mxu0 %v4146
        %4167 = vmatprep.subr.bf16.mxu0 0
        %4168 = vmatpush1.bf16.msra.mxu0 %v4147
        %4169 = vmatprep.subr.bf16.mxu0 0
        %4170 = vmatpush1.bf16.msra.mxu0 %v4148
        %4171 = vmatprep.subr.bf16.mxu0 0
        %4172 = vmatpush1.bf16.msra.mxu0 %v4149
        %4173 = vmatprep.subr.bf16.mxu0 0
        %4174 = vmatpush1.bf16.msra.mxu0 %v4150
        %4175 = vmatprep.subr.bf16.mxu0 0
        %4176 = vmatpush1.bf16.msra.mxu0 0
        %4177 = vmatprep.subr.bf16.mxu0 0
        %4178 = vmatpush1.bf16.msra.mxu0 0
        %4179 = vmatprep.subr.bf16.mxu0 0
        %4180 = vmatpush1.bf16.msra.mxu0 0
        %4181 = vmatprep.subr.bf16.mxu0 0
        %4182 = vmatpush1.bf16.msra.mxu0 0
        %4183 = vmatprep.subr.bf16.mxu0 0
        %4184 = vmatpush1.bf16.msra.mxu0 0
        %4185 = vmatprep.subr.bf16.mxu0 0
        %4186 = vmatpush1.bf16.msra.mxu0 0
        %4187 = vmatprep.subr.bf16.mxu0 0
        %4188 = vmatpush1.bf16.msra.mxu0 0
        %4189 = vmatprep.subr.bf16.mxu0 0
        %4190 = vmatpush1.bf16.msra.mxu0 0
        %4191 = vmatprep.mubr.bf16.mxu0 0
        %4192 = vmatmul.mubr.bf16.gmra.mrb[0].mxu0 %v3988
        %v4193 = vpop.f32.mrb[0].mxu0
        %v4194 = vadd.f32 %v4106, %v4193
        %v4195 = vpop.f32.mrb[0].mxu0
        %v4196 = vpop.f32.mrb[0].mxu0
        %v4197 = vpop.f32.mrb[0].mxu0
        %4198 = vdwg.mxu0
        %v4199 = vld [vmem:[%s11] sm:$0x1]
        %v4201 = vlaneseq
        %v4202 = vshrl.u32 %v4201, 7
        %v4203 = vsub.s32 0, %v4202
        %v4204 = vrot.slane %v4199, %v4203
        %v4206 = vadd.f32 %v4194, %v4204
        %vm4207 = vcmp.ge.f32.partialorder %v4206, 0.0
        %v4208 = vmul.f32 %v4206, 0.2
        %v4209 = vsel %vm4207, %v4206, %v4208
        %4210 = vst.msk [vmem:[%s487] sm:$0xff] %vm655, %v4209
        %s4211 = sand.u32 %s301, 1
        %s4212 = scalar_lea.sflag [#allocation4], %s4211
        %s4213 = sand.u32 %s301, 1
        %s4214 = smul.addr %s4213, 8
        %s4215 = scalar_lea.vmem [#allocation10], %s4214
        // Predicated region
        $region85: #{tpu_custom_call.1} parent=67 // pred_check
          %p4216 = pneg %p311
        $region86: #{tpu_custom_call.1} parent=67 // pred_check_branch
          %4218 = sbr.rel (%p4216) target = $region88
        $region87: #{tpu_custom_call.1} parent=67 // pred_region
          %s4220 = ssub.s32 128, 128
          %4221 = vsyncadd %s4212, %s4220
          %s4222 = smul.addr %s31, 128
          %s4223 = scalar_lea.hbm %s12, %s4222
          %s4225 = sshll.u32 %s4215, 4
          %s4226 = int_to_ptr.vmem [resolvable:$true] %s4225
          %4228 = dma.vmem_to_hbm [thread:$0]  %s4226, 128, %s4223, %s4212
        $region88: #{tpu_custom_call.1} parent=67 // pred_fallthru
          _
      $region68: #{tpu_custom_call.1} parent=5 // pred_fallthru
        _
      %p4229 = scmp.le.s32.totalorder 2, %s26
      // Predicated region
      $region89: #{tpu_custom_call.1} parent=5 // pred_check
        %p4230 = pneg %p4229
      $region90: #{tpu_custom_call.1} parent=5 // pred_check_branch
        %4232 = sbr.rel (%p4230) target = $region92
      $region91: #{tpu_custom_call.1} parent=5 // pred_region
        %s4233 = ssub.s32 %s26, 2
        // Predicated region
        $region93: #{tpu_custom_call.1} parent=91 // pred_check
          %p4234 = pneg %p317
        $region94: #{tpu_custom_call.1} parent=91 // pred_check_branch
          %4236 = sbr.rel (%p4234) target = $region96
        $region95: #{tpu_custom_call.1} parent=91 // pred_region
          %s4237 = sand.u32 %s302, 1
          %s4238 = scalar_lea.sflag [#allocation4], %s4237
          %s4239 = sand.u32 %s302, 1
          %s4240 = smul.addr %s4239, 8
          %s4241 = scalar_lea.vmem [#allocation10], %s4240
          %4242 = dma.done %s4238, 128
        $region96: #{tpu_custom_call.1} parent=91 // pred_fallthru
          _
      $region92: #{tpu_custom_call.1} parent=5 // pred_fallthru
        _
    $region6: #{tpu_custom_call.1} parent=1 // loop_footer
      %s30 = sadd.s32 1, %s26
    $region7: #{tpu_custom_call.1} parent=1 // loop_footer_branch
      %25 = sbr.rel target = $region3
    $region8: #{tpu_custom_call.1} parent=1 // loop_exit
      _
    %4243 = vsyncpa [#allocation3], 1
    %s4244 = scalar_lea.sflag [#allocation3], 1
    %4245 = vsyncpa %s4244, 1
    %4246 = vsyncpa [#allocation6], 1
    %4247 = vsyncpa [#allocation9], 1
    %4248 = vsyncpa [#allocation4], 1
    %s4249 = scalar_lea.sflag [#allocation4], 1
    %4250 = vsyncpa %s4249, 1

</llo_original>
